<compile_context>
chip_gen: v7x
topology: tpu7x:2x2x1
jax: 0.10.0
libtpu: 0.0.40
codegen_flags: <defaults>
</compile_context>

<pallas_src>
import jax
import jax.numpy as jnp
from jax.experimental import pallas as pl
from jax.experimental.pallas import tpu as pltpu


# --------------------------------- kernel -----------------------------------
def bottleneck_kernel(x_ref, w1_ref, b1_ref, w2_ref, b2_ref, w3_ref, b3_ref,
                      out_ref, pad_ref):
    _, H, W, Cin = x_ref.shape
    P = w1_ref.shape[1]            # planes
    Cout = w3_ref.shape[1]         # 4 * planes
    Wp = pad_ref.shape[2]          # sublane-aligned padded width (>= W + 2)
    M = H * W
    f32 = jnp.float32
    bf16 = jnp.bfloat16

    x = x_ref[...].reshape(M, Cin)

    # ---- conv1 (1x1, BN folded into weights) + bias + relu ------------------
    o1 = jnp.dot(x.astype(bf16), w1_ref[...], preferred_element_type=f32)
    o1 = jnp.maximum(o1 + b1_ref[...], 0.0)

    # Write conv1 output straight into the interior of the padded scratch and
    # refresh only the 1-pixel zero ring (columns beyond W+1 are never read).
    pad_ref[:, 1:H + 1, 1:W + 1, :] = o1.reshape(1, H, W, P)
    pad_ref[:, 0:1, :, :] = jnp.zeros((1, 1, Wp, P), f32)
    pad_ref[:, H + 1:H + 2, :, :] = jnp.zeros((1, 1, Wp, P), f32)
    pad_ref[:, 1:H + 1, 0:1, :] = jnp.zeros((1, H, 1, P), f32)
    pad_ref[:, 1:H + 1, W + 1:W + 2, :] = jnp.zeros((1, H, 1, P), f32)

    # ---- conv2 (3x3, stride 1, pad 1) + bias + relu -------------------------
    # Per-dy im2col: lane-concat three W-shifted views -> one K=3P matmul per
    # dy (3 MXU calls instead of 9 small-K matmuls on 9 strided patches).
    acc = jnp.zeros((M, P), f32)
    for dy in range(3):
        slab = pad_ref[:, dy:dy + H, :, :]                      # (1, H, Wp, P)
        patch = jnp.concatenate(
            [slab[:, :, 0:W, :],
             slab[:, :, 1:W + 1, :],
             slab[:, :, 2:W + 2, :]], axis=-1)                  # (1, H, W, 3P)
        acc = acc + jnp.dot(patch.reshape(M, 3 * P).astype(bf16), w2_ref[dy],
                            preferred_element_type=f32)
    o2 = jnp.maximum(acc + b2_ref[...], 0.0)

    # ---- conv3 (1x1) + bias + identity residual + relu ----------------------
    o3 = jnp.dot(o2.astype(bf16), w3_ref[...], preferred_element_type=f32)
    o3 = o3 + b3_ref[...] + x                                   # residual in f32
    out_ref[...] = jnp.maximum(o3, 0.0).reshape(1, H, W, Cout)


# ------------------------------ host wrappers --------------------------------
def _fold_bn(gamma, beta, mean, var, eps=1e-5):
    scale = gamma / jnp.sqrt(var + eps)
    return scale, beta - mean * scale


def prepare_bottleneck_params(w1_t, bn1, w2_t, bn2, w3_t, bn3):
    """Convert PyTorch OIHW conv weights + BN running stats to the kernel's
    folded matmul layout (done once, outside the hot path)."""
    s1, b1 = _fold_bn(*bn1)
    s2, b2 = _fold_bn(*bn2)
    s3, b3 = _fold_bn(*bn3)
    P = w2_t.shape[0]
    w1 = jnp.transpose(w1_t[:, :, 0, 0], (1, 0)) * s1[None, :]           # (Cin, P)
    w2 = jnp.transpose(w2_t, (2, 3, 1, 0)) * s2[None, None, None, :]     # (3,3,P,P)
    w2 = w2.reshape(3, 3 * P, P)                                         # (3, 3P, P)
    w3 = jnp.transpose(w3_t[:, :, 0, 0], (1, 0)) * s3[None, :]           # (P, 4P)
    return (w1.astype(jnp.bfloat16), b1[None, :].astype(jnp.float32),
            w2.astype(jnp.bfloat16), b2[None, :].astype(jnp.float32),
            w3.astype(jnp.bfloat16), b3[None, :].astype(jnp.float32))


def bottleneck_pallas_nhwc(x, w1, b1, w2, b2, w3, b3):
    """x: (N, H, W, Cin) float32. Returns (N, H, W, 4*planes) float32."""
    N, H, W, Cin = x.shape
    P = w1.shape[1]
    Cout = w3.shape[1]
    assert Cin == Cout, "identity residual (downsample=None) needs inplanes == 4*planes"
    Wp = ((W + 2 + 7) // 8) * 8          # sublane-aligned padded scratch width

    return pl.pallas_call(
        bottleneck_kernel,
        out_shape=jax.ShapeDtypeStruct((N, H, W, Cout), jnp.float32),
        grid_spec=pltpu.PrefetchScalarGridSpec(
            num_scalar_prefetch=0,
            grid=(N,),
            in_specs=[
                pl.BlockSpec((1, H, W, Cin), lambda n: (n, 0, 0, 0)),
                pl.BlockSpec(w1.shape, lambda n: (0, 0)),
                pl.BlockSpec(b1.shape, lambda n: (0, 0)),
                pl.BlockSpec(w2.shape, lambda n: (0, 0, 0)),
                pl.BlockSpec(b2.shape, lambda n: (0, 0)),
                pl.BlockSpec(w3.shape, lambda n: (0, 0)),
                pl.BlockSpec(b3.shape, lambda n: (0, 0)),
            ],
            out_specs=pl.BlockSpec((1, H, W, Cout), lambda n: (n, 0, 0, 0)),
            scratch_shapes=[pltpu.VMEM((1, H + 2, Wp, P), jnp.float32)],
        ),
        compiler_params=pltpu.CompilerParams(
            dimension_semantics=("parallel",),      # batch shards across TCs
            vmem_limit_bytes=48 * 1024 * 1024,      # safe on v7x (64 MiB VMEM)
        ),
    )(x, w1, b1, w2, b2, w3, b3)


def bottleneck_pallas_nchw(x_nchw, params):
    """PyTorch-parity entry (NCHW in/out). The transposes here exist only for
    interface parity; keep the surrounding model NHWC to avoid them."""
    x = jnp.transpose(x_nchw, (0, 2, 3, 1))
    out = bottleneck_pallas_nhwc(x, *params)
    return jnp.transpose(out, (0, 3, 1, 2))


# ----------------------- pure-JAX reference (NCHW, like PyTorch) -------------
def bottleneck_ref(x, w1_t, bn1, w2_t, bn2, w3_t, bn3):
    def conv(x, w, stride=1, pad=0):
        return jax.lax.conv_general_dilated(
            x, w, (stride, stride), [(pad, pad), (pad, pad)],
            dimension_numbers=('NCHW', 'OIHW', 'NCHW'))

    def bn(x, p):
        gamma, beta, mean, var = p
        eps = 1e-5
        inv = gamma / jnp.sqrt(var + eps)
        return x * inv[None, :, None, None] + (beta - mean * inv)[None, :, None, None]

    out = jax.nn.relu(bn(conv(x, w1_t), bn1))
    out = jax.nn.relu(bn(conv(out, w2_t, 1, 1), bn2))
    out = bn(conv(out, w3_t), bn3)
    return jax.nn.relu(out + x)


if __name__ == "__main__":
    key = jax.random.PRNGKey(0)
    N, H, W = 2, 16, 16
    planes = 32
    inplanes = 4 * planes      # downsample=None => identity residual requires this
    keys = jax.random.split(key, 16)

    x = jax.random.normal(keys[0], (N, inplanes, H, W), jnp.float32)

    # PyTorch-layout conv weights (OIHW), bias=False
    w1_t = 0.1 * jax.random.normal(keys[1], (planes, inplanes, 1, 1), jnp.float32)
    w2_t = 0.1 * jax.random.normal(keys[2], (planes, planes, 3, 3), jnp.float32)
    w3_t = 0.1 * jax.random.normal(keys[3], (4 * planes, planes, 1, 1), jnp.float32)

    def bn_params(kg, kb, km, kv, c):
        gamma = 1.0 + 0.1 * jax.random.normal(kg, (c,), jnp.float32)
        beta = 0.1 * jax.random.normal(kb, (c,), jnp.float32)
        mean = 0.1 * jax.random.normal(km, (c,), jnp.float32)
        var = jnp.abs(jax.random.normal(kv, (c,), jnp.float32)) + 0.5
        return (gamma, beta, mean, var)

    bn1 = bn_params(keys[4], keys[5], keys[6], keys[7], planes)
    bn2 = bn_params(keys[8], keys[9], keys[10], keys[11], planes)
    bn3 = bn_params(keys[12], keys[13], keys[14], keys[15], 4 * planes)

    params = prepare_bottleneck_params(w1_t, bn1, w2_t, bn2, w3_t, bn3)

    out = bottleneck_pallas_nchw(x, params)
    out = jax.block_until_ready(out)

    ref = jax.block_until_ready(bottleneck_ref(x, w1_t, bn1, w2_t, bn2, w3_t, bn3))
    assert out.shape == (N, 4 * planes, H, W)
    max_err = float(jnp.max(jnp.abs(out - ref)))
    # bf16 matmul operands -> looser tolerance than the pure-f32 reference
    assert jnp.allclose(out, ref, rtol=5e-2, atol=5e-2), max_err
    print("KERNEL_OK")
</pallas_src>

<mosaic_0001>
module attributes {stable_mosaic.version = 11 : i64} {
  func.func @bottleneck_kernel(%arg0: i32, %arg1: memref<1x16x16x128xf32, #tpu.memory_space<vmem>>, %arg2: memref<128x32xbf16, #tpu.memory_space<vmem>>, %arg3: memref<1x32xf32, #tpu.memory_space<vmem>>, %arg4: memref<3x96x32xbf16, #tpu.memory_space<vmem>>, %arg5: memref<1x32xf32, #tpu.memory_space<vmem>>, %arg6: memref<32x128xbf16, #tpu.memory_space<vmem>>, %arg7: memref<1x128xf32, #tpu.memory_space<vmem>>, %arg8: memref<1x16x16x128xf32, #tpu.memory_space<vmem>>, %arg9: memref<1x18x24x32xf32, #tpu.memory_space<vmem>>) attributes {dimension_semantics = [#tpu.dimension_semantics<parallel>], iteration_bounds = array<i64: 2>, scalar_prefetch = 0 : i64, scratch_operands = 1 : i64, tpu.core_type = #tpu.core_type<tc>, window_params = [{transform_indices = @transform_0, window_bounds = array<i64: 1, 16, 16, 128>}, {pipeline_mode = #tpu.pipeline_mode<synchronous>, transform_indices = @transform_1, window_bounds = array<i64: 128, 32>}, {pipeline_mode = #tpu.pipeline_mode<synchronous>, transform_indices = @transform_2, window_bounds = array<i64: 1, 32>}, {pipeline_mode = #tpu.pipeline_mode<synchronous>, transform_indices = @transform_3, window_bounds = array<i64: 3, 96, 32>}, {pipeline_mode = #tpu.pipeline_mode<synchronous>, transform_indices = @transform_4, window_bounds = array<i64: 1, 32>}, {pipeline_mode = #tpu.pipeline_mode<synchronous>, transform_indices = @transform_5, window_bounds = array<i64: 32, 128>}, {pipeline_mode = #tpu.pipeline_mode<synchronous>, transform_indices = @transform_6, window_bounds = array<i64: 1, 128>}, {transform_indices = @transform_7, window_bounds = array<i64: 1, 16, 16, 128>}]} {
    %c0 = arith.constant 0 : index
    %c0_0 = arith.constant 0 : index
    %c0_1 = arith.constant 0 : index
    %c0_2 = arith.constant 0 : index
    %0 = vector.load %arg1[%c0, %c0_0, %c0_1, %c0_2] : memref<1x16x16x128xf32, #tpu.memory_space<vmem>>, vector<1x16x16x128xf32>
    %1 = vector.shape_cast %0 : vector<1x16x16x128xf32> to vector<256x128xf32>
    %2 = arith.truncf %1 : vector<256x128xf32> to vector<256x128xbf16>
    %c0_3 = arith.constant 0 : index
    %c0_4 = arith.constant 0 : index
    %3 = vector.load %arg2[%c0_3, %c0_4] : memref<128x32xbf16, #tpu.memory_space<vmem>>, vector<128x32xbf16>
    %cst = arith.constant dense<0.000000e+00> : vector<256x32xf32>
    %4 = tpu.matmul %2, %3, %cst {dimension_numbers = #tpu.dot_dimension_numbers<[1], [0], [0], [1], [0, 0, 1, 1], [], []>} : vector<256x128xbf16>, vector<128x32xbf16>, vector<256x32xf32> -> vector<256x32xf32>
    %c0_5 = arith.constant 0 : index
    %c0_6 = arith.constant 0 : index
    %5 = vector.load %arg3[%c0_5, %c0_6] : memref<1x32xf32, #tpu.memory_space<vmem>>, vector<1x32xf32>
    %6 = vector.broadcast %5 : vector<1x32xf32> to vector<256x32xf32>
    %7 = arith.addf %4, %6 : vector<256x32xf32>
    %cst_7 = arith.constant 0.000000e+00 : f32
    %8 = vector.broadcast %cst_7 : f32 to vector<256x32xf32>
    %9 = arith.maximumf %7, %8 : vector<256x32xf32>
    %10 = vector.shape_cast %9 : vector<256x32xf32> to vector<1x16x16x32xf32>
    %c0_8 = arith.constant 0 : index
    %c1 = arith.constant 1 : index
    %c1_9 = arith.constant 1 : index
    %c0_10 = arith.constant 0 : index
    %11 = vector.load %arg9[%c0_8, %c1, %c1_9, %c0_10] : memref<1x18x24x32xf32, #tpu.memory_space<vmem>>, vector<1x16x16x32xf32>
    tpu.vector_store %arg9[%c0_8, %c1, %c1_9, %c0_10], %10 {strides = array<i32>} : memref<1x18x24x32xf32, #tpu.memory_space<vmem>>, vector<1x16x16x32xf32>,
    %cst_11 = arith.constant 0.000000e+00 : f32
    %12 = vector.broadcast %cst_11 : f32 to vector<1x1x24x32xf32>
    %c0_12 = arith.constant 0 : index
    %c0_13 = arith.constant 0 : index
    %c0_14 = arith.constant 0 : index
    %c0_15 = arith.constant 0 : index
    %13 = vector.load %arg9[%c0_12, %c0_13, %c0_14, %c0_15] : memref<1x18x24x32xf32, #tpu.memory_space<vmem>>, vector<1x1x24x32xf32>
    tpu.vector_store %arg9[%c0_12, %c0_13, %c0_14, %c0_15], %12 {strides = array<i32>} : memref<1x18x24x32xf32, #tpu.memory_space<vmem>>, vector<1x1x24x32xf32>,
    %cst_16 = arith.constant 0.000000e+00 : f32
    %14 = vector.broadcast %cst_16 : f32 to vector<1x1x24x32xf32>
    %c0_17 = arith.constant 0 : index
    %c17 = arith.constant 17 : index
    %c0_18 = arith.constant 0 : index
    %c0_19 = arith.constant 0 : index
    %15 = vector.load %arg9[%c0_17, %c17, %c0_18, %c0_19] : memref<1x18x24x32xf32, #tpu.memory_space<vmem>>, vector<1x1x24x32xf32>
    tpu.vector_store %arg9[%c0_17, %c17, %c0_18, %c0_19], %14 {strides = array<i32>} : memref<1x18x24x32xf32, #tpu.memory_space<vmem>>, vector<1x1x24x32xf32>,
    %cst_20 = arith.constant 0.000000e+00 : f32
    %16 = vector.broadcast %cst_20 : f32 to vector<1x16x1x32xf32>
    %c0_21 = arith.constant 0 : index
    %c1_22 = arith.constant 1 : index
    %c0_23 = arith.constant 0 : index
    %c0_24 = arith.constant 0 : index
    %17 = vector.load %arg9[%c0_21, %c1_22, %c0_23, %c0_24] : memref<1x18x24x32xf32, #tpu.memory_space<vmem>>, vector<1x16x1x32xf32>
    tpu.vector_store %arg9[%c0_21, %c1_22, %c0_23, %c0_24], %16 {strides = array<i32>} : memref<1x18x24x32xf32, #tpu.memory_space<vmem>>, vector<1x16x1x32xf32>,
    %cst_25 = arith.constant 0.000000e+00 : f32
    %18 = vector.broadcast %cst_25 : f32 to vector<1x16x1x32xf32>
    %c0_26 = arith.constant 0 : index
    %c1_27 = arith.constant 1 : index
    %c17_28 = arith.constant 17 : index
    %c0_29 = arith.constant 0 : index
    %19 = vector.load %arg9[%c0_26, %c1_27, %c17_28, %c0_29] : memref<1x18x24x32xf32, #tpu.memory_space<vmem>>, vector<1x16x1x32xf32>
    tpu.vector_store %arg9[%c0_26, %c1_27, %c17_28, %c0_29], %18 {strides = array<i32>} : memref<1x18x24x32xf32, #tpu.memory_space<vmem>>, vector<1x16x1x32xf32>,
    %cst_30 = arith.constant 0.000000e+00 : f32
    %20 = vector.broadcast %cst_30 : f32 to vector<256x32xf32>
    %c0_31 = arith.constant 0 : index
    %c0_32 = arith.constant 0 : index
    %c0_33 = arith.constant 0 : index
    %c0_34 = arith.constant 0 : index
    %21 = vector.load %arg9[%c0_31, %c0_32, %c0_33, %c0_34] : memref<1x18x24x32xf32, #tpu.memory_space<vmem>>, vector<1x16x24x32xf32>
    %22 = vector.extract_strided_slice %21 {offsets = [0, 0, 0, 0], sizes = [1, 16, 16, 32], strides = [1, 1, 1, 1]} : vector<1x16x24x32xf32> to vector<1x16x16x32xf32>
    %23 = vector.extract_strided_slice %21 {offsets = [0, 0, 1, 0], sizes = [1, 16, 16, 32], strides = [1, 1, 1, 1]} : vector<1x16x24x32xf32> to vector<1x16x16x32xf32>
    %24 = vector.extract_strided_slice %21 {offsets = [0, 0, 2, 0], sizes = [1, 16, 16, 32], strides = [1, 1, 1, 1]} : vector<1x16x24x32xf32> to vector<1x16x16x32xf32>
    %25 = tpu.concatenate %22, %23, %24 in 3 : vector<1x16x16x32xf32>, vector<1x16x16x32xf32>, vector<1x16x16x32xf32> -> vector<1x16x16x96xf32>
    %26 = vector.shape_cast %25 : vector<1x16x16x96xf32> to vector<256x96xf32>
    %27 = arith.truncf %26 : vector<256x96xf32> to vector<256x96xbf16>
    %c0_35 = arith.constant 0 : index
    %c0_36 = arith.constant 0 : index
    %c0_37 = arith.constant 0 : index
    %28 = vector.load %arg4[%c0_35, %c0_36, %c0_37] : memref<3x96x32xbf16, #tpu.memory_space<vmem>>, vector<1x96x32xbf16>
    %29 = vector.shape_cast %28 : vector<1x96x32xbf16> to vector<96x32xbf16>
    %cst_38 = arith.constant dense<0.000000e+00> : vector<256x32xf32>
    %30 = tpu.matmul %27, %29, %cst_38 {dimension_numbers = #tpu.dot_dimension_numbers<[1], [0], [0], [1], [0, 0, 1, 1], [], []>} : vector<256x96xbf16>, vector<96x32xbf16>, vector<256x32xf32> -> vector<256x32xf32>
    %31 = arith.addf %20, %30 : vector<256x32xf32>
    %c0_39 = arith.constant 0 : index
    %c1_40 = arith.constant 1 : index
    %c0_41 = arith.constant 0 : index
    %c0_42 = arith.constant 0 : index
    %32 = vector.load %arg9[%c0_39, %c1_40, %c0_41, %c0_42] : memref<1x18x24x32xf32, #tpu.memory_space<vmem>>, vector<1x16x24x32xf32>
    %33 = vector.extract_strided_slice %32 {offsets = [0, 0, 0, 0], sizes = [1, 16, 16, 32], strides = [1, 1, 1, 1]} : vector<1x16x24x32xf32> to vector<1x16x16x32xf32>
    %34 = vector.extract_strided_slice %32 {offsets = [0, 0, 1, 0], sizes = [1, 16, 16, 32], strides = [1, 1, 1, 1]} : vector<1x16x24x32xf32> to vector<1x16x16x32xf32>
    %35 = vector.extract_strided_slice %32 {offsets = [0, 0, 2, 0], sizes = [1, 16, 16, 32], strides = [1, 1, 1, 1]} : vector<1x16x24x32xf32> to vector<1x16x16x32xf32>
    %36 = tpu.concatenate %33, %34, %35 in 3 : vector<1x16x16x32xf32>, vector<1x16x16x32xf32>, vector<1x16x16x32xf32> -> vector<1x16x16x96xf32>
    %37 = vector.shape_cast %36 : vector<1x16x16x96xf32> to vector<256x96xf32>
    %38 = arith.truncf %37 : vector<256x96xf32> to vector<256x96xbf16>
    %c1_43 = arith.constant 1 : index
    %c0_44 = arith.constant 0 : index
    %c0_45 = arith.constant 0 : index
    %39 = vector.load %arg4[%c1_43, %c0_44, %c0_45] : memref<3x96x32xbf16, #tpu.memory_space<vmem>>, vector<1x96x32xbf16>
    %40 = vector.shape_cast %39 : vector<1x96x32xbf16> to vector<96x32xbf16>
    %cst_46 = arith.constant dense<0.000000e+00> : vector<256x32xf32>
    %41 = tpu.matmul %38, %40, %cst_46 {dimension_numbers = #tpu.dot_dimension_numbers<[1], [0], [0], [1], [0, 0, 1, 1], [], []>} : vector<256x96xbf16>, vector<96x32xbf16>, vector<256x32xf32> -> vector<256x32xf32>
    %42 = arith.addf %31, %41 : vector<256x32xf32>
    %c0_47 = arith.constant 0 : index
    %c2 = arith.constant 2 : index
    %c0_48 = arith.constant 0 : index
    %c0_49 = arith.constant 0 : index
    %43 = vector.load %arg9[%c0_47, %c2, %c0_48, %c0_49] : memref<1x18x24x32xf32, #tpu.memory_space<vmem>>, vector<1x16x24x32xf32>
    %44 = vector.extract_strided_slice %43 {offsets = [0, 0, 0, 0], sizes = [1, 16, 16, 32], strides = [1, 1, 1, 1]} : vector<1x16x24x32xf32> to vector<1x16x16x32xf32>
    %45 = vector.extract_strided_slice %43 {offsets = [0, 0, 1, 0], sizes = [1, 16, 16, 32], strides = [1, 1, 1, 1]} : vector<1x16x24x32xf32> to vector<1x16x16x32xf32>
    %46 = vector.extract_strided_slice %43 {offsets = [0, 0, 2, 0], sizes = [1, 16, 16, 32], strides = [1, 1, 1, 1]} : vector<1x16x24x32xf32> to vector<1x16x16x32xf32>
    %47 = tpu.concatenate %44, %45, %46 in 3 : vector<1x16x16x32xf32>, vector<1x16x16x32xf32>, vector<1x16x16x32xf32> -> vector<1x16x16x96xf32>
    %48 = vector.shape_cast %47 : vector<1x16x16x96xf32> to vector<256x96xf32>
    %49 = arith.truncf %48 : vector<256x96xf32> to vector<256x96xbf16>
    %c2_50 = arith.constant 2 : index
    %c0_51 = arith.constant 0 : index
    %c0_52 = arith.constant 0 : index
    %50 = vector.load %arg4[%c2_50, %c0_51, %c0_52] : memref<3x96x32xbf16, #tpu.memory_space<vmem>>, vector<1x96x32xbf16>
    %51 = vector.shape_cast %50 : vector<1x96x32xbf16> to vector<96x32xbf16>
    %cst_53 = arith.constant dense<0.000000e+00> : vector<256x32xf32>
    %52 = tpu.matmul %49, %51, %cst_53 {dimension_numbers = #tpu.dot_dimension_numbers<[1], [0], [0], [1], [0, 0, 1, 1], [], []>} : vector<256x96xbf16>, vector<96x32xbf16>, vector<256x32xf32> -> vector<256x32xf32>
    %53 = arith.addf %42, %52 : vector<256x32xf32>
    %c0_54 = arith.constant 0 : index
    %c0_55 = arith.constant 0 : index
    %54 = vector.load %arg5[%c0_54, %c0_55] : memref<1x32xf32, #tpu.memory_space<vmem>>, vector<1x32xf32>
    %55 = vector.broadcast %54 : vector<1x32xf32> to vector<256x32xf32>
    %56 = arith.addf %53, %55 : vector<256x32xf32>
    %cst_56 = arith.constant 0.000000e+00 : f32
    %57 = vector.broadcast %cst_56 : f32 to vector<256x32xf32>
    %58 = arith.maximumf %56, %57 : vector<256x32xf32>
    %59 = arith.truncf %58 : vector<256x32xf32> to vector<256x32xbf16>
    %c0_57 = arith.constant 0 : index
    %c0_58 = arith.constant 0 : index
    %60 = vector.load %arg6[%c0_57, %c0_58] : memref<32x128xbf16, #tpu.memory_space<vmem>>, vector<32x128xbf16>
    %cst_59 = arith.constant dense<0.000000e+00> : vector<256x128xf32>
    %61 = tpu.matmul %59, %60, %cst_59 {dimension_numbers = #tpu.dot_dimension_numbers<[1], [0], [0], [1], [0, 0, 1, 1], [], []>} : vector<256x32xbf16>, vector<32x128xbf16>, vector<256x128xf32> -> vector<256x128xf32>
    %c0_60 = arith.constant 0 : index
    %c0_61 = arith.constant 0 : index
    %62 = vector.load %arg7[%c0_60, %c0_61] : memref<1x128xf32, #tpu.memory_space<vmem>>, vector<1x128xf32>
    %63 = vector.broadcast %62 : vector<1x128xf32> to vector<256x128xf32>
    %64 = arith.addf %61, %63 : vector<256x128xf32>
    %65 = arith.addf %64, %1 : vector<256x128xf32>
    %cst_62 = arith.constant 0.000000e+00 : f32
    %66 = vector.broadcast %cst_62 : f32 to vector<256x128xf32>
    %67 = arith.maximumf %65, %66 : vector<256x128xf32>
    %68 = vector.shape_cast %67 : vector<256x128xf32> to vector<1x16x16x128xf32>
    %c0_63 = arith.constant 0 : index
    %c0_64 = arith.constant 0 : index
    %c0_65 = arith.constant 0 : index
    %c0_66 = arith.constant 0 : index
    %69 = vector.load %arg8[%c0_63, %c0_64, %c0_65, %c0_66] : memref<1x16x16x128xf32, #tpu.memory_space<vmem>>, vector<1x16x16x128xf32>
    tpu.vector_store %arg8[%c0_63, %c0_64, %c0_65, %c0_66], %68 {strides = array<i32>} : memref<1x16x16x128xf32, #tpu.memory_space<vmem>>, vector<1x16x16x128xf32>,
    return
  }
  func.func @transform_0(%arg0: i32) -> (i32, i32, i32, i32) {
    %c0_i32 = arith.constant 0 : i32
    %c0_i32_0 = arith.constant 0 : i32
    %c0_i32_1 = arith.constant 0 : i32
    %c0_i32_2 = arith.constant 0 : i32
    return %arg0, %c0_i32, %c0_i32_0, %c0_i32_1 : i32, i32, i32, i32
  }
  func.func @transform_1(%arg0: i32) -> (i32, i32) {
    %c0_i32 = arith.constant 0 : i32
    %c0_i32_0 = arith.constant 0 : i32
    %c0_i32_1 = arith.constant 0 : i32
    return %c0_i32, %c0_i32_0 : i32, i32
  }
  func.func @transform_2(%arg0: i32) -> (i32, i32) {
    %c0_i32 = arith.constant 0 : i32
    %c0_i32_0 = arith.constant 0 : i32
    %c0_i32_1 = arith.constant 0 : i32
    return %c0_i32, %c0_i32_0 : i32, i32
  }
  func.func @transform_3(%arg0: i32) -> (i32, i32, i32) {
    %c0_i32 = arith.constant 0 : i32
    %c0_i32_0 = arith.constant 0 : i32
    %c0_i32_1 = arith.constant 0 : i32
    %c0_i32_2 = arith.constant 0 : i32
    return %c0_i32, %c0_i32_0, %c0_i32_1 : i32, i32, i32
  }
  func.func @transform_4(%arg0: i32) -> (i32, i32) {
    %c0_i32 = arith.constant 0 : i32
    %c0_i32_0 = arith.constant 0 : i32
    %c0_i32_1 = arith.constant 0 : i32
    return %c0_i32, %c0_i32_0 : i32, i32
  }
  func.func @transform_5(%arg0: i32) -> (i32, i32) {
    %c0_i32 = arith.constant 0 : i32
    %c0_i32_0 = arith.constant 0 : i32
    %c0_i32_1 = arith.constant 0 : i32
    return %c0_i32, %c0_i32_0 : i32, i32
  }
  func.func @transform_6(%arg0: i32) -> (i32, i32) {
    %c0_i32 = arith.constant 0 : i32
    %c0_i32_0 = arith.constant 0 : i32
    %c0_i32_1 = arith.constant 0 : i32
    return %c0_i32, %c0_i32_0 : i32, i32
  }
  func.func @transform_7(%arg0: i32) -> (i32, i32, i32, i32) {
    %c0_i32 = arith.constant 0 : i32
    %c0_i32_0 = arith.constant 0 : i32
    %c0_i32_1 = arith.constant 0 : i32
    %c0_i32_2 = arith.constant 0 : i32
    return %arg0, %c0_i32, %c0_i32_0, %c0_i32_1 : i32, i32, i32, i32
  }
}

</mosaic_0001>

<llo_original>
// kernel: tpu_custom_call.1
$region0: #{tpu_custom_call.1}
  #allocation0 [shape = 'u32[]', space=smem, size = 0x4, offset = 0x4, fixed_abs, tag = 'smem constant byte address 0x4 - core index']
  #allocation1 [shape = 'u32[144,128]{1,0:T(1,128)}', space=vmem, size = 0x12000, scoped, tag = 'internal scratch']
  #allocation2 [shape = 'f32[1,18,24,32]{3,2,1,0:T(8,128)}', space=vmem, size = 0x36000, scoped, tag = 'scratch operand']
  %s0 = inlined_call_operand.hbm [shape: f32[2,16,16,128], index: 0, kind: input, shape index: {}]
  %s1 = inlined_call_operand.vmem [shape: bf16[128,32], index: 1, kind: input, shape index: {}]
  %s2 = inlined_call_operand.vmem [shape: f32[1,32], index: 2, kind: input, shape index: {}]
  %s3 = inlined_call_operand.vmem [shape: bf16[3,96,32], index: 3, kind: input, shape index: {}]
  %s4 = inlined_call_operand.vmem [shape: f32[1,32], index: 4, kind: input, shape index: {}]
  %s5 = inlined_call_operand.vmem [shape: bf16[32,128], index: 5, kind: input, shape index: {}]
  %s6 = inlined_call_operand.vmem [shape: f32[1,128], index: 6, kind: input, shape index: {}]
  %s7 = inlined_call_operand.hbm [shape: f32[2,16,16,128], index: 7, kind: output, shape index: {}]
  %s8 = sld [smem:[#allocation0]]
  $region65: #{tpu_custom_call.1} parent=0
    _
  %s10 = ssub.s32 1, %s8
  %s11 = scalar_select 0, %s10, %s8
  $region1: #{tpu_custom_call.1} parent=0
    #allocation3 [shape = 'u8[262144]{0}', space=vmem, size = 0x40000, scoped, tag = 'input window, operand 0']
    #allocation4 [shape = 's32[2]{0}', space=sflag, size = 0x8, scoped, tag = 'scoped memory for tpu_custom_call.1']
    #allocation5 [shape = 's32[2]{0}', space=sflag, size = 0x8, scoped, tag = 'scoped memory for tpu_custom_call.1']
    #allocation6 [shape = 'u8[262144]{0}', space=vmem, size = 0x40000, scoped, tag = 'output window, operand 0']
    %12 = vsyncpa [#allocation4], 0
    %s13 = scalar_lea.sflag [#allocation4], 1
    %14 = vsyncpa %s13, 0
    %15 = vsyncpa [#allocation5], 0
    %s16 = scalar_lea.sflag [#allocation5], 1
    %17 = vsyncpa %s16, 0
    loop: start=0, step=1, limit=4
    $region2: #{tpu_custom_call.1} parent=1 // loop_pre_header
      _
    $region3: #{tpu_custom_call.1} parent=1 // loop_header
      %s19 = sphi 0, %s23
      %p20 = scmp.ge.s32.totalorder %s19, 4
      %s29 = sphi 0, %s31
      %s32 = sphi 0, %s29
      %s33 = sphi 0, %s32
      %s49 = sphi 0, %s33
      %s53 = sphi 0, %s53
      %s55 = sphi 0, %s53
      %s56 = sphi 0, %s55
      %s70 = sphi 0, %s56
      %s74 = sphi 0, %s74
      %s76 = sphi 0, %s74
      %s77 = sphi 0, %s76
      %s91 = sphi 0, %s77
      %s95 = sphi 0, %s95
      %s97 = sphi 0, %s95
      %s98 = sphi 0, %s97
      %s112 = sphi 0, %s98
      %s116 = sphi 0, %s116
      %s118 = sphi 0, %s116
      %s119 = sphi 0, %s118
      %s133 = sphi 0, %s119
      %s137 = sphi 0, %s137
      %s139 = sphi 0, %s137
      %s140 = sphi 0, %s139
      %s154 = sphi 0, %s140
      %s158 = sphi 0, %s158
      %s160 = sphi 0, %s158
      %s161 = sphi 0, %s160
      %s175 = sphi 0, %s161
      %s181 = sphi 0, %s183
      %s184 = sphi 0, %s181
      %s185 = sphi 0, %s184
      %s201 = sphi 0, %s185
    $region4: #{tpu_custom_call.1} parent=1 // loop_header_branch
      %22 = sbr.rel (%p20) target = $region8
    $region5: #{tpu_custom_call.1} parent=1 // loop_body
      %s24 = ssub.s32 %s19, 1
      %s25 = ssub.s32 %s19, 2
      %s26 = sadd.s32 %s19, 1
      %s27 = ssub.s32 %s19, %s26
      %p28 = scmp.eq.s32.totalorder %s27, 0
      %s30 = sadd.s32 %s29, 1
      %s31 = scalar_select %p28, %s29, %s30
      %p34 = pneg %p28
      %p35 = scmp.eq.s32.totalorder %s19, 1
      %p36 = por %p34, %p35
      %p37 = scmp.ne.s32.totalorder %s29, %s32
      %p38 = scmp.eq.s32.totalorder %s19, 0
      %p39 = por %p37, %p38
      %p40 = scmp.ne.s32.totalorder %s29, %s32
      %p41 = scmp.eq.s32.totalorder %s24, 1
      %p42 = por %p40, %p41
      %p43 = scmp.ne.s32.totalorder %s32, %s33
      %p44 = scmp.eq.s32.totalorder %s24, 0
      %p45 = por %p43, %p44
      %p46 = scmp.ne.s32.totalorder %s32, %s33
      %p47 = scmp.eq.s32.totalorder %s25, 1
      %p48 = por %p46, %p47
      %p50 = scmp.ne.s32.totalorder %s33, %s49
      %p51 = scmp.eq.s32.totalorder %s25, 0
      %p52 = por %p50, %p51
      %s54 = sadd.s32 %s53, 1
      %p57 = scmp.eq.s32.totalorder %s19, 1
      %p58 = scmp.ne.s32.totalorder %s53, %s55
      %p59 = scmp.eq.s32.totalorder %s19, 0
      %p60 = por %p58, %p59
      %p61 = scmp.ne.s32.totalorder %s53, %s55
      %p62 = scmp.eq.s32.totalorder %s24, 1
      %p63 = por %p61, %p62
      %p64 = scmp.ne.s32.totalorder %s55, %s56
      %p65 = scmp.eq.s32.totalorder %s24, 0
      %p66 = por %p64, %p65
      %p67 = scmp.ne.s32.totalorder %s55, %s56
      %p68 = scmp.eq.s32.totalorder %s25, 1
      %p69 = por %p67, %p68
      %p71 = scmp.ne.s32.totalorder %s56, %s70
      %p72 = scmp.eq.s32.totalorder %s25, 0
      %p73 = por %p71, %p72
      %s75 = sadd.s32 %s74, 1
      %p78 = scmp.eq.s32.totalorder %s19, 1
      %p79 = scmp.ne.s32.totalorder %s74, %s76
      %p80 = scmp.eq.s32.totalorder %s19, 0
      %p81 = por %p79, %p80
      %p82 = scmp.ne.s32.totalorder %s74, %s76
      %p83 = scmp.eq.s32.totalorder %s24, 1
      %p84 = por %p82, %p83
      %p85 = scmp.ne.s32.totalorder %s76, %s77
      %p86 = scmp.eq.s32.totalorder %s24, 0
      %p87 = por %p85, %p86
      %p88 = scmp.ne.s32.totalorder %s76, %s77
      %p89 = scmp.eq.s32.totalorder %s25, 1
      %p90 = por %p88, %p89
      %p92 = scmp.ne.s32.totalorder %s77, %s91
      %p93 = scmp.eq.s32.totalorder %s25, 0
      %p94 = por %p92, %p93
      %s96 = sadd.s32 %s95, 1
      %p99 = scmp.eq.s32.totalorder %s19, 1
      %p100 = scmp.ne.s32.totalorder %s95, %s97
      %p101 = scmp.eq.s32.totalorder %s19, 0
      %p102 = por %p100, %p101
      %p103 = scmp.ne.s32.totalorder %s95, %s97
      %p104 = scmp.eq.s32.totalorder %s24, 1
      %p105 = por %p103, %p104
      %p106 = scmp.ne.s32.totalorder %s97, %s98
      %p107 = scmp.eq.s32.totalorder %s24, 0
      %p108 = por %p106, %p107
      %p109 = scmp.ne.s32.totalorder %s97, %s98
      %p110 = scmp.eq.s32.totalorder %s25, 1
      %p111 = por %p109, %p110
      %p113 = scmp.ne.s32.totalorder %s98, %s112
      %p114 = scmp.eq.s32.totalorder %s25, 0
      %p115 = por %p113, %p114
      %s117 = sadd.s32 %s116, 1
      %p120 = scmp.eq.s32.totalorder %s19, 1
      %p121 = scmp.ne.s32.totalorder %s116, %s118
      %p122 = scmp.eq.s32.totalorder %s19, 0
      %p123 = por %p121, %p122
      %p124 = scmp.ne.s32.totalorder %s116, %s118
      %p125 = scmp.eq.s32.totalorder %s24, 1
      %p126 = por %p124, %p125
      %p127 = scmp.ne.s32.totalorder %s118, %s119
      %p128 = scmp.eq.s32.totalorder %s24, 0
      %p129 = por %p127, %p128
      %p130 = scmp.ne.s32.totalorder %s118, %s119
      %p131 = scmp.eq.s32.totalorder %s25, 1
      %p132 = por %p130, %p131
      %p134 = scmp.ne.s32.totalorder %s119, %s133
      %p135 = scmp.eq.s32.totalorder %s25, 0
      %p136 = por %p134, %p135
      %s138 = sadd.s32 %s137, 1
      %p141 = scmp.eq.s32.totalorder %s19, 1
      %p142 = scmp.ne.s32.totalorder %s137, %s139
      %p143 = scmp.eq.s32.totalorder %s19, 0
      %p144 = por %p142, %p143
      %p145 = scmp.ne.s32.totalorder %s137, %s139
      %p146 = scmp.eq.s32.totalorder %s24, 1
      %p147 = por %p145, %p146
      %p148 = scmp.ne.s32.totalorder %s139, %s140
      %p149 = scmp.eq.s32.totalorder %s24, 0
      %p150 = por %p148, %p149
      %p151 = scmp.ne.s32.totalorder %s139, %s140
      %p152 = scmp.eq.s32.totalorder %s25, 1
      %p153 = por %p151, %p152
      %p155 = scmp.ne.s32.totalorder %s140, %s154
      %p156 = scmp.eq.s32.totalorder %s25, 0
      %p157 = por %p155, %p156
      %s159 = sadd.s32 %s158, 1
      %p162 = scmp.eq.s32.totalorder %s19, 1
      %p163 = scmp.ne.s32.totalorder %s158, %s160
      %p164 = scmp.eq.s32.totalorder %s19, 0
      %p165 = por %p163, %p164
      %p166 = scmp.ne.s32.totalorder %s158, %s160
      %p167 = scmp.eq.s32.totalorder %s24, 1
      %p168 = por %p166, %p167
      %p169 = scmp.ne.s32.totalorder %s160, %s161
      %p170 = scmp.eq.s32.totalorder %s24, 0
      %p171 = por %p169, %p170
      %p172 = scmp.ne.s32.totalorder %s160, %s161
      %p173 = scmp.eq.s32.totalorder %s25, 1
      %p174 = por %p172, %p173
      %p176 = scmp.ne.s32.totalorder %s161, %s175
      %p177 = scmp.eq.s32.totalorder %s25, 0
      %p178 = por %p176, %p177
      %s179 = ssub.s32 %s19, %s26
      %p180 = scmp.eq.s32.totalorder %s179, 0
      %s182 = sadd.s32 %s181, 1
      %s183 = scalar_select %p180, %s181, %s182
      %p186 = pneg %p180
      %p187 = scmp.eq.s32.totalorder %s19, 1
      %p188 = por %p186, %p187
      %p189 = scmp.ne.s32.totalorder %s181, %s184
      %p190 = scmp.eq.s32.totalorder %s19, 0
      %p191 = por %p189, %p190
      %p192 = scmp.ne.s32.totalorder %s181, %s184
      %p193 = scmp.eq.s32.totalorder %s24, 1
      %p194 = por %p192, %p193
      %p195 = scmp.ne.s32.totalorder %s184, %s185
      %p196 = scmp.eq.s32.totalorder %s24, 0
      %p197 = por %p195, %p196
      %p198 = scmp.ne.s32.totalorder %s184, %s185
      %p199 = scmp.eq.s32.totalorder %s25, 1
      %p200 = por %p198, %p199
      %p202 = scmp.ne.s32.totalorder %s185, %s201
      %p203 = scmp.eq.s32.totalorder %s25, 0
      %p204 = por %p202, %p203
      %p205 = scmp.le.s32.totalorder 1, %s19
      %p206 = scmp.lt.s32.totalorder %s19, 3
      %p207 = pnand %p205, %p206
      %p208 = pneg %p207
      // Predicated region
      $region9: #{tpu_custom_call.1} parent=5 // pred_check
        _
      $region10: #{tpu_custom_call.1} parent=5 // pred_check_branch
        %210 = sbr.rel (%p207) target = $region12
      $region11: #{tpu_custom_call.1} parent=5 // pred_region
        %s211 = ssub.s32 %s19, 1
        // Predicated region
        $region13: #{tpu_custom_call.1} parent=11 // pred_check
          %p212 = pneg %p66
        $region14: #{tpu_custom_call.1} parent=11 // pred_check_branch
          %214 = sbr.rel (%p212) target = $region16
        $region15: #{tpu_custom_call.1} parent=11 // pred_region
          _
        $region16: #{tpu_custom_call.1} parent=11 // pred_fallthru
          _
        // Predicated region
        $region17: #{tpu_custom_call.1} parent=11 // pred_check
          %p215 = pneg %p87
        $region18: #{tpu_custom_call.1} parent=11 // pred_check_branch
          %217 = sbr.rel (%p215) target = $region20
        $region19: #{tpu_custom_call.1} parent=11 // pred_region
          _
        $region20: #{tpu_custom_call.1} parent=11 // pred_fallthru
          _
        // Predicated region
        $region21: #{tpu_custom_call.1} parent=11 // pred_check
          %p218 = pneg %p108
        $region22: #{tpu_custom_call.1} parent=11 // pred_check_branch
          %220 = sbr.rel (%p218) target = $region24
        $region23: #{tpu_custom_call.1} parent=11 // pred_region
          _
        $region24: #{tpu_custom_call.1} parent=11 // pred_fallthru
          _
        // Predicated region
        $region25: #{tpu_custom_call.1} parent=11 // pred_check
          %p221 = pneg %p129
        $region26: #{tpu_custom_call.1} parent=11 // pred_check_branch
          %223 = sbr.rel (%p221) target = $region28
        $region27: #{tpu_custom_call.1} parent=11 // pred_region
          _
        $region28: #{tpu_custom_call.1} parent=11 // pred_fallthru
          _
        // Predicated region
        $region29: #{tpu_custom_call.1} parent=11 // pred_check
          %p224 = pneg %p150
        $region30: #{tpu_custom_call.1} parent=11 // pred_check_branch
          %226 = sbr.rel (%p224) target = $region32
        $region31: #{tpu_custom_call.1} parent=11 // pred_region
          _
        $region32: #{tpu_custom_call.1} parent=11 // pred_fallthru
          _
        // Predicated region
        $region33: #{tpu_custom_call.1} parent=11 // pred_check
          %p227 = pneg %p171
        $region34: #{tpu_custom_call.1} parent=11 // pred_check_branch
          %229 = sbr.rel (%p227) target = $region36
        $region35: #{tpu_custom_call.1} parent=11 // pred_region
          _
        $region36: #{tpu_custom_call.1} parent=11 // pred_fallthru
          _
      $region12: #{tpu_custom_call.1} parent=5 // pred_fallthru
        _
      %p230 = scmp.lt.s32.totalorder %s19, 2
      // Predicated region
      $region37: #{tpu_custom_call.1} parent=5 // pred_check
        %p231 = pneg %p230
      $region38: #{tpu_custom_call.1} parent=5 // pred_check_branch
        %233 = sbr.rel (%p231) target = $region40
      $region39: #{tpu_custom_call.1} parent=5 // pred_region
        // Predicated region
        $region41: #{tpu_custom_call.1} parent=39 // pred_check
          %p234 = pneg %p39
        $region42: #{tpu_custom_call.1} parent=39 // pred_check_branch
          %236 = sbr.rel (%p234) target = $region44
        $region43: #{tpu_custom_call.1} parent=39 // pred_region
          %s237 = sand.u32 %s29, 1
          %s238 = scalar_lea.sflag [#allocation4], %s237
          %s239 = sand.u32 %s29, 1
          %s240 = smul.addr %s239, 256
          %s241 = scalar_lea.vmem [#allocation3], %s240
          %s243 = ssub.s32 4096, 4096
          %244 = vsyncadd %s238, %s243
          %s245 = smul.addr %s19, 32
          %s246 = smul.addr %s245, 128
          %s247 = scalar_lea.hbm %s0, %s246
          %s248 = sshll.u32 %s241, 4
          %s249 = int_to_ptr.vmem [resolvable:$true] %s248
          %254 = dma.hbm_to_vmem [thread:$0]  %s247, 4096, %s249, %s238, 128, 128, 8
        $region44: #{tpu_custom_call.1} parent=39 // pred_fallthru
          _
      $region40: #{tpu_custom_call.1} parent=5 // pred_fallthru
        _
      %p255 = scmp.le.s32.totalorder 1, %s19
      %p256 = scmp.lt.s32.totalorder %s19, 3
      %p257 = pnand %p255, %p256
      %p258 = pneg %p257
      // Predicated region
      $region45: #{tpu_custom_call.1} parent=5 // pred_check
        _
      $region46: #{tpu_custom_call.1} parent=5 // pred_check_branch
        %260 = sbr.rel (%p257) target = $region48
      $region47: #{tpu_custom_call.1} parent=5 // pred_region
        %s261 = ssub.s32 %s19, 1
        %s262 = sand.u32 %s32, 1
        %s263 = scalar_lea.sflag [#allocation4], %s262
        %s264 = sand.u32 %s32, 1
        %s265 = smul.addr %s264, 256
        %s266 = scalar_lea.vmem [#allocation3], %s265
        // Predicated region
        $region49: #{tpu_custom_call.1} parent=47 // pred_check
          %p267 = pneg %p45
        $region50: #{tpu_custom_call.1} parent=47 // pred_check_branch
          %269 = sbr.rel (%p267) target = $region52
        $region51: #{tpu_custom_call.1} parent=47 // pred_region
          %270 = dma.done %s263, 4096
        $region52: #{tpu_custom_call.1} parent=47 // pred_fallthru
          _
        %s271 = sand.u32 %s32, 1
        %s272 = scalar_lea.sflag [#allocation4], %s271
        %s273 = sand.u32 %s32, 1
        %s274 = smul.addr %s273, 256
        %s275 = scalar_lea.vmem [#allocation3], %s274
        %p276 = pneg %p45
        %p277 = pneg %p42
        %p278 = pneg %p66
        %p279 = pneg %p63
        %p280 = pneg %p87
        %p281 = pneg %p84
        %p282 = pneg %p108
        %p283 = pneg %p105
        %p284 = pneg %p129
        %p285 = pneg %p126
        %p286 = pneg %p150
        %p287 = pneg %p147
        %p288 = pneg %p171
        %p289 = pneg %p168
        %p290 = pneg %p197
        %p291 = pneg %p194
        %s292 = sand.u32 %s184, 1
        %s293 = scalar_lea.sflag [#allocation5], %s292
        %s294 = sand.u32 %s184, 1
        %s295 = smul.addr %s294, 256
        %s296 = scalar_lea.vmem [#allocation6], %s295
        %v298 = vld [vmem:[%s266] sm:$0xff]
        %v299 = vld [vmem:[%s266 + $0x8] sm:$0xff]
        %v300 = vld [vmem:[%s266 + $0x10] sm:$0xff]
        %v301 = vld [vmem:[%s266 + $0x18] sm:$0xff]
        %v302 = vld [vmem:[%s266 + $0x20] sm:$0xff]
        %v303 = vld [vmem:[%s266 + $0x28] sm:$0xff]
        %v304 = vld [vmem:[%s266 + $0x30] sm:$0xff]
        %v305 = vld [vmem:[%s266 + $0x38] sm:$0xff]
        %v306 = vld [vmem:[%s266 + $0x40] sm:$0xff]
        %v307 = vld [vmem:[%s266 + $0x48] sm:$0xff]
        %v308 = vld [vmem:[%s266 + $0x50] sm:$0xff]
        %v309 = vld [vmem:[%s266 + $0x58] sm:$0xff]
        %v310 = vld [vmem:[%s266 + $0x60] sm:$0xff]
        %v311 = vld [vmem:[%s266 + $0x68] sm:$0xff]
        %v312 = vld [vmem:[%s266 + $0x70] sm:$0xff]
        %v313 = vld [vmem:[%s266 + $0x78] sm:$0xff]
        %v314 = vld [vmem:[%s266 + $0x80] sm:$0xff]
        %v315 = vld [vmem:[%s266 + $0x88] sm:$0xff]
        %v316 = vld [vmem:[%s266 + $0x90] sm:$0xff]
        %v317 = vld [vmem:[%s266 + $0x98] sm:$0xff]
        %v318 = vld [vmem:[%s266 + $0xa0] sm:$0xff]
        %v319 = vld [vmem:[%s266 + $0xa8] sm:$0xff]
        %v320 = vld [vmem:[%s266 + $0xb0] sm:$0xff]
        %v321 = vld [vmem:[%s266 + $0xb8] sm:$0xff]
        %v322 = vld [vmem:[%s266 + $0xc0] sm:$0xff]
        %v323 = vld [vmem:[%s266 + $0xc8] sm:$0xff]
        %v324 = vld [vmem:[%s266 + $0xd0] sm:$0xff]
        %v325 = vld [vmem:[%s266 + $0xd8] sm:$0xff]
        %v326 = vld [vmem:[%s266 + $0xe0] sm:$0xff]
        %v327 = vld [vmem:[%s266 + $0xe8] sm:$0xff]
        %v328 = vld [vmem:[%s266 + $0xf0] sm:$0xff]
        %v329 = vld [vmem:[%s266 + $0xf8] sm:$0xff]
        %v330 = vpack.c.bf16 %v299, %v298
        %v331 = vpack.c.bf16 %v301, %v300
        %v332 = vpack.c.bf16 %v303, %v302
        %v333 = vpack.c.bf16 %v305, %v304
        %v334 = vpack.c.bf16 %v307, %v306
        %v335 = vpack.c.bf16 %v309, %v308
        %v336 = vpack.c.bf16 %v311, %v310
        %v337 = vpack.c.bf16 %v313, %v312
        %v338 = vpack.c.bf16 %v315, %v314
        %v339 = vpack.c.bf16 %v317, %v316
        %v340 = vpack.c.bf16 %v319, %v318
        %v341 = vpack.c.bf16 %v321, %v320
        %v342 = vpack.c.bf16 %v323, %v322
        %v343 = vpack.c.bf16 %v325, %v324
        %v344 = vpack.c.bf16 %v327, %v326
        %v345 = vpack.c.bf16 %v329, %v328
        %v346 = vld [vmem:[%s1] sm:$0xf]
        %v347 = vld [vmem:[%s1 + $0x4] sm:$0xf]
        %v348 = vld [vmem:[%s1 + $0x8] sm:$0xf]
        %v349 = vld [vmem:[%s1 + $0xc] sm:$0xf]
        %v350 = vld [vmem:[%s1 + $0x10] sm:$0xf]
        %v351 = vld [vmem:[%s1 + $0x14] sm:$0xf]
        %v352 = vld [vmem:[%s1 + $0x18] sm:$0xf]
        %v353 = vld [vmem:[%s1 + $0x1c] sm:$0xf]
        %v354 = vld [vmem:[%s1 + $0x20] sm:$0xf]
        %v355 = vld [vmem:[%s1 + $0x24] sm:$0xf]
        %v356 = vld [vmem:[%s1 + $0x28] sm:$0xf]
        %v357 = vld [vmem:[%s1 + $0x2c] sm:$0xf]
        %v358 = vld [vmem:[%s1 + $0x30] sm:$0xf]
        %v359 = vld [vmem:[%s1 + $0x34] sm:$0xf]
        %v360 = vld [vmem:[%s1 + $0x38] sm:$0xf]
        %v361 = vld [vmem:[%s1 + $0x3c] sm:$0xf]
        %v362 = vld [vmem:[%s2] sm:$0x1]
        %v364 = vlaneseq
        %v365 = vshrl.u32 %v364, 7
        %v366 = vsub.s32 0, %v365
        %v367 = vrot.slane %v362, %v366
        %v385 = vunpack.c.l.b16 %v346
        %v386 = vunpack.c.l.b16 %v347
        %v387 = vunpack.c.l.b16 %v348
        %v388 = vunpack.c.l.b16 %v349
        %v389 = vunpack.c.l.b16 %v350
        %v390 = vunpack.c.l.b16 %v351
        %v391 = vunpack.c.l.b16 %v352
        %v392 = vunpack.c.l.b16 %v353
        %v393 = vunpack.c.l.b16 %v354
        %v394 = vunpack.c.l.b16 %v355
        %v395 = vunpack.c.l.b16 %v356
        %v396 = vunpack.c.l.b16 %v357
        %v397 = vunpack.c.l.b16 %v358
        %v398 = vunpack.c.l.b16 %v359
        %v399 = vunpack.c.l.b16 %v360
        %v400 = vunpack.c.l.b16 %v361
        %v401 = vpack.c.b16 %v386, %v385
        %v402 = vpack.c.b16 %v388, %v387
        %v403 = vpack.c.b16 %v390, %v389
        %v404 = vpack.c.b16 %v392, %v391
        %v405 = vpack.c.b16 %v394, %v393
        %v406 = vpack.c.b16 %v396, %v395
        %v407 = vpack.c.b16 %v398, %v397
        %v408 = vpack.c.b16 %v400, %v399
        %417 = vmatprep.subr.bf16.mxu0 0
        %418 = vmatpush1.bf16.msra.mxu0 %v401
        %419 = vmatprep.subr.bf16.mxu0 0
        %420 = vmatpush1.bf16.msra.mxu0 %v402
        %421 = vmatprep.subr.bf16.mxu0 0
        %422 = vmatpush1.bf16.msra.mxu0 %v403
        %423 = vmatprep.subr.bf16.mxu0 0
        %424 = vmatpush1.bf16.msra.mxu0 %v404
        %425 = vmatprep.subr.bf16.mxu0 0
        %426 = vmatpush1.bf16.msra.mxu0 %v405
        %427 = vmatprep.subr.bf16.mxu0 0
        %428 = vmatpush1.bf16.msra.mxu0 %v406
        %429 = vmatprep.subr.bf16.mxu0 0
        %430 = vmatpush1.bf16.msra.mxu0 %v407
        %431 = vmatprep.subr.bf16.mxu0 0
        %432 = vmatpush1.bf16.msra.mxu0 %v408
        %433 = vmatprep.subr.bf16.mxu0 0
        %434 = vmatpush1.bf16.msra.mxu0 0
        %435 = vmatprep.subr.bf16.mxu0 0
        %436 = vmatpush1.bf16.msra.mxu0 0
        %437 = vmatprep.subr.bf16.mxu0 0
        %438 = vmatpush1.bf16.msra.mxu0 0
        %439 = vmatprep.subr.bf16.mxu0 0
        %440 = vmatpush1.bf16.msra.mxu0 0
        %441 = vmatprep.subr.bf16.mxu0 0
        %442 = vmatpush1.bf16.msra.mxu0 0
        %443 = vmatprep.subr.bf16.mxu0 0
        %444 = vmatpush1.bf16.msra.mxu0 0
        %445 = vmatprep.subr.bf16.mxu0 0
        %446 = vmatpush1.bf16.msra.mxu0 0
        %447 = vmatprep.subr.bf16.mxu0 0
        %448 = vmatpush1.bf16.msra.mxu0 0
        %449 = vmatprep.mubr.bf16.mxu0 0
        %450 = vmatmul.mubr.bf16.gmra.mrb[0].mxu0 %v330
        %v451 = vpop.f32.mrb[0].mxu0
        %v452 = vadd.f32 %v367, %v451
        %v453 = vpop.f32.mrb[0].mxu0
        %v454 = vpop.f32.mrb[0].mxu0
        %v455 = vadd.f32 %v367, %v454
        %v456 = vpop.f32.mrb[0].mxu0
        %457 = vmatprep.mubr.bf16.mxu0 0
        %458 = vmatmul.mubr.bf16.gmra.mrb[0].mxu0 %v331
        %v459 = vpop.f32.mrb[0].mxu0
        %v460 = vadd.f32 %v367, %v459
        %v461 = vpop.f32.mrb[0].mxu0
        %v462 = vpop.f32.mrb[0].mxu0
        %v463 = vadd.f32 %v367, %v462
        %v464 = vpop.f32.mrb[0].mxu0
        %465 = vmatprep.mubr.bf16.mxu0 0
        %466 = vmatmul.mubr.bf16.gmra.mrb[0].mxu0 %v332
        %v467 = vpop.f32.mrb[0].mxu0
        %v468 = vadd.f32 %v367, %v467
        %v469 = vpop.f32.mrb[0].mxu0
        %v470 = vpop.f32.mrb[0].mxu0
        %v471 = vadd.f32 %v367, %v470
        %v472 = vpop.f32.mrb[0].mxu0
        %473 = vmatprep.mubr.bf16.mxu0 0
        %474 = vmatmul.mubr.bf16.gmra.mrb[0].mxu0 %v333
        %v475 = vpop.f32.mrb[0].mxu0
        %v476 = vadd.f32 %v367, %v475
        %v477 = vpop.f32.mrb[0].mxu0
        %v478 = vpop.f32.mrb[0].mxu0
        %v479 = vadd.f32 %v367, %v478
        %v480 = vpop.f32.mrb[0].mxu0
        %481 = vmatprep.mubr.bf16.mxu0 0
        %482 = vmatmul.mubr.bf16.gmra.mrb[0].mxu0 %v334
        %v483 = vpop.f32.mrb[0].mxu0
        %v484 = vadd.f32 %v367, %v483
        %v485 = vpop.f32.mrb[0].mxu0
        %v486 = vpop.f32.mrb[0].mxu0
        %v487 = vadd.f32 %v367, %v486
        %v488 = vpop.f32.mrb[0].mxu0
        %489 = vmatprep.mubr.bf16.mxu0 0
        %490 = vmatmul.mubr.bf16.gmra.mrb[0].mxu0 %v335
        %v491 = vpop.f32.mrb[0].mxu0
        %v492 = vadd.f32 %v367, %v491
        %v493 = vpop.f32.mrb[0].mxu0
        %v494 = vpop.f32.mrb[0].mxu0
        %v495 = vadd.f32 %v367, %v494
        %v496 = vpop.f32.mrb[0].mxu0
        %497 = vmatprep.mubr.bf16.mxu0 0
        %498 = vmatmul.mubr.bf16.gmra.mrb[0].mxu0 %v336
        %v499 = vpop.f32.mrb[0].mxu0
        %v500 = vadd.f32 %v367, %v499
        %v501 = vpop.f32.mrb[0].mxu0
        %v502 = vpop.f32.mrb[0].mxu0
        %v503 = vadd.f32 %v367, %v502
        %v504 = vpop.f32.mrb[0].mxu0
        %505 = vmatprep.mubr.bf16.mxu0 0
        %506 = vmatmul.mubr.bf16.gmra.mrb[0].mxu0 %v337
        %v507 = vpop.f32.mrb[0].mxu0
        %v508 = vadd.f32 %v367, %v507
        %v509 = vpop.f32.mrb[0].mxu0
        %v510 = vpop.f32.mrb[0].mxu0
        %v511 = vadd.f32 %v367, %v510
        %v512 = vpop.f32.mrb[0].mxu0
        %513 = vmatprep.mubr.bf16.mxu0 0
        %514 = vmatmul.mubr.bf16.gmra.mrb[0].mxu0 %v338
        %v515 = vpop.f32.mrb[0].mxu0
        %v516 = vadd.f32 %v367, %v515
        %v517 = vpop.f32.mrb[0].mxu0
        %v518 = vpop.f32.mrb[0].mxu0
        %v519 = vadd.f32 %v367, %v518
        %v520 = vpop.f32.mrb[0].mxu0
        %521 = vmatprep.mubr.bf16.mxu0 0
        %522 = vmatmul.mubr.bf16.gmra.mrb[0].mxu0 %v339
        %v523 = vpop.f32.mrb[0].mxu0
        %v524 = vadd.f32 %v367, %v523
        %v525 = vpop.f32.mrb[0].mxu0
        %v526 = vpop.f32.mrb[0].mxu0
        %v527 = vadd.f32 %v367, %v526
        %v528 = vpop.f32.mrb[0].mxu0
        %529 = vmatprep.mubr.bf16.mxu0 0
        %530 = vmatmul.mubr.bf16.gmra.mrb[0].mxu0 %v340
        %v531 = vpop.f32.mrb[0].mxu0
        %v532 = vadd.f32 %v367, %v531
        %v533 = vpop.f32.mrb[0].mxu0
        %v534 = vpop.f32.mrb[0].mxu0
        %v535 = vadd.f32 %v367, %v534
        %v536 = vpop.f32.mrb[0].mxu0
        %537 = vmatprep.mubr.bf16.mxu0 0
        %538 = vmatmul.mubr.bf16.gmra.mrb[0].mxu0 %v341
        %v539 = vpop.f32.mrb[0].mxu0
        %v540 = vadd.f32 %v367, %v539
        %v541 = vpop.f32.mrb[0].mxu0
        %v542 = vpop.f32.mrb[0].mxu0
        %v543 = vadd.f32 %v367, %v542
        %v544 = vpop.f32.mrb[0].mxu0
        %545 = vmatprep.mubr.bf16.mxu0 0
        %546 = vmatmul.mubr.bf16.gmra.mrb[0].mxu0 %v342
        %v547 = vpop.f32.mrb[0].mxu0
        %v548 = vadd.f32 %v367, %v547
        %v549 = vpop.f32.mrb[0].mxu0
        %v550 = vpop.f32.mrb[0].mxu0
        %v551 = vadd.f32 %v367, %v550
        %v552 = vpop.f32.mrb[0].mxu0
        %553 = vmatprep.mubr.bf16.mxu0 0
        %554 = vmatmul.mubr.bf16.gmra.mrb[0].mxu0 %v343
        %v555 = vpop.f32.mrb[0].mxu0
        %v556 = vadd.f32 %v367, %v555
        %v557 = vpop.f32.mrb[0].mxu0
        %v558 = vpop.f32.mrb[0].mxu0
        %v559 = vadd.f32 %v367, %v558
        %v560 = vpop.f32.mrb[0].mxu0
        %561 = vmatprep.mubr.bf16.mxu0 0
        %562 = vmatmul.mubr.bf16.gmra.mrb[0].mxu0 %v344
        %v563 = vpop.f32.mrb[0].mxu0
        %v564 = vadd.f32 %v367, %v563
        %v565 = vpop.f32.mrb[0].mxu0
        %v566 = vpop.f32.mrb[0].mxu0
        %v567 = vadd.f32 %v367, %v566
        %v568 = vpop.f32.mrb[0].mxu0
        %569 = vmatprep.mubr.bf16.mxu0 0
        %570 = vmatmul.mubr.bf16.gmra.mrb[0].mxu0 %v345
        %v571 = vpop.f32.mrb[0].mxu0
        %v572 = vadd.f32 %v367, %v571
        %v573 = vpop.f32.mrb[0].mxu0
        %v574 = vpop.f32.mrb[0].mxu0
        %v575 = vadd.f32 %v367, %v574
        %v576 = vpop.f32.mrb[0].mxu0
        %577 = vdwg.mxu0
        %v578 = vmax.f32 %v452, 0.0
        %v579 = vmax.f32 %v455, 0.0
        %v580 = vmax.f32 %v460, 0.0
        %v581 = vmax.f32 %v463, 0.0
        %v582 = vmax.f32 %v468, 0.0
        %v583 = vmax.f32 %v471, 0.0
        %v584 = vmax.f32 %v476, 0.0
        %v585 = vmax.f32 %v479, 0.0
        %v586 = vmax.f32 %v484, 0.0
        %v587 = vmax.f32 %v487, 0.0
        %v588 = vmax.f32 %v492, 0.0
        %v589 = vmax.f32 %v495, 0.0
        %v590 = vmax.f32 %v500, 0.0
        %v591 = vmax.f32 %v503, 0.0
        %v592 = vmax.f32 %v508, 0.0
        %v593 = vmax.f32 %v511, 0.0
        %v594 = vmax.f32 %v516, 0.0
        %v595 = vmax.f32 %v519, 0.0
        %v596 = vmax.f32 %v524, 0.0
        %v597 = vmax.f32 %v527, 0.0
        %v598 = vmax.f32 %v532, 0.0
        %v599 = vmax.f32 %v535, 0.0
        %v600 = vmax.f32 %v540, 0.0
        %v601 = vmax.f32 %v543, 0.0
        %v602 = vmax.f32 %v548, 0.0
        %v603 = vmax.f32 %v551, 0.0
        %v604 = vmax.f32 %v556, 0.0
        %v605 = vmax.f32 %v559, 0.0
        %v606 = vmax.f32 %v564, 0.0
        %v607 = vmax.f32 %v567, 0.0
        %v608 = vmax.f32 %v572, 0.0
        %v609 = vmax.f32 %v575, 0.0
        %s610 = scalar_lea.vmem [#allocation2], 24
        %vm611 = vcmask 261120
        %612 = vst.msk [vmem:[%s610 + $0x1] sm:$0xff] %vm611, %v578
        %613 = vst.msk [vmem:[%s610 + $0x9] sm:$0xff] %vm611, %v579
        %614 = vst.msk [vmem:[%s610 + $0x19] sm:$0xff] %vm611, %v580
        %615 = vst.msk [vmem:[%s610 + $0x21] sm:$0xff] %vm611, %v581
        %616 = vst.msk [vmem:[%s610 + $0x31] sm:$0xff] %vm611, %v582
        %617 = vst.msk [vmem:[%s610 + $0x39] sm:$0xff] %vm611, %v583
        %618 = vst.msk [vmem:[%s610 + $0x49] sm:$0xff] %vm611, %v584
        %619 = vst.msk [vmem:[%s610 + $0x51] sm:$0xff] %vm611, %v585
        %620 = vst.msk [vmem:[%s610 + $0x61] sm:$0xff] %vm611, %v586
        %621 = vst.msk [vmem:[%s610 + $0x69] sm:$0xff] %vm611, %v587
        %622 = vst.msk [vmem:[%s610 + $0x79] sm:$0xff] %vm611, %v588
        %623 = vst.msk [vmem:[%s610 + $0x81] sm:$0xff] %vm611, %v589
        %624 = vst.msk [vmem:[%s610 + $0x91] sm:$0xff] %vm611, %v590
        %625 = vst.msk [vmem:[%s610 + $0x99] sm:$0xff] %vm611, %v591
        %626 = vst.msk [vmem:[%s610 + $0xa9] sm:$0xff] %vm611, %v592
        %627 = vst.msk [vmem:[%s610 + $0xb1] sm:$0xff] %vm611, %v593
        %628 = vst.msk [vmem:[%s610 + $0xc1] sm:$0xff] %vm611, %v594
        %629 = vst.msk [vmem:[%s610 + $0xc9] sm:$0xff] %vm611, %v595
        %630 = vst.msk [vmem:[%s610 + $0xd9] sm:$0xff] %vm611, %v596
        %631 = vst.msk [vmem:[%s610 + $0xe1] sm:$0xff] %vm611, %v597
        %632 = vst.msk [vmem:[%s610 + $0xf1] sm:$0xff] %vm611, %v598
        %633 = vst.msk [vmem:[%s610 + $0xf9] sm:$0xff] %vm611, %v599
        %634 = vst.msk [vmem:[%s610 + $0x109] sm:$0xff] %vm611, %v600
        %635 = vst.msk [vmem:[%s610 + $0x111] sm:$0xff] %vm611, %v601
        %636 = vst.msk [vmem:[%s610 + $0x121] sm:$0xff] %vm611, %v602
        %637 = vst.msk [vmem:[%s610 + $0x129] sm:$0xff] %vm611, %v603
        %638 = vst.msk [vmem:[%s610 + $0x139] sm:$0xff] %vm611, %v604
        %639 = vst.msk [vmem:[%s610 + $0x141] sm:$0xff] %vm611, %v605
        %640 = vst.msk [vmem:[%s610 + $0x151] sm:$0xff] %vm611, %v606
        %641 = vst.msk [vmem:[%s610 + $0x159] sm:$0xff] %vm611, %v607
        %642 = vst.msk [vmem:[%s610 + $0x169] sm:$0xff] %vm611, %v608
        %643 = vst.msk [vmem:[%s610 + $0x171] sm:$0xff] %vm611, %v609
        %644 = vst.msk [vmem:[#allocation2] sm:$0xff] %vm611, 0.0
        %645 = vst.msk [vmem:[#allocation2 + $0x8] sm:$0xff] %vm611, 0.0
        %646 = vst.msk [vmem:[#allocation2 + $0x10] sm:$0xff] %vm611, 0.0
        %s647 = scalar_lea.vmem [#allocation2], 408
        %648 = vst.msk [vmem:[%s647] sm:$0xff] %vm611, 0.0
        %649 = vst.msk [vmem:[%s647 + $0x8] sm:$0xff] %vm611, 0.0
        %650 = vst.msk [vmem:[%s647 + $0x10] sm:$0xff] %vm611, 0.0
        %vm651 = vcmask 253952
        %652 = vst.msk [vmem:[%s610] sm:$0x1] %vm651, 0.0
        %653 = vst.msk [vmem:[%s610 + $0x18] sm:$0x1] %vm651, 0.0
        %654 = vst.msk [vmem:[%s610 + $0x30] sm:$0x1] %vm651, 0.0
        %655 = vst.msk [vmem:[%s610 + $0x48] sm:$0x1] %vm651, 0.0
        %656 = vst.msk [vmem:[%s610 + $0x60] sm:$0x1] %vm651, 0.0
        %657 = vst.msk [vmem:[%s610 + $0x78] sm:$0x1] %vm651, 0.0
        %658 = vst.msk [vmem:[%s610 + $0x90] sm:$0x1] %vm651, 0.0
        %659 = vst.msk [vmem:[%s610 + $0xa8] sm:$0x1] %vm651, 0.0
        %660 = vst.msk [vmem:[%s610 + $0xc0] sm:$0x1] %vm651, 0.0
        %661 = vst.msk [vmem:[%s610 + $0xd8] sm:$0x1] %vm651, 0.0
        %662 = vst.msk [vmem:[%s610 + $0xf0] sm:$0x1] %vm651, 0.0
        %663 = vst.msk [vmem:[%s610 + $0x108] sm:$0x1] %vm651, 0.0
        %664 = vst.msk [vmem:[%s610 + $0x120] sm:$0x1] %vm651, 0.0
        %665 = vst.msk [vmem:[%s610 + $0x138] sm:$0x1] %vm651, 0.0
        %666 = vst.msk [vmem:[%s610 + $0x150] sm:$0x1] %vm651, 0.0
        %667 = vst.msk [vmem:[%s610 + $0x168] sm:$0x1] %vm651, 0.0
        %668 = vst.msk [vmem:[%s610 + $0x11] sm:$0x1] %vm651, 0.0
        %669 = vst.msk [vmem:[%s610 + $0x29] sm:$0x1] %vm651, 0.0
        %670 = vst.msk [vmem:[%s610 + $0x41] sm:$0x1] %vm651, 0.0
        %671 = vst.msk [vmem:[%s610 + $0x59] sm:$0x1] %vm651, 0.0
        %672 = vst.msk [vmem:[%s610 + $0x71] sm:$0x1] %vm651, 0.0
        %673 = vst.msk [vmem:[%s610 + $0x89] sm:$0x1] %vm651, 0.0
        %674 = vst.msk [vmem:[%s610 + $0xa1] sm:$0x1] %vm651, 0.0
        %675 = vst.msk [vmem:[%s610 + $0xb9] sm:$0x1] %vm651, 0.0
        %676 = vst.msk [vmem:[%s610 + $0xd1] sm:$0x1] %vm651, 0.0
        %677 = vst.msk [vmem:[%s610 + $0xe9] sm:$0x1] %vm651, 0.0
        %678 = vst.msk [vmem:[%s610 + $0x101] sm:$0x1] %vm651, 0.0
        %679 = vst.msk [vmem:[%s610 + $0x119] sm:$0x1] %vm651, 0.0
        %680 = vst.msk [vmem:[%s610 + $0x131] sm:$0x1] %vm651, 0.0
        %681 = vst.msk [vmem:[%s610 + $0x149] sm:$0x1] %vm651, 0.0
        %682 = vst.msk [vmem:[%s610 + $0x161] sm:$0x1] %vm651, 0.0
        %683 = vst.msk [vmem:[%s610 + $0x179] sm:$0x1] %vm651, 0.0
        %v684 = vld [vmem:[#allocation2] sm:$0xff]
        %v685 = vld [vmem:[#allocation2 + $0x8] sm:$0xff]
        %v686 = vld [vmem:[#allocation2 + $0x10] sm:$0xff]
        %v687 = vld [vmem:[#allocation2 + $0x18] sm:$0xff]
        %v688 = vld [vmem:[#allocation2 + $0x20] sm:$0xff]
        %v689 = vld [vmem:[#allocation2 + $0x28] sm:$0xff]
        %v690 = vld [vmem:[#allocation2 + $0x30] sm:$0xff]
        %v691 = vld [vmem:[#allocation2 + $0x38] sm:$0xff]
        %v692 = vld [vmem:[#allocation2 + $0x40] sm:$0xff]
        %v693 = vld [vmem:[#allocation2 + $0x48] sm:$0xff]
        %v694 = vld [vmem:[#allocation2 + $0x50] sm:$0xff]
        %v695 = vld [vmem:[#allocation2 + $0x58] sm:$0xff]
        %v696 = vld [vmem:[#allocation2 + $0x60] sm:$0xff]
        %v697 = vld [vmem:[#allocation2 + $0x68] sm:$0xff]
        %v698 = vld [vmem:[#allocation2 + $0x70] sm:$0xff]
        %v699 = vld [vmem:[#allocation2 + $0x78] sm:$0xff]
        %v700 = vld [vmem:[#allocation2 + $0x80] sm:$0xff]
        %v701 = vld [vmem:[#allocation2 + $0x88] sm:$0xff]
        %v702 = vld [vmem:[#allocation2 + $0x90] sm:$0xff]
        %v703 = vld [vmem:[#allocation2 + $0x98] sm:$0xff]
        %v704 = vld [vmem:[#allocation2 + $0xa0] sm:$0xff]
        %v705 = vld [vmem:[#allocation2 + $0xa8] sm:$0xff]
        %v706 = vld [vmem:[#allocation2 + $0xb0] sm:$0xff]
        %v707 = vld [vmem:[#allocation2 + $0xb8] sm:$0xff]
        %v708 = vld [vmem:[#allocation2 + $0xc0] sm:$0xff]
        %v709 = vld [vmem:[#allocation2 + $0xc8] sm:$0xff]
        %v710 = vld [vmem:[#allocation2 + $0xd0] sm:$0xff]
        %v711 = vld [vmem:[#allocation2 + $0xd8] sm:$0xff]
        %v712 = vld [vmem:[#allocation2 + $0xe0] sm:$0xff]
        %v713 = vld [vmem:[#allocation2 + $0xe8] sm:$0xff]
        %v714 = vld [vmem:[#allocation2 + $0xf0] sm:$0xff]
        %v715 = vld [vmem:[#allocation2 + $0xf8] sm:$0xff]
        %v716 = vld [vmem:[#allocation2 + $0x100] sm:$0xff]
        %v717 = vld [vmem:[#allocation2 + $0x108] sm:$0xff]
        %v718 = vld [vmem:[#allocation2 + $0x110] sm:$0xff]
        %v719 = vld [vmem:[#allocation2 + $0x118] sm:$0xff]
        %v720 = vld [vmem:[#allocation2 + $0x120] sm:$0xff]
        %v721 = vld [vmem:[#allocation2 + $0x128] sm:$0xff]
        %v722 = vld [vmem:[#allocation2 + $0x130] sm:$0xff]
        %v723 = vld [vmem:[#allocation2 + $0x138] sm:$0xff]
        %v724 = vld [vmem:[#allocation2 + $0x140] sm:$0xff]
        %v725 = vld [vmem:[#allocation2 + $0x148] sm:$0xff]
        %v726 = vld [vmem:[#allocation2 + $0x150] sm:$0xff]
        %v727 = vld [vmem:[#allocation2 + $0x158] sm:$0xff]
        %v728 = vld [vmem:[#allocation2 + $0x160] sm:$0xff]
        %v729 = vld [vmem:[#allocation2 + $0x168] sm:$0xff]
        %v730 = vld [vmem:[#allocation2 + $0x170] sm:$0xff]
        %v731 = vld [vmem:[#allocation2 + $0x178] sm:$0xff]
        %vm780 = vcmask 1046528
        %v781 = vrot.slane %v684, 1
        %v782 = vrot.slane %v685, 1
        %v783 = vsel %vm780, %v781, %v782
        %v784 = vrot.slane %v686, 1
        %v785 = vsel %vm780, %v782, %v784
        %v786 = vrot.slane %v687, 1
        %v787 = vrot.slane %v688, 1
        %v788 = vsel %vm780, %v786, %v787
        %v789 = vrot.slane %v689, 1
        %v790 = vsel %vm780, %v787, %v789
        %v791 = vrot.slane %v690, 1
        %v792 = vrot.slane %v691, 1
        %v793 = vsel %vm780, %v791, %v792
        %v794 = vrot.slane %v692, 1
        %v795 = vsel %vm780, %v792, %v794
        %v796 = vrot.slane %v693, 1
        %v797 = vrot.slane %v694, 1
        %v798 = vsel %vm780, %v796, %v797
        %v799 = vrot.slane %v695, 1
        %v800 = vsel %vm780, %v797, %v799
        %v801 = vrot.slane %v696, 1
        %v802 = vrot.slane %v697, 1
        %v803 = vsel %vm780, %v801, %v802
        %v804 = vrot.slane %v698, 1
        %v805 = vsel %vm780, %v802, %v804
        %v806 = vrot.slane %v699, 1
        %v807 = vrot.slane %v700, 1
        %v808 = vsel %vm780, %v806, %v807
        %v809 = vrot.slane %v701, 1
        %v810 = vsel %vm780, %v807, %v809
        %v811 = vrot.slane %v702, 1
        %v812 = vrot.slane %v703, 1
        %v813 = vsel %vm780, %v811, %v812
        %v814 = vrot.slane %v704, 1
        %v815 = vsel %vm780, %v812, %v814
        %v816 = vrot.slane %v705, 1
        %v817 = vrot.slane %v706, 1
        %v818 = vsel %vm780, %v816, %v817
        %v819 = vrot.slane %v707, 1
        %v820 = vsel %vm780, %v817, %v819
        %v821 = vrot.slane %v708, 1
        %v822 = vrot.slane %v709, 1
        %v823 = vsel %vm780, %v821, %v822
        %v824 = vrot.slane %v710, 1
        %v825 = vsel %vm780, %v822, %v824
        %v826 = vrot.slane %v711, 1
        %v827 = vrot.slane %v712, 1
        %v828 = vsel %vm780, %v826, %v827
        %v829 = vrot.slane %v713, 1
        %v830 = vsel %vm780, %v827, %v829
        %v831 = vrot.slane %v714, 1
        %v832 = vrot.slane %v715, 1
        %v833 = vsel %vm780, %v831, %v832
        %v834 = vrot.slane %v716, 1
        %v835 = vsel %vm780, %v832, %v834
        %v836 = vrot.slane %v717, 1
        %v837 = vrot.slane %v718, 1
        %v838 = vsel %vm780, %v836, %v837
        %v839 = vrot.slane %v719, 1
        %v840 = vsel %vm780, %v837, %v839
        %v841 = vrot.slane %v720, 1
        %v842 = vrot.slane %v721, 1
        %v843 = vsel %vm780, %v841, %v842
        %v844 = vrot.slane %v722, 1
        %v845 = vsel %vm780, %v842, %v844
        %v846 = vrot.slane %v723, 1
        %v847 = vrot.slane %v724, 1
        %v848 = vsel %vm780, %v846, %v847
        %v849 = vrot.slane %v725, 1
        %v850 = vsel %vm780, %v847, %v849
        %v851 = vrot.slane %v726, 1
        %v852 = vrot.slane %v727, 1
        %v853 = vsel %vm780, %v851, %v852
        %v854 = vrot.slane %v728, 1
        %v855 = vsel %vm780, %v852, %v854
        %v856 = vrot.slane %v729, 1
        %v857 = vrot.slane %v730, 1
        %v858 = vsel %vm780, %v856, %v857
        %v859 = vrot.slane %v731, 1
        %v860 = vsel %vm780, %v857, %v859
        %861 = vrot.lane.b32.xlu0 %v783, 32
        %v862 = vpop.permute.xlu0 %861
        %863 = vrot.lane.b32.xlu0 %v785, 32
        %v864 = vpop.permute.xlu0 %863
        %865 = vrot.lane.b32.xlu0 %v788, 32
        %v866 = vpop.permute.xlu0 %865
        %867 = vrot.lane.b32.xlu0 %v790, 32
        %v868 = vpop.permute.xlu0 %867
        %869 = vrot.lane.b32.xlu0 %v793, 32
        %v870 = vpop.permute.xlu0 %869
        %871 = vrot.lane.b32.xlu0 %v795, 32
        %v872 = vpop.permute.xlu0 %871
        %873 = vrot.lane.b32.xlu0 %v798, 32
        %v874 = vpop.permute.xlu0 %873
        %875 = vrot.lane.b32.xlu0 %v800, 32
        %v876 = vpop.permute.xlu0 %875
        %877 = vrot.lane.b32.xlu0 %v803, 32
        %v878 = vpop.permute.xlu0 %877
        %879 = vrot.lane.b32.xlu0 %v805, 32
        %v880 = vpop.permute.xlu0 %879
        %881 = vrot.lane.b32.xlu0 %v808, 32
        %v882 = vpop.permute.xlu0 %881
        %883 = vrot.lane.b32.xlu0 %v810, 32
        %v884 = vpop.permute.xlu0 %883
        %885 = vrot.lane.b32.xlu0 %v813, 32
        %v886 = vpop.permute.xlu0 %885
        %887 = vrot.lane.b32.xlu0 %v815, 32
        %v888 = vpop.permute.xlu0 %887
        %889 = vrot.lane.b32.xlu0 %v818, 32
        %v890 = vpop.permute.xlu0 %889
        %891 = vrot.lane.b32.xlu0 %v820, 32
        %v892 = vpop.permute.xlu0 %891
        %893 = vrot.lane.b32.xlu0 %v823, 32
        %v894 = vpop.permute.xlu0 %893
        %895 = vrot.lane.b32.xlu0 %v825, 32
        %v896 = vpop.permute.xlu0 %895
        %897 = vrot.lane.b32.xlu0 %v828, 32
        %v898 = vpop.permute.xlu0 %897
        %899 = vrot.lane.b32.xlu0 %v830, 32
        %v900 = vpop.permute.xlu0 %899
        %901 = vrot.lane.b32.xlu0 %v833, 32
        %v902 = vpop.permute.xlu0 %901
        %903 = vrot.lane.b32.xlu0 %v835, 32
        %v904 = vpop.permute.xlu0 %903
        %905 = vrot.lane.b32.xlu0 %v838, 32
        %v906 = vpop.permute.xlu0 %905
        %907 = vrot.lane.b32.xlu0 %v840, 32
        %v908 = vpop.permute.xlu0 %907
        %909 = vrot.lane.b32.xlu0 %v843, 32
        %v910 = vpop.permute.xlu0 %909
        %911 = vrot.lane.b32.xlu0 %v845, 32
        %v912 = vpop.permute.xlu0 %911
        %913 = vrot.lane.b32.xlu0 %v848, 32
        %v914 = vpop.permute.xlu0 %913
        %915 = vrot.lane.b32.xlu0 %v850, 32
        %v916 = vpop.permute.xlu0 %915
        %917 = vrot.lane.b32.xlu0 %v853, 32
        %v918 = vpop.permute.xlu0 %917
        %919 = vrot.lane.b32.xlu0 %v855, 32
        %v920 = vpop.permute.xlu0 %919
        %921 = vrot.lane.b32.xlu0 %v858, 32
        %v922 = vpop.permute.xlu0 %921
        %923 = vrot.lane.b32.xlu0 %v860, 32
        %v924 = vpop.permute.xlu0 %923
        %vm957 = vcmask 1045504
        %v958 = vrot.slane %v684, 2
        %v959 = vrot.slane %v685, 2
        %v960 = vsel %vm957, %v958, %v959
        %v961 = vrot.slane %v686, 2
        %v962 = vsel %vm957, %v959, %v961
        %v963 = vrot.slane %v687, 2
        %v964 = vrot.slane %v688, 2
        %v965 = vsel %vm957, %v963, %v964
        %v966 = vrot.slane %v689, 2
        %v967 = vsel %vm957, %v964, %v966
        %v968 = vrot.slane %v690, 2
        %v969 = vrot.slane %v691, 2
        %v970 = vsel %vm957, %v968, %v969
        %v971 = vrot.slane %v692, 2
        %v972 = vsel %vm957, %v969, %v971
        %v973 = vrot.slane %v693, 2
        %v974 = vrot.slane %v694, 2
        %v975 = vsel %vm957, %v973, %v974
        %v976 = vrot.slane %v695, 2
        %v977 = vsel %vm957, %v974, %v976
        %v978 = vrot.slane %v696, 2
        %v979 = vrot.slane %v697, 2
        %v980 = vsel %vm957, %v978, %v979
        %v981 = vrot.slane %v698, 2
        %v982 = vsel %vm957, %v979, %v981
        %v983 = vrot.slane %v699, 2
        %v984 = vrot.slane %v700, 2
        %v985 = vsel %vm957, %v983, %v984
        %v986 = vrot.slane %v701, 2
        %v987 = vsel %vm957, %v984, %v986
        %v988 = vrot.slane %v702, 2
        %v989 = vrot.slane %v703, 2
        %v990 = vsel %vm957, %v988, %v989
        %v991 = vrot.slane %v704, 2
        %v992 = vsel %vm957, %v989, %v991
        %v993 = vrot.slane %v705, 2
        %v994 = vrot.slane %v706, 2
        %v995 = vsel %vm957, %v993, %v994
        %v996 = vrot.slane %v707, 2
        %v997 = vsel %vm957, %v994, %v996
        %v998 = vrot.slane %v708, 2
        %v999 = vrot.slane %v709, 2
        %v1000 = vsel %vm957, %v998, %v999
        %v1001 = vrot.slane %v710, 2
        %v1002 = vsel %vm957, %v999, %v1001
        %v1003 = vrot.slane %v711, 2
        %v1004 = vrot.slane %v712, 2
        %v1005 = vsel %vm957, %v1003, %v1004
        %v1006 = vrot.slane %v713, 2
        %v1007 = vsel %vm957, %v1004, %v1006
        %v1008 = vrot.slane %v714, 2
        %v1009 = vrot.slane %v715, 2
        %v1010 = vsel %vm957, %v1008, %v1009
        %v1011 = vrot.slane %v716, 2
        %v1012 = vsel %vm957, %v1009, %v1011
        %v1013 = vrot.slane %v717, 2
        %v1014 = vrot.slane %v718, 2
        %v1015 = vsel %vm957, %v1013, %v1014
        %v1016 = vrot.slane %v719, 2
        %v1017 = vsel %vm957, %v1014, %v1016
        %v1018 = vrot.slane %v720, 2
        %v1019 = vrot.slane %v721, 2
        %v1020 = vsel %vm957, %v1018, %v1019
        %v1021 = vrot.slane %v722, 2
        %v1022 = vsel %vm957, %v1019, %v1021
        %v1023 = vrot.slane %v723, 2
        %v1024 = vrot.slane %v724, 2
        %v1025 = vsel %vm957, %v1023, %v1024
        %v1026 = vrot.slane %v725, 2
        %v1027 = vsel %vm957, %v1024, %v1026
        %v1028 = vrot.slane %v726, 2
        %v1029 = vrot.slane %v727, 2
        %v1030 = vsel %vm957, %v1028, %v1029
        %v1031 = vrot.slane %v728, 2
        %v1032 = vsel %vm957, %v1029, %v1031
        %v1033 = vrot.slane %v729, 2
        %v1034 = vrot.slane %v730, 2
        %v1035 = vsel %vm957, %v1033, %v1034
        %v1036 = vrot.slane %v731, 2
        %v1037 = vsel %vm957, %v1034, %v1036
        %1038 = vrot.lane.b32.xlu0 %v960, 64
        %v1039 = vpop.permute.xlu0 %1038
        %1040 = vrot.lane.b32.xlu0 %v962, 64
        %v1041 = vpop.permute.xlu0 %1040
        %1042 = vrot.lane.b32.xlu0 %v965, 64
        %v1043 = vpop.permute.xlu0 %1042
        %1044 = vrot.lane.b32.xlu0 %v967, 64
        %v1045 = vpop.permute.xlu0 %1044
        %1046 = vrot.lane.b32.xlu0 %v970, 64
        %v1047 = vpop.permute.xlu0 %1046
        %1048 = vrot.lane.b32.xlu0 %v972, 64
        %v1049 = vpop.permute.xlu0 %1048
        %1050 = vrot.lane.b32.xlu0 %v975, 64
        %v1051 = vpop.permute.xlu0 %1050
        %1052 = vrot.lane.b32.xlu0 %v977, 64
        %v1053 = vpop.permute.xlu0 %1052
        %1054 = vrot.lane.b32.xlu0 %v980, 64
        %v1055 = vpop.permute.xlu0 %1054
        %1056 = vrot.lane.b32.xlu0 %v982, 64
        %v1057 = vpop.permute.xlu0 %1056
        %1058 = vrot.lane.b32.xlu0 %v985, 64
        %v1059 = vpop.permute.xlu0 %1058
        %1060 = vrot.lane.b32.xlu0 %v987, 64
        %v1061 = vpop.permute.xlu0 %1060
        %1062 = vrot.lane.b32.xlu0 %v990, 64
        %v1063 = vpop.permute.xlu0 %1062
        %1064 = vrot.lane.b32.xlu0 %v992, 64
        %v1065 = vpop.permute.xlu0 %1064
        %1066 = vrot.lane.b32.xlu0 %v995, 64
        %v1067 = vpop.permute.xlu0 %1066
        %1068 = vrot.lane.b32.xlu0 %v997, 64
        %v1069 = vpop.permute.xlu0 %1068
        %1070 = vrot.lane.b32.xlu0 %v1000, 64
        %v1071 = vpop.permute.xlu0 %1070
        %1072 = vrot.lane.b32.xlu0 %v1002, 64
        %v1073 = vpop.permute.xlu0 %1072
        %1074 = vrot.lane.b32.xlu0 %v1005, 64
        %v1075 = vpop.permute.xlu0 %1074
        %1076 = vrot.lane.b32.xlu0 %v1007, 64
        %v1077 = vpop.permute.xlu0 %1076
        %1078 = vrot.lane.b32.xlu0 %v1010, 64
        %v1079 = vpop.permute.xlu0 %1078
        %1080 = vrot.lane.b32.xlu0 %v1012, 64
        %v1081 = vpop.permute.xlu0 %1080
        %1082 = vrot.lane.b32.xlu0 %v1015, 64
        %v1083 = vpop.permute.xlu0 %1082
        %1084 = vrot.lane.b32.xlu0 %v1017, 64
        %v1085 = vpop.permute.xlu0 %1084
        %1086 = vrot.lane.b32.xlu0 %v1020, 64
        %v1087 = vpop.permute.xlu0 %1086
        %1088 = vrot.lane.b32.xlu0 %v1022, 64
        %v1089 = vpop.permute.xlu0 %1088
        %1090 = vrot.lane.b32.xlu0 %v1025, 64
        %v1091 = vpop.permute.xlu0 %1090
        %1092 = vrot.lane.b32.xlu0 %v1027, 64
        %v1093 = vpop.permute.xlu0 %1092
        %1094 = vrot.lane.b32.xlu0 %v1030, 64
        %v1095 = vpop.permute.xlu0 %1094
        %1096 = vrot.lane.b32.xlu0 %v1032, 64
        %v1097 = vpop.permute.xlu0 %1096
        %1098 = vrot.lane.b32.xlu0 %v1035, 64
        %v1099 = vpop.permute.xlu0 %1098
        %1100 = vrot.lane.b32.xlu0 %v1037, 64
        %v1101 = vpop.permute.xlu0 %1100
        %v1134 = vsel %vm611, %v684, %v862
        %v1135 = vsel %vm611, %v685, %v864
        %v1136 = vsel %vm611, %v687, %v866
        %v1137 = vsel %vm611, %v688, %v868
        %v1138 = vsel %vm611, %v690, %v870
        %v1139 = vsel %vm611, %v691, %v872
        %v1140 = vsel %vm611, %v693, %v874
        %v1141 = vsel %vm611, %v694, %v876
        %v1142 = vsel %vm611, %v696, %v878
        %v1143 = vsel %vm611, %v697, %v880
        %v1144 = vsel %vm611, %v699, %v882
        %v1145 = vsel %vm611, %v700, %v884
        %v1146 = vsel %vm611, %v702, %v886
        %v1147 = vsel %vm611, %v703, %v888
        %v1148 = vsel %vm611, %v705, %v890
        %v1149 = vsel %vm611, %v706, %v892
        %v1150 = vsel %vm611, %v708, %v894
        %v1151 = vsel %vm611, %v709, %v896
        %v1152 = vsel %vm611, %v711, %v898
        %v1153 = vsel %vm611, %v712, %v900
        %v1154 = vsel %vm611, %v714, %v902
        %v1155 = vsel %vm611, %v715, %v904
        %v1156 = vsel %vm611, %v717, %v906
        %v1157 = vsel %vm611, %v718, %v908
        %v1158 = vsel %vm611, %v720, %v910
        %v1159 = vsel %vm611, %v721, %v912
        %v1160 = vsel %vm611, %v723, %v914
        %v1161 = vsel %vm611, %v724, %v916
        %v1162 = vsel %vm611, %v726, %v918
        %v1163 = vsel %vm611, %v727, %v920
        %v1164 = vsel %vm611, %v729, %v922
        %v1165 = vsel %vm611, %v730, %v924
        %vm1166 = vcmask 523264
        %v1167 = vsel %vm1166, %v1134, %v1039
        %v1168 = vsel %vm1166, %v1135, %v1041
        %v1169 = vsel %vm1166, %v1136, %v1043
        %v1170 = vsel %vm1166, %v1137, %v1045
        %v1171 = vsel %vm1166, %v1138, %v1047
        %v1172 = vsel %vm1166, %v1139, %v1049
        %v1173 = vsel %vm1166, %v1140, %v1051
        %v1174 = vsel %vm1166, %v1141, %v1053
        %v1175 = vsel %vm1166, %v1142, %v1055
        %v1176 = vsel %vm1166, %v1143, %v1057
        %v1177 = vsel %vm1166, %v1144, %v1059
        %v1178 = vsel %vm1166, %v1145, %v1061
        %v1179 = vsel %vm1166, %v1146, %v1063
        %v1180 = vsel %vm1166, %v1147, %v1065
        %v1181 = vsel %vm1166, %v1148, %v1067
        %v1182 = vsel %vm1166, %v1149, %v1069
        %v1183 = vsel %vm1166, %v1150, %v1071
        %v1184 = vsel %vm1166, %v1151, %v1073
        %v1185 = vsel %vm1166, %v1152, %v1075
        %v1186 = vsel %vm1166, %v1153, %v1077
        %v1187 = vsel %vm1166, %v1154, %v1079
        %v1188 = vsel %vm1166, %v1155, %v1081
        %v1189 = vsel %vm1166, %v1156, %v1083
        %v1190 = vsel %vm1166, %v1157, %v1085
        %v1191 = vsel %vm1166, %v1158, %v1087
        %v1192 = vsel %vm1166, %v1159, %v1089
        %v1193 = vsel %vm1166, %v1160, %v1091
        %v1194 = vsel %vm1166, %v1161, %v1093
        %v1195 = vsel %vm1166, %v1162, %v1095
        %v1196 = vsel %vm1166, %v1163, %v1097
        %v1197 = vsel %vm1166, %v1164, %v1099
        %v1198 = vsel %vm1166, %v1165, %v1101
        %v1199 = vpack.c.bf16 %v1168, %v1167
        %v1200 = vpack.c.bf16 %v1170, %v1169
        %v1201 = vpack.c.bf16 %v1172, %v1171
        %v1202 = vpack.c.bf16 %v1174, %v1173
        %v1203 = vpack.c.bf16 %v1176, %v1175
        %v1204 = vpack.c.bf16 %v1178, %v1177
        %v1205 = vpack.c.bf16 %v1180, %v1179
        %v1206 = vpack.c.bf16 %v1182, %v1181
        %v1207 = vpack.c.bf16 %v1184, %v1183
        %v1208 = vpack.c.bf16 %v1186, %v1185
        %v1209 = vpack.c.bf16 %v1188, %v1187
        %v1210 = vpack.c.bf16 %v1190, %v1189
        %v1211 = vpack.c.bf16 %v1192, %v1191
        %v1212 = vpack.c.bf16 %v1194, %v1193
        %v1213 = vpack.c.bf16 %v1196, %v1195
        %v1214 = vpack.c.bf16 %v1198, %v1197
        %v1215 = vld [vmem:[%s3] sm:$0xf]
        %v1216 = vld [vmem:[%s3 + $0x4] sm:$0xf]
        %v1217 = vld [vmem:[%s3 + $0x8] sm:$0xf]
        %v1218 = vld [vmem:[%s3 + $0xc] sm:$0xf]
        %v1219 = vld [vmem:[%s3 + $0x10] sm:$0xf]
        %v1220 = vld [vmem:[%s3 + $0x14] sm:$0xf]
        %v1221 = vld [vmem:[%s3 + $0x18] sm:$0xf]
        %v1222 = vld [vmem:[%s3 + $0x1c] sm:$0xf]
        %v1223 = vld [vmem:[%s3 + $0x20] sm:$0xf]
        %v1224 = vld [vmem:[%s3 + $0x24] sm:$0xf]
        %v1225 = vld [vmem:[%s3 + $0x28] sm:$0xf]
        %v1226 = vld [vmem:[%s3 + $0x2c] sm:$0xf]
        %v1227 = vld [vmem:[%s610] sm:$0xff]
        %v1228 = vld [vmem:[%s610 + $0x8] sm:$0xff]
        %v1229 = vld [vmem:[%s610 + $0x10] sm:$0xff]
        %v1230 = vld [vmem:[%s610 + $0x18] sm:$0xff]
        %v1231 = vld [vmem:[%s610 + $0x20] sm:$0xff]
        %v1232 = vld [vmem:[%s610 + $0x28] sm:$0xff]
        %v1233 = vld [vmem:[%s610 + $0x30] sm:$0xff]
        %v1234 = vld [vmem:[%s610 + $0x38] sm:$0xff]
        %v1235 = vld [vmem:[%s610 + $0x40] sm:$0xff]
        %v1236 = vld [vmem:[%s610 + $0x48] sm:$0xff]
        %v1237 = vld [vmem:[%s610 + $0x50] sm:$0xff]
        %v1238 = vld [vmem:[%s610 + $0x58] sm:$0xff]
        %v1239 = vld [vmem:[%s610 + $0x60] sm:$0xff]
        %v1240 = vld [vmem:[%s610 + $0x68] sm:$0xff]
        %v1241 = vld [vmem:[%s610 + $0x70] sm:$0xff]
        %v1242 = vld [vmem:[%s610 + $0x78] sm:$0xff]
        %v1243 = vld [vmem:[%s610 + $0x80] sm:$0xff]
        %v1244 = vld [vmem:[%s610 + $0x88] sm:$0xff]
        %v1245 = vld [vmem:[%s610 + $0x90] sm:$0xff]
        %v1246 = vld [vmem:[%s610 + $0x98] sm:$0xff]
        %v1247 = vld [vmem:[%s610 + $0xa0] sm:$0xff]
        %v1248 = vld [vmem:[%s610 + $0xa8] sm:$0xff]
        %v1249 = vld [vmem:[%s610 + $0xb0] sm:$0xff]
        %v1250 = vld [vmem:[%s610 + $0xb8] sm:$0xff]
        %v1251 = vld [vmem:[%s610 + $0xc0] sm:$0xff]
        %v1252 = vld [vmem:[%s610 + $0xc8] sm:$0xff]
        %v1253 = vld [vmem:[%s610 + $0xd0] sm:$0xff]
        %v1254 = vld [vmem:[%s610 + $0xd8] sm:$0xff]
        %v1255 = vld [vmem:[%s610 + $0xe0] sm:$0xff]
        %v1256 = vld [vmem:[%s610 + $0xe8] sm:$0xff]
        %v1257 = vld [vmem:[%s610 + $0xf0] sm:$0xff]
        %v1258 = vld [vmem:[%s610 + $0xf8] sm:$0xff]
        %v1259 = vld [vmem:[%s610 + $0x100] sm:$0xff]
        %v1260 = vld [vmem:[%s610 + $0x108] sm:$0xff]
        %v1261 = vld [vmem:[%s610 + $0x110] sm:$0xff]
        %v1262 = vld [vmem:[%s610 + $0x118] sm:$0xff]
        %v1263 = vld [vmem:[%s610 + $0x120] sm:$0xff]
        %v1264 = vld [vmem:[%s610 + $0x128] sm:$0xff]
        %v1265 = vld [vmem:[%s610 + $0x130] sm:$0xff]
        %v1266 = vld [vmem:[%s610 + $0x138] sm:$0xff]
        %v1267 = vld [vmem:[%s610 + $0x140] sm:$0xff]
        %v1268 = vld [vmem:[%s610 + $0x148] sm:$0xff]
        %v1269 = vld [vmem:[%s610 + $0x150] sm:$0xff]
        %v1270 = vld [vmem:[%s610 + $0x158] sm:$0xff]
        %v1271 = vld [vmem:[%s610 + $0x160] sm:$0xff]
        %v1272 = vld [vmem:[%s610 + $0x168] sm:$0xff]
        %v1273 = vld [vmem:[%s610 + $0x170] sm:$0xff]
        %v1274 = vld [vmem:[%s610 + $0x178] sm:$0xff]
        %v1323 = vrot.slane %v1227, 1
        %v1324 = vrot.slane %v1228, 1
        %v1325 = vsel %vm780, %v1323, %v1324
        %v1326 = vrot.slane %v1229, 1
        %v1327 = vsel %vm780, %v1324, %v1326
        %v1328 = vrot.slane %v1230, 1
        %v1329 = vrot.slane %v1231, 1
        %v1330 = vsel %vm780, %v1328, %v1329
        %v1331 = vrot.slane %v1232, 1
        %v1332 = vsel %vm780, %v1329, %v1331
        %v1333 = vrot.slane %v1233, 1
        %v1334 = vrot.slane %v1234, 1
        %v1335 = vsel %vm780, %v1333, %v1334
        %v1336 = vrot.slane %v1235, 1
        %v1337 = vsel %vm780, %v1334, %v1336
        %v1338 = vrot.slane %v1236, 1
        %v1339 = vrot.slane %v1237, 1
        %v1340 = vsel %vm780, %v1338, %v1339
        %v1341 = vrot.slane %v1238, 1
        %v1342 = vsel %vm780, %v1339, %v1341
        %v1343 = vrot.slane %v1239, 1
        %v1344 = vrot.slane %v1240, 1
        %v1345 = vsel %vm780, %v1343, %v1344
        %v1346 = vrot.slane %v1241, 1
        %v1347 = vsel %vm780, %v1344, %v1346
        %v1348 = vrot.slane %v1242, 1
        %v1349 = vrot.slane %v1243, 1
        %v1350 = vsel %vm780, %v1348, %v1349
        %v1351 = vrot.slane %v1244, 1
        %v1352 = vsel %vm780, %v1349, %v1351
        %v1353 = vrot.slane %v1245, 1
        %v1354 = vrot.slane %v1246, 1
        %v1355 = vsel %vm780, %v1353, %v1354
        %v1356 = vrot.slane %v1247, 1
        %v1357 = vsel %vm780, %v1354, %v1356
        %v1358 = vrot.slane %v1248, 1
        %v1359 = vrot.slane %v1249, 1
        %v1360 = vsel %vm780, %v1358, %v1359
        %v1361 = vrot.slane %v1250, 1
        %v1362 = vsel %vm780, %v1359, %v1361
        %v1363 = vrot.slane %v1251, 1
        %v1364 = vrot.slane %v1252, 1
        %v1365 = vsel %vm780, %v1363, %v1364
        %v1366 = vrot.slane %v1253, 1
        %v1367 = vsel %vm780, %v1364, %v1366
        %v1368 = vrot.slane %v1254, 1
        %v1369 = vrot.slane %v1255, 1
        %v1370 = vsel %vm780, %v1368, %v1369
        %v1371 = vrot.slane %v1256, 1
        %v1372 = vsel %vm780, %v1369, %v1371
        %v1373 = vrot.slane %v1257, 1
        %v1374 = vrot.slane %v1258, 1
        %v1375 = vsel %vm780, %v1373, %v1374
        %v1376 = vrot.slane %v1259, 1
        %v1377 = vsel %vm780, %v1374, %v1376
        %v1378 = vrot.slane %v1260, 1
        %v1379 = vrot.slane %v1261, 1
        %v1380 = vsel %vm780, %v1378, %v1379
        %v1381 = vrot.slane %v1262, 1
        %v1382 = vsel %vm780, %v1379, %v1381
        %v1383 = vrot.slane %v1263, 1
        %v1384 = vrot.slane %v1264, 1
        %v1385 = vsel %vm780, %v1383, %v1384
        %v1386 = vrot.slane %v1265, 1
        %v1387 = vsel %vm780, %v1384, %v1386
        %v1388 = vrot.slane %v1266, 1
        %v1389 = vrot.slane %v1267, 1
        %v1390 = vsel %vm780, %v1388, %v1389
        %v1391 = vrot.slane %v1268, 1
        %v1392 = vsel %vm780, %v1389, %v1391
        %v1393 = vrot.slane %v1269, 1
        %v1394 = vrot.slane %v1270, 1
        %v1395 = vsel %vm780, %v1393, %v1394
        %v1396 = vrot.slane %v1271, 1
        %v1397 = vsel %vm780, %v1394, %v1396
        %v1398 = vrot.slane %v1272, 1
        %v1399 = vrot.slane %v1273, 1
        %v1400 = vsel %vm780, %v1398, %v1399
        %v1401 = vrot.slane %v1274, 1
        %v1402 = vsel %vm780, %v1399, %v1401
        %1403 = vrot.lane.b32.xlu0 %v1325, 32
        %v1404 = vpop.permute.xlu0 %1403
        %1405 = vrot.lane.b32.xlu0 %v1327, 32
        %v1406 = vpop.permute.xlu0 %1405
        %1407 = vrot.lane.b32.xlu0 %v1330, 32
        %v1408 = vpop.permute.xlu0 %1407
        %1409 = vrot.lane.b32.xlu0 %v1332, 32
        %v1410 = vpop.permute.xlu0 %1409
        %1411 = vrot.lane.b32.xlu0 %v1335, 32
        %v1412 = vpop.permute.xlu0 %1411
        %1413 = vrot.lane.b32.xlu0 %v1337, 32
        %v1414 = vpop.permute.xlu0 %1413
        %1415 = vrot.lane.b32.xlu0 %v1340, 32
        %v1416 = vpop.permute.xlu0 %1415
        %1417 = vrot.lane.b32.xlu0 %v1342, 32
        %v1418 = vpop.permute.xlu0 %1417
        %1419 = vrot.lane.b32.xlu0 %v1345, 32
        %v1420 = vpop.permute.xlu0 %1419
        %1421 = vrot.lane.b32.xlu0 %v1347, 32
        %v1422 = vpop.permute.xlu0 %1421
        %1423 = vrot.lane.b32.xlu0 %v1350, 32
        %v1424 = vpop.permute.xlu0 %1423
        %1425 = vrot.lane.b32.xlu0 %v1352, 32
        %v1426 = vpop.permute.xlu0 %1425
        %1427 = vrot.lane.b32.xlu0 %v1355, 32
        %v1428 = vpop.permute.xlu0 %1427
        %1429 = vrot.lane.b32.xlu0 %v1357, 32
        %v1430 = vpop.permute.xlu0 %1429
        %1431 = vrot.lane.b32.xlu0 %v1360, 32
        %v1432 = vpop.permute.xlu0 %1431
        %1433 = vrot.lane.b32.xlu0 %v1362, 32
        %v1434 = vpop.permute.xlu0 %1433
        %1435 = vrot.lane.b32.xlu0 %v1365, 32
        %v1436 = vpop.permute.xlu0 %1435
        %1437 = vrot.lane.b32.xlu0 %v1367, 32
        %v1438 = vpop.permute.xlu0 %1437
        %1439 = vrot.lane.b32.xlu0 %v1370, 32
        %v1440 = vpop.permute.xlu0 %1439
        %1441 = vrot.lane.b32.xlu0 %v1372, 32
        %v1442 = vpop.permute.xlu0 %1441
        %1443 = vrot.lane.b32.xlu0 %v1375, 32
        %v1444 = vpop.permute.xlu0 %1443
        %1445 = vrot.lane.b32.xlu0 %v1377, 32
        %v1446 = vpop.permute.xlu0 %1445
        %1447 = vrot.lane.b32.xlu0 %v1380, 32
        %v1448 = vpop.permute.xlu0 %1447
        %1449 = vrot.lane.b32.xlu0 %v1382, 32
        %v1450 = vpop.permute.xlu0 %1449
        %1451 = vrot.lane.b32.xlu0 %v1385, 32
        %v1452 = vpop.permute.xlu0 %1451
        %1453 = vrot.lane.b32.xlu0 %v1387, 32
        %v1454 = vpop.permute.xlu0 %1453
        %1455 = vrot.lane.b32.xlu0 %v1390, 32
        %v1456 = vpop.permute.xlu0 %1455
        %1457 = vrot.lane.b32.xlu0 %v1392, 32
        %v1458 = vpop.permute.xlu0 %1457
        %1459 = vrot.lane.b32.xlu0 %v1395, 32
        %v1460 = vpop.permute.xlu0 %1459
        %1461 = vrot.lane.b32.xlu0 %v1397, 32
        %v1462 = vpop.permute.xlu0 %1461
        %1463 = vrot.lane.b32.xlu0 %v1400, 32
        %v1464 = vpop.permute.xlu0 %1463
        %1465 = vrot.lane.b32.xlu0 %v1402, 32
        %v1466 = vpop.permute.xlu0 %1465
        %v1499 = vrot.slane %v1227, 2
        %v1500 = vrot.slane %v1228, 2
        %v1501 = vsel %vm957, %v1499, %v1500
        %v1502 = vrot.slane %v1229, 2
        %v1503 = vsel %vm957, %v1500, %v1502
        %v1504 = vrot.slane %v1230, 2
        %v1505 = vrot.slane %v1231, 2
        %v1506 = vsel %vm957, %v1504, %v1505
        %v1507 = vrot.slane %v1232, 2
        %v1508 = vsel %vm957, %v1505, %v1507
        %v1509 = vrot.slane %v1233, 2
        %v1510 = vrot.slane %v1234, 2
        %v1511 = vsel %vm957, %v1509, %v1510
        %v1512 = vrot.slane %v1235, 2
        %v1513 = vsel %vm957, %v1510, %v1512
        %v1514 = vrot.slane %v1236, 2
        %v1515 = vrot.slane %v1237, 2
        %v1516 = vsel %vm957, %v1514, %v1515
        %v1517 = vrot.slane %v1238, 2
        %v1518 = vsel %vm957, %v1515, %v1517
        %v1519 = vrot.slane %v1239, 2
        %v1520 = vrot.slane %v1240, 2
        %v1521 = vsel %vm957, %v1519, %v1520
        %v1522 = vrot.slane %v1241, 2
        %v1523 = vsel %vm957, %v1520, %v1522
        %v1524 = vrot.slane %v1242, 2
        %v1525 = vrot.slane %v1243, 2
        %v1526 = vsel %vm957, %v1524, %v1525
        %v1527 = vrot.slane %v1244, 2
        %v1528 = vsel %vm957, %v1525, %v1527
        %v1529 = vrot.slane %v1245, 2
        %v1530 = vrot.slane %v1246, 2
        %v1531 = vsel %vm957, %v1529, %v1530
        %v1532 = vrot.slane %v1247, 2
        %v1533 = vsel %vm957, %v1530, %v1532
        %v1534 = vrot.slane %v1248, 2
        %v1535 = vrot.slane %v1249, 2
        %v1536 = vsel %vm957, %v1534, %v1535
        %v1537 = vrot.slane %v1250, 2
        %v1538 = vsel %vm957, %v1535, %v1537
        %v1539 = vrot.slane %v1251, 2
        %v1540 = vrot.slane %v1252, 2
        %v1541 = vsel %vm957, %v1539, %v1540
        %v1542 = vrot.slane %v1253, 2
        %v1543 = vsel %vm957, %v1540, %v1542
        %v1544 = vrot.slane %v1254, 2
        %v1545 = vrot.slane %v1255, 2
        %v1546 = vsel %vm957, %v1544, %v1545
        %v1547 = vrot.slane %v1256, 2
        %v1548 = vsel %vm957, %v1545, %v1547
        %v1549 = vrot.slane %v1257, 2
        %v1550 = vrot.slane %v1258, 2
        %v1551 = vsel %vm957, %v1549, %v1550
        %v1552 = vrot.slane %v1259, 2
        %v1553 = vsel %vm957, %v1550, %v1552
        %v1554 = vrot.slane %v1260, 2
        %v1555 = vrot.slane %v1261, 2
        %v1556 = vsel %vm957, %v1554, %v1555
        %v1557 = vrot.slane %v1262, 2
        %v1558 = vsel %vm957, %v1555, %v1557
        %v1559 = vrot.slane %v1263, 2
        %v1560 = vrot.slane %v1264, 2
        %v1561 = vsel %vm957, %v1559, %v1560
        %v1562 = vrot.slane %v1265, 2
        %v1563 = vsel %vm957, %v1560, %v1562
        %v1564 = vrot.slane %v1266, 2
        %v1565 = vrot.slane %v1267, 2
        %v1566 = vsel %vm957, %v1564, %v1565
        %v1567 = vrot.slane %v1268, 2
        %v1568 = vsel %vm957, %v1565, %v1567
        %v1569 = vrot.slane %v1269, 2
        %v1570 = vrot.slane %v1270, 2
        %v1571 = vsel %vm957, %v1569, %v1570
        %v1572 = vrot.slane %v1271, 2
        %v1573 = vsel %vm957, %v1570, %v1572
        %v1574 = vrot.slane %v1272, 2
        %v1575 = vrot.slane %v1273, 2
        %v1576 = vsel %vm957, %v1574, %v1575
        %v1577 = vrot.slane %v1274, 2
        %v1578 = vsel %vm957, %v1575, %v1577
        %1579 = vrot.lane.b32.xlu0 %v1501, 64
        %v1580 = vpop.permute.xlu0 %1579
        %1581 = vrot.lane.b32.xlu0 %v1503, 64
        %v1582 = vpop.permute.xlu0 %1581
        %1583 = vrot.lane.b32.xlu0 %v1506, 64
        %v1584 = vpop.permute.xlu0 %1583
        %1585 = vrot.lane.b32.xlu0 %v1508, 64
        %v1586 = vpop.permute.xlu0 %1585
        %1587 = vrot.lane.b32.xlu0 %v1511, 64
        %v1588 = vpop.permute.xlu0 %1587
        %1589 = vrot.lane.b32.xlu0 %v1513, 64
        %v1590 = vpop.permute.xlu0 %1589
        %1591 = vrot.lane.b32.xlu0 %v1516, 64
        %v1592 = vpop.permute.xlu0 %1591
        %1593 = vrot.lane.b32.xlu0 %v1518, 64
        %v1594 = vpop.permute.xlu0 %1593
        %1595 = vrot.lane.b32.xlu0 %v1521, 64
        %v1596 = vpop.permute.xlu0 %1595
        %1597 = vrot.lane.b32.xlu0 %v1523, 64
        %v1598 = vpop.permute.xlu0 %1597
        %1599 = vrot.lane.b32.xlu0 %v1526, 64
        %v1600 = vpop.permute.xlu0 %1599
        %1601 = vrot.lane.b32.xlu0 %v1528, 64
        %v1602 = vpop.permute.xlu0 %1601
        %1603 = vrot.lane.b32.xlu0 %v1531, 64
        %v1604 = vpop.permute.xlu0 %1603
        %1605 = vrot.lane.b32.xlu0 %v1533, 64
        %v1606 = vpop.permute.xlu0 %1605
        %1607 = vrot.lane.b32.xlu0 %v1536, 64
        %v1608 = vpop.permute.xlu0 %1607
        %1609 = vrot.lane.b32.xlu0 %v1538, 64
        %v1610 = vpop.permute.xlu0 %1609
        %1611 = vrot.lane.b32.xlu0 %v1541, 64
        %v1612 = vpop.permute.xlu0 %1611
        %1613 = vrot.lane.b32.xlu0 %v1543, 64
        %v1614 = vpop.permute.xlu0 %1613
        %1615 = vrot.lane.b32.xlu0 %v1546, 64
        %v1616 = vpop.permute.xlu0 %1615
        %1617 = vrot.lane.b32.xlu0 %v1548, 64
        %v1618 = vpop.permute.xlu0 %1617
        %1619 = vrot.lane.b32.xlu0 %v1551, 64
        %v1620 = vpop.permute.xlu0 %1619
        %1621 = vrot.lane.b32.xlu0 %v1553, 64
        %v1622 = vpop.permute.xlu0 %1621
        %1623 = vrot.lane.b32.xlu0 %v1556, 64
        %v1624 = vpop.permute.xlu0 %1623
        %1625 = vrot.lane.b32.xlu0 %v1558, 64
        %v1626 = vpop.permute.xlu0 %1625
        %1627 = vrot.lane.b32.xlu0 %v1561, 64
        %v1628 = vpop.permute.xlu0 %1627
        %1629 = vrot.lane.b32.xlu0 %v1563, 64
        %v1630 = vpop.permute.xlu0 %1629
        %1631 = vrot.lane.b32.xlu0 %v1566, 64
        %v1632 = vpop.permute.xlu0 %1631
        %1633 = vrot.lane.b32.xlu0 %v1568, 64
        %v1634 = vpop.permute.xlu0 %1633
        %1635 = vrot.lane.b32.xlu0 %v1571, 64
        %v1636 = vpop.permute.xlu0 %1635
        %1637 = vrot.lane.b32.xlu0 %v1573, 64
        %v1638 = vpop.permute.xlu0 %1637
        %1639 = vrot.lane.b32.xlu0 %v1576, 64
        %v1640 = vpop.permute.xlu0 %1639
        %1641 = vrot.lane.b32.xlu0 %v1578, 64
        %v1642 = vpop.permute.xlu0 %1641
        %v1675 = vsel %vm611, %v1227, %v1404
        %v1676 = vsel %vm611, %v1228, %v1406
        %v1677 = vsel %vm611, %v1230, %v1408
        %v1678 = vsel %vm611, %v1231, %v1410
        %v1679 = vsel %vm611, %v1233, %v1412
        %v1680 = vsel %vm611, %v1234, %v1414
        %v1681 = vsel %vm611, %v1236, %v1416
        %v1682 = vsel %vm611, %v1237, %v1418
        %v1683 = vsel %vm611, %v1239, %v1420
        %v1684 = vsel %vm611, %v1240, %v1422
        %v1685 = vsel %vm611, %v1242, %v1424
        %v1686 = vsel %vm611, %v1243, %v1426
        %v1687 = vsel %vm611, %v1245, %v1428
        %v1688 = vsel %vm611, %v1246, %v1430
        %v1689 = vsel %vm611, %v1248, %v1432
        %v1690 = vsel %vm611, %v1249, %v1434
        %v1691 = vsel %vm611, %v1251, %v1436
        %v1692 = vsel %vm611, %v1252, %v1438
        %v1693 = vsel %vm611, %v1254, %v1440
        %v1694 = vsel %vm611, %v1255, %v1442
        %v1695 = vsel %vm611, %v1257, %v1444
        %v1696 = vsel %vm611, %v1258, %v1446
        %v1697 = vsel %vm611, %v1260, %v1448
        %v1698 = vsel %vm611, %v1261, %v1450
        %v1699 = vsel %vm611, %v1263, %v1452
        %v1700 = vsel %vm611, %v1264, %v1454
        %v1701 = vsel %vm611, %v1266, %v1456
        %v1702 = vsel %vm611, %v1267, %v1458
        %v1703 = vsel %vm611, %v1269, %v1460
        %v1704 = vsel %vm611, %v1270, %v1462
        %v1705 = vsel %vm611, %v1272, %v1464
        %v1706 = vsel %vm611, %v1273, %v1466
        %v1707 = vsel %vm1166, %v1675, %v1580
        %v1708 = vsel %vm1166, %v1676, %v1582
        %v1709 = vsel %vm1166, %v1677, %v1584
        %v1710 = vsel %vm1166, %v1678, %v1586
        %v1711 = vsel %vm1166, %v1679, %v1588
        %v1712 = vsel %vm1166, %v1680, %v1590
        %v1713 = vsel %vm1166, %v1681, %v1592
        %v1714 = vsel %vm1166, %v1682, %v1594
        %v1715 = vsel %vm1166, %v1683, %v1596
        %v1716 = vsel %vm1166, %v1684, %v1598
        %v1717 = vsel %vm1166, %v1685, %v1600
        %v1718 = vsel %vm1166, %v1686, %v1602
        %v1719 = vsel %vm1166, %v1687, %v1604
        %v1720 = vsel %vm1166, %v1688, %v1606
        %v1721 = vsel %vm1166, %v1689, %v1608
        %v1722 = vsel %vm1166, %v1690, %v1610
        %v1723 = vsel %vm1166, %v1691, %v1612
        %v1724 = vsel %vm1166, %v1692, %v1614
        %v1725 = vsel %vm1166, %v1693, %v1616
        %v1726 = vsel %vm1166, %v1694, %v1618
        %v1727 = vsel %vm1166, %v1695, %v1620
        %v1728 = vsel %vm1166, %v1696, %v1622
        %v1729 = vsel %vm1166, %v1697, %v1624
        %v1730 = vsel %vm1166, %v1698, %v1626
        %v1731 = vsel %vm1166, %v1699, %v1628
        %v1732 = vsel %vm1166, %v1700, %v1630
        %v1733 = vsel %vm1166, %v1701, %v1632
        %v1734 = vsel %vm1166, %v1702, %v1634
        %v1735 = vsel %vm1166, %v1703, %v1636
        %v1736 = vsel %vm1166, %v1704, %v1638
        %v1737 = vsel %vm1166, %v1705, %v1640
        %v1738 = vsel %vm1166, %v1706, %v1642
        %v1739 = vpack.c.bf16 %v1708, %v1707
        %v1740 = vpack.c.bf16 %v1710, %v1709
        %v1741 = vpack.c.bf16 %v1712, %v1711
        %v1742 = vpack.c.bf16 %v1714, %v1713
        %v1743 = vpack.c.bf16 %v1716, %v1715
        %v1744 = vpack.c.bf16 %v1718, %v1717
        %v1745 = vpack.c.bf16 %v1720, %v1719
        %v1746 = vpack.c.bf16 %v1722, %v1721
        %v1747 = vpack.c.bf16 %v1724, %v1723
        %v1748 = vpack.c.bf16 %v1726, %v1725
        %v1749 = vpack.c.bf16 %v1728, %v1727
        %v1750 = vpack.c.bf16 %v1730, %v1729
        %v1751 = vpack.c.bf16 %v1732, %v1731
        %v1752 = vpack.c.bf16 %v1734, %v1733
        %v1753 = vpack.c.bf16 %v1736, %v1735
        %v1754 = vpack.c.bf16 %v1738, %v1737
        %s1755 = scalar_lea.vmem %s3, 48
        %v1756 = vld [vmem:[%s1755] sm:$0xf]
        %v1757 = vld [vmem:[%s1755 + $0x4] sm:$0xf]
        %v1758 = vld [vmem:[%s1755 + $0x8] sm:$0xf]
        %v1759 = vld [vmem:[%s1755 + $0xc] sm:$0xf]
        %v1760 = vld [vmem:[%s1755 + $0x10] sm:$0xf]
        %v1761 = vld [vmem:[%s1755 + $0x14] sm:$0xf]
        %v1762 = vld [vmem:[%s1755 + $0x18] sm:$0xf]
        %v1763 = vld [vmem:[%s1755 + $0x1c] sm:$0xf]
        %v1764 = vld [vmem:[%s1755 + $0x20] sm:$0xf]
        %v1765 = vld [vmem:[%s1755 + $0x24] sm:$0xf]
        %v1766 = vld [vmem:[%s1755 + $0x28] sm:$0xf]
        %v1767 = vld [vmem:[%s1755 + $0x2c] sm:$0xf]
        %v1780 = vunpack.c.l.b16 %v1756
        %v1781 = vunpack.c.l.b16 %v1757
        %v1782 = vunpack.c.l.b16 %v1758
        %v1783 = vunpack.c.l.b16 %v1759
        %v1784 = vunpack.c.l.b16 %v1760
        %v1785 = vunpack.c.l.b16 %v1761
        %v1786 = vunpack.c.l.b16 %v1762
        %v1787 = vunpack.c.l.b16 %v1763
        %v1788 = vunpack.c.l.b16 %v1764
        %v1789 = vunpack.c.l.b16 %v1765
        %v1790 = vunpack.c.l.b16 %v1766
        %v1791 = vunpack.c.l.b16 %v1767
        %v1792 = vpack.c.b16 %v1781, %v1780
        %v1793 = vpack.c.b16 %v1783, %v1782
        %v1794 = vpack.c.b16 %v1785, %v1784
        %v1795 = vpack.c.b16 %v1787, %v1786
        %v1796 = vpack.c.b16 %v1789, %v1788
        %v1797 = vpack.c.b16 %v1791, %v1790
        %vm1804 = vcmask 785408
        %v1806 = vsel %vm1804, %v1739, 0
        %v1809 = vsel %vm1804, %v1740, 0
        %v1812 = vsel %vm1804, %v1741, 0
        %v1815 = vsel %vm1804, %v1742, 0
        %v1818 = vsel %vm1804, %v1743, 0
        %v1821 = vsel %vm1804, %v1744, 0
        %v1824 = vsel %vm1804, %v1745, 0
        %v1827 = vsel %vm1804, %v1746, 0
        %v1830 = vsel %vm1804, %v1747, 0
        %v1833 = vsel %vm1804, %v1748, 0
        %v1836 = vsel %vm1804, %v1749, 0
        %v1839 = vsel %vm1804, %v1750, 0
        %v1842 = vsel %vm1804, %v1751, 0
        %v1845 = vsel %vm1804, %v1752, 0
        %v1848 = vsel %vm1804, %v1753, 0
        %v1851 = vsel %vm1804, %v1754, 0
        %1853 = vmatprep.subr.bf16.mxu0 0
        %1854 = vmatpush1.bf16.msra.mxu0 %v1792
        %1855 = vmatprep.subr.bf16.mxu0 0
        %1856 = vmatpush1.bf16.msra.mxu0 %v1793
        %1857 = vmatprep.subr.bf16.mxu0 0
        %1858 = vmatpush1.bf16.msra.mxu0 %v1794
        %1859 = vmatprep.subr.bf16.mxu0 0
        %1860 = vmatpush1.bf16.msra.mxu0 %v1795
        %1861 = vmatprep.subr.bf16.mxu0 0
        %1862 = vmatpush1.bf16.msra.mxu0 %v1796
        %1863 = vmatprep.subr.bf16.mxu0 0
        %1864 = vmatpush1.bf16.msra.mxu0 %v1797
        %1865 = vmatprep.subr.bf16.mxu0 0
        %1866 = vmatpush1.bf16.msra.mxu0 0
        %1867 = vmatprep.subr.bf16.mxu0 0
        %1868 = vmatpush1.bf16.msra.mxu0 0
        %1869 = vmatprep.subr.bf16.mxu0 0
        %1870 = vmatpush1.bf16.msra.mxu0 0
        %1871 = vmatprep.subr.bf16.mxu0 0
        %1872 = vmatpush1.bf16.msra.mxu0 0
        %1873 = vmatprep.subr.bf16.mxu0 0
        %1874 = vmatpush1.bf16.msra.mxu0 0
        %1875 = vmatprep.subr.bf16.mxu0 0
        %1876 = vmatpush1.bf16.msra.mxu0 0
        %1877 = vmatprep.subr.bf16.mxu0 0
        %1878 = vmatpush1.bf16.msra.mxu0 0
        %1879 = vmatprep.subr.bf16.mxu0 0
        %1880 = vmatpush1.bf16.msra.mxu0 0
        %1881 = vmatprep.subr.bf16.mxu0 0
        %1882 = vmatpush1.bf16.msra.mxu0 0
        %1883 = vmatprep.subr.bf16.mxu0 0
        %1884 = vmatpush1.bf16.msra.mxu0 0
        %1885 = vmatprep.mubr.bf16.mxu0 0
        %1886 = vmatmul.mubr.bf16.gmra.mrb[0].mxu0 %v1806
        %v1887 = vpop.f32.mrb[0].mxu0
        %v1888 = vadd.f32 0.0, %v1887
        %v1889 = vpop.f32.mrb[0].mxu0
        %v1890 = vpop.f32.mrb[0].mxu0
        %v1891 = vadd.f32 0.0, %v1890
        %v1892 = vpop.f32.mrb[0].mxu0
        %1893 = vmatprep.mubr.bf16.mxu0 0
        %1894 = vmatmul.mubr.bf16.gmra.mrb[0].mxu0 %v1809
        %v1895 = vpop.f32.mrb[0].mxu0
        %v1896 = vadd.f32 0.0, %v1895
        %v1897 = vpop.f32.mrb[0].mxu0
        %v1898 = vpop.f32.mrb[0].mxu0
        %v1899 = vadd.f32 0.0, %v1898
        %v1900 = vpop.f32.mrb[0].mxu0
        %1901 = vmatprep.mubr.bf16.mxu0 0
        %1902 = vmatmul.mubr.bf16.gmra.mrb[0].mxu0 %v1812
        %v1903 = vpop.f32.mrb[0].mxu0
        %v1904 = vadd.f32 0.0, %v1903
        %v1905 = vpop.f32.mrb[0].mxu0
        %v1906 = vpop.f32.mrb[0].mxu0
        %v1907 = vadd.f32 0.0, %v1906
        %v1908 = vpop.f32.mrb[0].mxu0
        %1909 = vmatprep.mubr.bf16.mxu0 0
        %1910 = vmatmul.mubr.bf16.gmra.mrb[0].mxu0 %v1815
        %v1911 = vpop.f32.mrb[0].mxu0
        %v1912 = vadd.f32 0.0, %v1911
        %v1913 = vpop.f32.mrb[0].mxu0
        %v1914 = vpop.f32.mrb[0].mxu0
        %v1915 = vadd.f32 0.0, %v1914
        %v1916 = vpop.f32.mrb[0].mxu0
        %1917 = vmatprep.mubr.bf16.mxu0 0
        %1918 = vmatmul.mubr.bf16.gmra.mrb[0].mxu0 %v1818
        %v1919 = vpop.f32.mrb[0].mxu0
        %v1920 = vadd.f32 0.0, %v1919
        %v1921 = vpop.f32.mrb[0].mxu0
        %v1922 = vpop.f32.mrb[0].mxu0
        %v1923 = vadd.f32 0.0, %v1922
        %v1924 = vpop.f32.mrb[0].mxu0
        %1925 = vmatprep.mubr.bf16.mxu0 0
        %1926 = vmatmul.mubr.bf16.gmra.mrb[0].mxu0 %v1821
        %v1927 = vpop.f32.mrb[0].mxu0
        %v1928 = vadd.f32 0.0, %v1927
        %v1929 = vpop.f32.mrb[0].mxu0
        %v1930 = vpop.f32.mrb[0].mxu0
        %v1931 = vadd.f32 0.0, %v1930
        %v1932 = vpop.f32.mrb[0].mxu0
        %1933 = vmatprep.mubr.bf16.mxu0 0
        %1934 = vmatmul.mubr.bf16.gmra.mrb[0].mxu0 %v1824
        %v1935 = vpop.f32.mrb[0].mxu0
        %v1936 = vadd.f32 0.0, %v1935
        %v1937 = vpop.f32.mrb[0].mxu0
        %v1938 = vpop.f32.mrb[0].mxu0
        %v1939 = vadd.f32 0.0, %v1938
        %v1940 = vpop.f32.mrb[0].mxu0
        %1941 = vmatprep.mubr.bf16.mxu0 0
        %1942 = vmatmul.mubr.bf16.gmra.mrb[0].mxu0 %v1827
        %v1943 = vpop.f32.mrb[0].mxu0
        %v1944 = vadd.f32 0.0, %v1943
        %v1945 = vpop.f32.mrb[0].mxu0
        %v1946 = vpop.f32.mrb[0].mxu0
        %v1947 = vadd.f32 0.0, %v1946
        %v1948 = vpop.f32.mrb[0].mxu0
        %1949 = vmatprep.mubr.bf16.mxu0 0
        %1950 = vmatmul.mubr.bf16.gmra.mrb[0].mxu0 %v1830
        %v1951 = vpop.f32.mrb[0].mxu0
        %v1952 = vadd.f32 0.0, %v1951
        %v1953 = vpop.f32.mrb[0].mxu0
        %v1954 = vpop.f32.mrb[0].mxu0
        %v1955 = vadd.f32 0.0, %v1954
        %v1956 = vpop.f32.mrb[0].mxu0
        %1957 = vmatprep.mubr.bf16.mxu0 0
        %1958 = vmatmul.mubr.bf16.gmra.mrb[0].mxu0 %v1833
        %v1959 = vpop.f32.mrb[0].mxu0
        %v1960 = vadd.f32 0.0, %v1959
        %v1961 = vpop.f32.mrb[0].mxu0
        %v1962 = vpop.f32.mrb[0].mxu0
        %v1963 = vadd.f32 0.0, %v1962
        %v1964 = vpop.f32.mrb[0].mxu0
        %1965 = vmatprep.mubr.bf16.mxu0 0
        %1966 = vmatmul.mubr.bf16.gmra.mrb[0].mxu0 %v1836
        %v1967 = vpop.f32.mrb[0].mxu0
        %v1968 = vadd.f32 0.0, %v1967
        %v1969 = vpop.f32.mrb[0].mxu0
        %v1970 = vpop.f32.mrb[0].mxu0
        %v1971 = vadd.f32 0.0, %v1970
        %v1972 = vpop.f32.mrb[0].mxu0
        %1973 = vmatprep.mubr.bf16.mxu0 0
        %1974 = vmatmul.mubr.bf16.gmra.mrb[0].mxu0 %v1839
        %v1975 = vpop.f32.mrb[0].mxu0
        %v1976 = vadd.f32 0.0, %v1975
        %v1977 = vpop.f32.mrb[0].mxu0
        %v1978 = vpop.f32.mrb[0].mxu0
        %v1979 = vadd.f32 0.0, %v1978
        %v1980 = vpop.f32.mrb[0].mxu0
        %1981 = vmatprep.mubr.bf16.mxu0 0
        %1982 = vmatmul.mubr.bf16.gmra.mrb[0].mxu0 %v1842
        %v1983 = vpop.f32.mrb[0].mxu0
        %v1984 = vadd.f32 0.0, %v1983
        %v1985 = vpop.f32.mrb[0].mxu0
        %v1986 = vpop.f32.mrb[0].mxu0
        %v1987 = vadd.f32 0.0, %v1986
        %v1988 = vpop.f32.mrb[0].mxu0
        %1989 = vmatprep.mubr.bf16.mxu0 0
        %1990 = vmatmul.mubr.bf16.gmra.mrb[0].mxu0 %v1845
        %v1991 = vpop.f32.mrb[0].mxu0
        %v1992 = vadd.f32 0.0, %v1991
        %v1993 = vpop.f32.mrb[0].mxu0
        %v1994 = vpop.f32.mrb[0].mxu0
        %v1995 = vadd.f32 0.0, %v1994
        %v1996 = vpop.f32.mrb[0].mxu0
        %1997 = vmatprep.mubr.bf16.mxu0 0
        %1998 = vmatmul.mubr.bf16.gmra.mrb[0].mxu0 %v1848
        %v1999 = vpop.f32.mrb[0].mxu0
        %v2000 = vadd.f32 0.0, %v1999
        %v2001 = vpop.f32.mrb[0].mxu0
        %v2002 = vpop.f32.mrb[0].mxu0
        %v2003 = vadd.f32 0.0, %v2002
        %v2004 = vpop.f32.mrb[0].mxu0
        %2005 = vmatprep.mubr.bf16.mxu0 0
        %2006 = vmatmul.mubr.bf16.gmra.mrb[0].mxu0 %v1851
        %v2007 = vpop.f32.mrb[0].mxu0
        %v2008 = vadd.f32 0.0, %v2007
        %v2009 = vpop.f32.mrb[0].mxu0
        %v2010 = vpop.f32.mrb[0].mxu0
        %v2011 = vadd.f32 0.0, %v2010
        %v2012 = vpop.f32.mrb[0].mxu0
        %2013 = vdwg.mxu0
        %v2026 = vunpack.c.l.b16 %v1215
        %v2027 = vunpack.c.l.b16 %v1216
        %v2028 = vunpack.c.l.b16 %v1217
        %v2029 = vunpack.c.l.b16 %v1218
        %v2030 = vunpack.c.l.b16 %v1219
        %v2031 = vunpack.c.l.b16 %v1220
        %v2032 = vunpack.c.l.b16 %v1221
        %v2033 = vunpack.c.l.b16 %v1222
        %v2034 = vunpack.c.l.b16 %v1223
        %v2035 = vunpack.c.l.b16 %v1224
        %v2036 = vunpack.c.l.b16 %v1225
        %v2037 = vunpack.c.l.b16 %v1226
        %v2038 = vpack.c.b16 %v2027, %v2026
        %v2039 = vpack.c.b16 %v2029, %v2028
        %v2040 = vpack.c.b16 %v2031, %v2030
        %v2041 = vpack.c.b16 %v2033, %v2032
        %v2042 = vpack.c.b16 %v2035, %v2034
        %v2043 = vpack.c.b16 %v2037, %v2036
        %v2051 = vsel %vm1804, %v1199, 0
        %v2054 = vsel %vm1804, %v1200, 0
        %v2057 = vsel %vm1804, %v1201, 0
        %v2060 = vsel %vm1804, %v1202, 0
        %v2063 = vsel %vm1804, %v1203, 0
        %v2066 = vsel %vm1804, %v1204, 0
        %v2069 = vsel %vm1804, %v1205, 0
        %v2072 = vsel %vm1804, %v1206, 0
        %v2075 = vsel %vm1804, %v1207, 0
        %v2078 = vsel %vm1804, %v1208, 0
        %v2081 = vsel %vm1804, %v1209, 0
        %v2084 = vsel %vm1804, %v1210, 0
        %v2087 = vsel %vm1804, %v1211, 0
        %v2090 = vsel %vm1804, %v1212, 0
        %v2093 = vsel %vm1804, %v1213, 0
        %v2096 = vsel %vm1804, %v1214, 0
        %2098 = vmatprep.subr.bf16.mxu0 0
        %2099 = vmatpush1.bf16.msra.mxu0 %v2038
        %2100 = vmatprep.subr.bf16.mxu0 0
        %2101 = vmatpush1.bf16.msra.mxu0 %v2039
        %2102 = vmatprep.subr.bf16.mxu0 0
        %2103 = vmatpush1.bf16.msra.mxu0 %v2040
        %2104 = vmatprep.subr.bf16.mxu0 0
        %2105 = vmatpush1.bf16.msra.mxu0 %v2041
        %2106 = vmatprep.subr.bf16.mxu0 0
        %2107 = vmatpush1.bf16.msra.mxu0 %v2042
        %2108 = vmatprep.subr.bf16.mxu0 0
        %2109 = vmatpush1.bf16.msra.mxu0 %v2043
        %2110 = vmatprep.subr.bf16.mxu0 0
        %2111 = vmatpush1.bf16.msra.mxu0 0
        %2112 = vmatprep.subr.bf16.mxu0 0
        %2113 = vmatpush1.bf16.msra.mxu0 0
        %2114 = vmatprep.subr.bf16.mxu0 0
        %2115 = vmatpush1.bf16.msra.mxu0 0
        %2116 = vmatprep.subr.bf16.mxu0 0
        %2117 = vmatpush1.bf16.msra.mxu0 0
        %2118 = vmatprep.subr.bf16.mxu0 0
        %2119 = vmatpush1.bf16.msra.mxu0 0
        %2120 = vmatprep.subr.bf16.mxu0 0
        %2121 = vmatpush1.bf16.msra.mxu0 0
        %2122 = vmatprep.subr.bf16.mxu0 0
        %2123 = vmatpush1.bf16.msra.mxu0 0
        %2124 = vmatprep.subr.bf16.mxu0 0
        %2125 = vmatpush1.bf16.msra.mxu0 0
        %2126 = vmatprep.subr.bf16.mxu0 0
        %2127 = vmatpush1.bf16.msra.mxu0 0
        %2128 = vmatprep.subr.bf16.mxu0 0
        %2129 = vmatpush1.bf16.msra.mxu0 0
        %2130 = vmatprep.mubr.bf16.mxu0 0
        %2131 = vmatmul.mubr.bf16.gmra.mrb[0].mxu0 %v2051
        %v2132 = vpop.f32.mrb[0].mxu0
        %v2133 = vadd.f32 %v1888, %v2132
        %v2134 = vpop.f32.mrb[0].mxu0
        %v2135 = vpop.f32.mrb[0].mxu0
        %v2136 = vadd.f32 %v1891, %v2135
        %v2137 = vpop.f32.mrb[0].mxu0
        %2138 = vmatprep.mubr.bf16.mxu0 0
        %2139 = vmatmul.mubr.bf16.gmra.mrb[0].mxu0 %v2054
        %v2140 = vpop.f32.mrb[0].mxu0
        %v2141 = vadd.f32 %v1896, %v2140
        %v2142 = vpop.f32.mrb[0].mxu0
        %v2143 = vpop.f32.mrb[0].mxu0
        %v2144 = vadd.f32 %v1899, %v2143
        %v2145 = vpop.f32.mrb[0].mxu0
        %2146 = vmatprep.mubr.bf16.mxu0 0
        %2147 = vmatmul.mubr.bf16.gmra.mrb[0].mxu0 %v2057
        %v2148 = vpop.f32.mrb[0].mxu0
        %v2149 = vadd.f32 %v1904, %v2148
        %v2150 = vpop.f32.mrb[0].mxu0
        %v2151 = vpop.f32.mrb[0].mxu0
        %v2152 = vadd.f32 %v1907, %v2151
        %v2153 = vpop.f32.mrb[0].mxu0
        %2154 = vmatprep.mubr.bf16.mxu0 0
        %2155 = vmatmul.mubr.bf16.gmra.mrb[0].mxu0 %v2060
        %v2156 = vpop.f32.mrb[0].mxu0
        %v2157 = vadd.f32 %v1912, %v2156
        %v2158 = vpop.f32.mrb[0].mxu0
        %v2159 = vpop.f32.mrb[0].mxu0
        %v2160 = vadd.f32 %v1915, %v2159
        %v2161 = vpop.f32.mrb[0].mxu0
        %2162 = vmatprep.mubr.bf16.mxu0 0
        %2163 = vmatmul.mubr.bf16.gmra.mrb[0].mxu0 %v2063
        %v2164 = vpop.f32.mrb[0].mxu0
        %v2165 = vadd.f32 %v1920, %v2164
        %v2166 = vpop.f32.mrb[0].mxu0
        %v2167 = vpop.f32.mrb[0].mxu0
        %v2168 = vadd.f32 %v1923, %v2167
        %v2169 = vpop.f32.mrb[0].mxu0
        %2170 = vmatprep.mubr.bf16.mxu0 0
        %2171 = vmatmul.mubr.bf16.gmra.mrb[0].mxu0 %v2066
        %v2172 = vpop.f32.mrb[0].mxu0
        %v2173 = vadd.f32 %v1928, %v2172
        %v2174 = vpop.f32.mrb[0].mxu0
        %v2175 = vpop.f32.mrb[0].mxu0
        %v2176 = vadd.f32 %v1931, %v2175
        %v2177 = vpop.f32.mrb[0].mxu0
        %2178 = vmatprep.mubr.bf16.mxu0 0
        %2179 = vmatmul.mubr.bf16.gmra.mrb[0].mxu0 %v2069
        %v2180 = vpop.f32.mrb[0].mxu0
        %v2181 = vadd.f32 %v1936, %v2180
        %v2182 = vpop.f32.mrb[0].mxu0
        %v2183 = vpop.f32.mrb[0].mxu0
        %v2184 = vadd.f32 %v1939, %v2183
        %v2185 = vpop.f32.mrb[0].mxu0
        %2186 = vmatprep.mubr.bf16.mxu0 0
        %2187 = vmatmul.mubr.bf16.gmra.mrb[0].mxu0 %v2072
        %v2188 = vpop.f32.mrb[0].mxu0
        %v2189 = vadd.f32 %v1944, %v2188
        %v2190 = vpop.f32.mrb[0].mxu0
        %v2191 = vpop.f32.mrb[0].mxu0
        %v2192 = vadd.f32 %v1947, %v2191
        %v2193 = vpop.f32.mrb[0].mxu0
        %2194 = vmatprep.mubr.bf16.mxu0 0
        %2195 = vmatmul.mubr.bf16.gmra.mrb[0].mxu0 %v2075
        %v2196 = vpop.f32.mrb[0].mxu0
        %v2197 = vadd.f32 %v1952, %v2196
        %v2198 = vpop.f32.mrb[0].mxu0
        %v2199 = vpop.f32.mrb[0].mxu0
        %v2200 = vadd.f32 %v1955, %v2199
        %v2201 = vpop.f32.mrb[0].mxu0
        %2202 = vmatprep.mubr.bf16.mxu0 0
        %2203 = vmatmul.mubr.bf16.gmra.mrb[0].mxu0 %v2078
        %v2204 = vpop.f32.mrb[0].mxu0
        %v2205 = vadd.f32 %v1960, %v2204
        %v2206 = vpop.f32.mrb[0].mxu0
        %v2207 = vpop.f32.mrb[0].mxu0
        %v2208 = vadd.f32 %v1963, %v2207
        %v2209 = vpop.f32.mrb[0].mxu0
        %2210 = vmatprep.mubr.bf16.mxu0 0
        %2211 = vmatmul.mubr.bf16.gmra.mrb[0].mxu0 %v2081
        %v2212 = vpop.f32.mrb[0].mxu0
        %v2213 = vadd.f32 %v1968, %v2212
        %v2214 = vpop.f32.mrb[0].mxu0
        %v2215 = vpop.f32.mrb[0].mxu0
        %v2216 = vadd.f32 %v1971, %v2215
        %v2217 = vpop.f32.mrb[0].mxu0
        %2218 = vmatprep.mubr.bf16.mxu0 0
        %2219 = vmatmul.mubr.bf16.gmra.mrb[0].mxu0 %v2084
        %v2220 = vpop.f32.mrb[0].mxu0
        %v2221 = vadd.f32 %v1976, %v2220
        %v2222 = vpop.f32.mrb[0].mxu0
        %v2223 = vpop.f32.mrb[0].mxu0
        %v2224 = vadd.f32 %v1979, %v2223
        %v2225 = vpop.f32.mrb[0].mxu0
        %2226 = vmatprep.mubr.bf16.mxu0 0
        %2227 = vmatmul.mubr.bf16.gmra.mrb[0].mxu0 %v2087
        %v2228 = vpop.f32.mrb[0].mxu0
        %v2229 = vadd.f32 %v1984, %v2228
        %v2230 = vpop.f32.mrb[0].mxu0
        %v2231 = vpop.f32.mrb[0].mxu0
        %v2232 = vadd.f32 %v1987, %v2231
        %v2233 = vpop.f32.mrb[0].mxu0
        %2234 = vmatprep.mubr.bf16.mxu0 0
        %2235 = vmatmul.mubr.bf16.gmra.mrb[0].mxu0 %v2090
        %v2236 = vpop.f32.mrb[0].mxu0
        %v2237 = vadd.f32 %v1992, %v2236
        %v2238 = vpop.f32.mrb[0].mxu0
        %v2239 = vpop.f32.mrb[0].mxu0
        %v2240 = vadd.f32 %v1995, %v2239
        %v2241 = vpop.f32.mrb[0].mxu0
        %2242 = vmatprep.mubr.bf16.mxu0 0
        %2243 = vmatmul.mubr.bf16.gmra.mrb[0].mxu0 %v2093
        %v2244 = vpop.f32.mrb[0].mxu0
        %v2245 = vadd.f32 %v2000, %v2244
        %v2246 = vpop.f32.mrb[0].mxu0
        %v2247 = vpop.f32.mrb[0].mxu0
        %v2248 = vadd.f32 %v2003, %v2247
        %v2249 = vpop.f32.mrb[0].mxu0
        %2250 = vmatprep.mubr.bf16.mxu0 0
        %2251 = vmatmul.mubr.bf16.gmra.mrb[0].mxu0 %v2096
        %v2252 = vpop.f32.mrb[0].mxu0
        %v2253 = vadd.f32 %v2008, %v2252
        %v2254 = vpop.f32.mrb[0].mxu0
        %v2255 = vpop.f32.mrb[0].mxu0
        %v2256 = vadd.f32 %v2011, %v2255
        %v2257 = vpop.f32.mrb[0].mxu0
        %2258 = vdwg.mxu0
        %s2259 = scalar_lea.vmem [#allocation2], 48
        %v2260 = vld [vmem:[%s2259] sm:$0xff]
        %v2261 = vld [vmem:[%s2259 + $0x8] sm:$0xff]
        %v2262 = vld [vmem:[%s2259 + $0x10] sm:$0xff]
        %v2263 = vld [vmem:[%s2259 + $0x18] sm:$0xff]
        %v2264 = vld [vmem:[%s2259 + $0x20] sm:$0xff]
        %v2265 = vld [vmem:[%s2259 + $0x28] sm:$0xff]
        %v2266 = vld [vmem:[%s2259 + $0x30] sm:$0xff]
        %v2267 = vld [vmem:[%s2259 + $0x38] sm:$0xff]
        %v2268 = vld [vmem:[%s2259 + $0x40] sm:$0xff]
        %v2269 = vld [vmem:[%s2259 + $0x48] sm:$0xff]
        %v2270 = vld [vmem:[%s2259 + $0x50] sm:$0xff]
        %v2271 = vld [vmem:[%s2259 + $0x58] sm:$0xff]
        %v2272 = vld [vmem:[%s2259 + $0x60] sm:$0xff]
        %v2273 = vld [vmem:[%s2259 + $0x68] sm:$0xff]
        %v2274 = vld [vmem:[%s2259 + $0x70] sm:$0xff]
        %v2275 = vld [vmem:[%s2259 + $0x78] sm:$0xff]
        %v2276 = vld [vmem:[%s2259 + $0x80] sm:$0xff]
        %v2277 = vld [vmem:[%s2259 + $0x88] sm:$0xff]
        %v2278 = vld [vmem:[%s2259 + $0x90] sm:$0xff]
        %v2279 = vld [vmem:[%s2259 + $0x98] sm:$0xff]
        %v2280 = vld [vmem:[%s2259 + $0xa0] sm:$0xff]
        %v2281 = vld [vmem:[%s2259 + $0xa8] sm:$0xff]
        %v2282 = vld [vmem:[%s2259 + $0xb0] sm:$0xff]
        %v2283 = vld [vmem:[%s2259 + $0xb8] sm:$0xff]
        %v2284 = vld [vmem:[%s2259 + $0xc0] sm:$0xff]
        %v2285 = vld [vmem:[%s2259 + $0xc8] sm:$0xff]
        %v2286 = vld [vmem:[%s2259 + $0xd0] sm:$0xff]
        %v2287 = vld [vmem:[%s2259 + $0xd8] sm:$0xff]
        %v2288 = vld [vmem:[%s2259 + $0xe0] sm:$0xff]
        %v2289 = vld [vmem:[%s2259 + $0xe8] sm:$0xff]
        %v2290 = vld [vmem:[%s2259 + $0xf0] sm:$0xff]
        %v2291 = vld [vmem:[%s2259 + $0xf8] sm:$0xff]
        %v2292 = vld [vmem:[%s2259 + $0x100] sm:$0xff]
        %v2293 = vld [vmem:[%s2259 + $0x108] sm:$0xff]
        %v2294 = vld [vmem:[%s2259 + $0x110] sm:$0xff]
        %v2295 = vld [vmem:[%s2259 + $0x118] sm:$0xff]
        %v2296 = vld [vmem:[%s2259 + $0x120] sm:$0xff]
        %v2297 = vld [vmem:[%s2259 + $0x128] sm:$0xff]
        %v2298 = vld [vmem:[%s2259 + $0x130] sm:$0xff]
        %v2299 = vld [vmem:[%s2259 + $0x138] sm:$0xff]
        %v2300 = vld [vmem:[%s2259 + $0x140] sm:$0xff]
        %v2301 = vld [vmem:[%s2259 + $0x148] sm:$0xff]
        %v2302 = vld [vmem:[%s2259 + $0x150] sm:$0xff]
        %v2303 = vld [vmem:[%s2259 + $0x158] sm:$0xff]
        %v2304 = vld [vmem:[%s2259 + $0x160] sm:$0xff]
        %v2305 = vld [vmem:[%s2259 + $0x168] sm:$0xff]
        %v2306 = vld [vmem:[%s2259 + $0x170] sm:$0xff]
        %v2307 = vld [vmem:[%s2259 + $0x178] sm:$0xff]
        %v2356 = vrot.slane %v2260, 1
        %v2357 = vrot.slane %v2261, 1
        %v2358 = vsel %vm780, %v2356, %v2357
        %v2359 = vrot.slane %v2262, 1
        %v2360 = vsel %vm780, %v2357, %v2359
        %v2361 = vrot.slane %v2263, 1
        %v2362 = vrot.slane %v2264, 1
        %v2363 = vsel %vm780, %v2361, %v2362
        %v2364 = vrot.slane %v2265, 1
        %v2365 = vsel %vm780, %v2362, %v2364
        %v2366 = vrot.slane %v2266, 1
        %v2367 = vrot.slane %v2267, 1
        %v2368 = vsel %vm780, %v2366, %v2367
        %v2369 = vrot.slane %v2268, 1
        %v2370 = vsel %vm780, %v2367, %v2369
        %v2371 = vrot.slane %v2269, 1
        %v2372 = vrot.slane %v2270, 1
        %v2373 = vsel %vm780, %v2371, %v2372
        %v2374 = vrot.slane %v2271, 1
        %v2375 = vsel %vm780, %v2372, %v2374
        %v2376 = vrot.slane %v2272, 1
        %v2377 = vrot.slane %v2273, 1
        %v2378 = vsel %vm780, %v2376, %v2377
        %v2379 = vrot.slane %v2274, 1
        %v2380 = vsel %vm780, %v2377, %v2379
        %v2381 = vrot.slane %v2275, 1
        %v2382 = vrot.slane %v2276, 1
        %v2383 = vsel %vm780, %v2381, %v2382
        %v2384 = vrot.slane %v2277, 1
        %v2385 = vsel %vm780, %v2382, %v2384
        %v2386 = vrot.slane %v2278, 1
        %v2387 = vrot.slane %v2279, 1
        %v2388 = vsel %vm780, %v2386, %v2387
        %v2389 = vrot.slane %v2280, 1
        %v2390 = vsel %vm780, %v2387, %v2389
        %v2391 = vrot.slane %v2281, 1
        %v2392 = vrot.slane %v2282, 1
        %v2393 = vsel %vm780, %v2391, %v2392
        %v2394 = vrot.slane %v2283, 1
        %v2395 = vsel %vm780, %v2392, %v2394
        %v2396 = vrot.slane %v2284, 1
        %v2397 = vrot.slane %v2285, 1
        %v2398 = vsel %vm780, %v2396, %v2397
        %v2399 = vrot.slane %v2286, 1
        %v2400 = vsel %vm780, %v2397, %v2399
        %v2401 = vrot.slane %v2287, 1
        %v2402 = vrot.slane %v2288, 1
        %v2403 = vsel %vm780, %v2401, %v2402
        %v2404 = vrot.slane %v2289, 1
        %v2405 = vsel %vm780, %v2402, %v2404
        %v2406 = vrot.slane %v2290, 1
        %v2407 = vrot.slane %v2291, 1
        %v2408 = vsel %vm780, %v2406, %v2407
        %v2409 = vrot.slane %v2292, 1
        %v2410 = vsel %vm780, %v2407, %v2409
        %v2411 = vrot.slane %v2293, 1
        %v2412 = vrot.slane %v2294, 1
        %v2413 = vsel %vm780, %v2411, %v2412
        %v2414 = vrot.slane %v2295, 1
        %v2415 = vsel %vm780, %v2412, %v2414
        %v2416 = vrot.slane %v2296, 1
        %v2417 = vrot.slane %v2297, 1
        %v2418 = vsel %vm780, %v2416, %v2417
        %v2419 = vrot.slane %v2298, 1
        %v2420 = vsel %vm780, %v2417, %v2419
        %v2421 = vrot.slane %v2299, 1
        %v2422 = vrot.slane %v2300, 1
        %v2423 = vsel %vm780, %v2421, %v2422
        %v2424 = vrot.slane %v2301, 1
        %v2425 = vsel %vm780, %v2422, %v2424
        %v2426 = vrot.slane %v2302, 1
        %v2427 = vrot.slane %v2303, 1
        %v2428 = vsel %vm780, %v2426, %v2427
        %v2429 = vrot.slane %v2304, 1
        %v2430 = vsel %vm780, %v2427, %v2429
        %v2431 = vrot.slane %v2305, 1
        %v2432 = vrot.slane %v2306, 1
        %v2433 = vsel %vm780, %v2431, %v2432
        %v2434 = vrot.slane %v2307, 1
        %v2435 = vsel %vm780, %v2432, %v2434
        %2436 = vrot.lane.b32.xlu0 %v2358, 32
        %v2437 = vpop.permute.xlu0 %2436
        %2438 = vrot.lane.b32.xlu0 %v2360, 32
        %v2439 = vpop.permute.xlu0 %2438
        %2440 = vrot.lane.b32.xlu0 %v2363, 32
        %v2441 = vpop.permute.xlu0 %2440
        %2442 = vrot.lane.b32.xlu0 %v2365, 32
        %v2443 = vpop.permute.xlu0 %2442
        %2444 = vrot.lane.b32.xlu0 %v2368, 32
        %v2445 = vpop.permute.xlu0 %2444
        %2446 = vrot.lane.b32.xlu0 %v2370, 32
        %v2447 = vpop.permute.xlu0 %2446
        %2448 = vrot.lane.b32.xlu0 %v2373, 32
        %v2449 = vpop.permute.xlu0 %2448
        %2450 = vrot.lane.b32.xlu0 %v2375, 32
        %v2451 = vpop.permute.xlu0 %2450
        %2452 = vrot.lane.b32.xlu0 %v2378, 32
        %v2453 = vpop.permute.xlu0 %2452
        %2454 = vrot.lane.b32.xlu0 %v2380, 32
        %v2455 = vpop.permute.xlu0 %2454
        %2456 = vrot.lane.b32.xlu0 %v2383, 32
        %v2457 = vpop.permute.xlu0 %2456
        %2458 = vrot.lane.b32.xlu0 %v2385, 32
        %v2459 = vpop.permute.xlu0 %2458
        %2460 = vrot.lane.b32.xlu0 %v2388, 32
        %v2461 = vpop.permute.xlu0 %2460
        %2462 = vrot.lane.b32.xlu0 %v2390, 32
        %v2463 = vpop.permute.xlu0 %2462
        %2464 = vrot.lane.b32.xlu0 %v2393, 32
        %v2465 = vpop.permute.xlu0 %2464
        %2466 = vrot.lane.b32.xlu0 %v2395, 32
        %v2467 = vpop.permute.xlu0 %2466
        %2468 = vrot.lane.b32.xlu0 %v2398, 32
        %v2469 = vpop.permute.xlu0 %2468
        %2470 = vrot.lane.b32.xlu0 %v2400, 32
        %v2471 = vpop.permute.xlu0 %2470
        %2472 = vrot.lane.b32.xlu0 %v2403, 32
        %v2473 = vpop.permute.xlu0 %2472
        %2474 = vrot.lane.b32.xlu0 %v2405, 32
        %v2475 = vpop.permute.xlu0 %2474
        %2476 = vrot.lane.b32.xlu0 %v2408, 32
        %v2477 = vpop.permute.xlu0 %2476
        %2478 = vrot.lane.b32.xlu0 %v2410, 32
        %v2479 = vpop.permute.xlu0 %2478
        %2480 = vrot.lane.b32.xlu0 %v2413, 32
        %v2481 = vpop.permute.xlu0 %2480
        %2482 = vrot.lane.b32.xlu0 %v2415, 32
        %v2483 = vpop.permute.xlu0 %2482
        %2484 = vrot.lane.b32.xlu0 %v2418, 32
        %v2485 = vpop.permute.xlu0 %2484
        %2486 = vrot.lane.b32.xlu0 %v2420, 32
        %v2487 = vpop.permute.xlu0 %2486
        %2488 = vrot.lane.b32.xlu0 %v2423, 32
        %v2489 = vpop.permute.xlu0 %2488
        %2490 = vrot.lane.b32.xlu0 %v2425, 32
        %v2491 = vpop.permute.xlu0 %2490
        %2492 = vrot.lane.b32.xlu0 %v2428, 32
        %v2493 = vpop.permute.xlu0 %2492
        %2494 = vrot.lane.b32.xlu0 %v2430, 32
        %v2495 = vpop.permute.xlu0 %2494
        %2496 = vrot.lane.b32.xlu0 %v2433, 32
        %v2497 = vpop.permute.xlu0 %2496
        %2498 = vrot.lane.b32.xlu0 %v2435, 32
        %v2499 = vpop.permute.xlu0 %2498
        %v2532 = vrot.slane %v2260, 2
        %v2533 = vrot.slane %v2261, 2
        %v2534 = vsel %vm957, %v2532, %v2533
        %v2535 = vrot.slane %v2262, 2
        %v2536 = vsel %vm957, %v2533, %v2535
        %v2537 = vrot.slane %v2263, 2
        %v2538 = vrot.slane %v2264, 2
        %v2539 = vsel %vm957, %v2537, %v2538
        %v2540 = vrot.slane %v2265, 2
        %v2541 = vsel %vm957, %v2538, %v2540
        %v2542 = vrot.slane %v2266, 2
        %v2543 = vrot.slane %v2267, 2
        %v2544 = vsel %vm957, %v2542, %v2543
        %v2545 = vrot.slane %v2268, 2
        %v2546 = vsel %vm957, %v2543, %v2545
        %v2547 = vrot.slane %v2269, 2
        %v2548 = vrot.slane %v2270, 2
        %v2549 = vsel %vm957, %v2547, %v2548
        %v2550 = vrot.slane %v2271, 2
        %v2551 = vsel %vm957, %v2548, %v2550
        %v2552 = vrot.slane %v2272, 2
        %v2553 = vrot.slane %v2273, 2
        %v2554 = vsel %vm957, %v2552, %v2553
        %v2555 = vrot.slane %v2274, 2
        %v2556 = vsel %vm957, %v2553, %v2555
        %v2557 = vrot.slane %v2275, 2
        %v2558 = vrot.slane %v2276, 2
        %v2559 = vsel %vm957, %v2557, %v2558
        %v2560 = vrot.slane %v2277, 2
        %v2561 = vsel %vm957, %v2558, %v2560
        %v2562 = vrot.slane %v2278, 2
        %v2563 = vrot.slane %v2279, 2
        %v2564 = vsel %vm957, %v2562, %v2563
        %v2565 = vrot.slane %v2280, 2
        %v2566 = vsel %vm957, %v2563, %v2565
        %v2567 = vrot.slane %v2281, 2
        %v2568 = vrot.slane %v2282, 2
        %v2569 = vsel %vm957, %v2567, %v2568
        %v2570 = vrot.slane %v2283, 2
        %v2571 = vsel %vm957, %v2568, %v2570
        %v2572 = vrot.slane %v2284, 2
        %v2573 = vrot.slane %v2285, 2
        %v2574 = vsel %vm957, %v2572, %v2573
        %v2575 = vrot.slane %v2286, 2
        %v2576 = vsel %vm957, %v2573, %v2575
        %v2577 = vrot.slane %v2287, 2
        %v2578 = vrot.slane %v2288, 2
        %v2579 = vsel %vm957, %v2577, %v2578
        %v2580 = vrot.slane %v2289, 2
        %v2581 = vsel %vm957, %v2578, %v2580
        %v2582 = vrot.slane %v2290, 2
        %v2583 = vrot.slane %v2291, 2
        %v2584 = vsel %vm957, %v2582, %v2583
        %v2585 = vrot.slane %v2292, 2
        %v2586 = vsel %vm957, %v2583, %v2585
        %v2587 = vrot.slane %v2293, 2
        %v2588 = vrot.slane %v2294, 2
        %v2589 = vsel %vm957, %v2587, %v2588
        %v2590 = vrot.slane %v2295, 2
        %v2591 = vsel %vm957, %v2588, %v2590
        %v2592 = vrot.slane %v2296, 2
        %v2593 = vrot.slane %v2297, 2
        %v2594 = vsel %vm957, %v2592, %v2593
        %v2595 = vrot.slane %v2298, 2
        %v2596 = vsel %vm957, %v2593, %v2595
        %v2597 = vrot.slane %v2299, 2
        %v2598 = vrot.slane %v2300, 2
        %v2599 = vsel %vm957, %v2597, %v2598
        %v2600 = vrot.slane %v2301, 2
        %v2601 = vsel %vm957, %v2598, %v2600
        %v2602 = vrot.slane %v2302, 2
        %v2603 = vrot.slane %v2303, 2
        %v2604 = vsel %vm957, %v2602, %v2603
        %v2605 = vrot.slane %v2304, 2
        %v2606 = vsel %vm957, %v2603, %v2605
        %v2607 = vrot.slane %v2305, 2
        %v2608 = vrot.slane %v2306, 2
        %v2609 = vsel %vm957, %v2607, %v2608
        %v2610 = vrot.slane %v2307, 2
        %v2611 = vsel %vm957, %v2608, %v2610
        %2612 = vrot.lane.b32.xlu0 %v2534, 64
        %v2613 = vpop.permute.xlu0 %2612
        %2614 = vrot.lane.b32.xlu0 %v2536, 64
        %v2615 = vpop.permute.xlu0 %2614
        %2616 = vrot.lane.b32.xlu0 %v2539, 64
        %v2617 = vpop.permute.xlu0 %2616
        %2618 = vrot.lane.b32.xlu0 %v2541, 64
        %v2619 = vpop.permute.xlu0 %2618
        %2620 = vrot.lane.b32.xlu0 %v2544, 64
        %v2621 = vpop.permute.xlu0 %2620
        %2622 = vrot.lane.b32.xlu0 %v2546, 64
        %v2623 = vpop.permute.xlu0 %2622
        %2624 = vrot.lane.b32.xlu0 %v2549, 64
        %v2625 = vpop.permute.xlu0 %2624
        %2626 = vrot.lane.b32.xlu0 %v2551, 64
        %v2627 = vpop.permute.xlu0 %2626
        %2628 = vrot.lane.b32.xlu0 %v2554, 64
        %v2629 = vpop.permute.xlu0 %2628
        %2630 = vrot.lane.b32.xlu0 %v2556, 64
        %v2631 = vpop.permute.xlu0 %2630
        %2632 = vrot.lane.b32.xlu0 %v2559, 64
        %v2633 = vpop.permute.xlu0 %2632
        %2634 = vrot.lane.b32.xlu0 %v2561, 64
        %v2635 = vpop.permute.xlu0 %2634
        %2636 = vrot.lane.b32.xlu0 %v2564, 64
        %v2637 = vpop.permute.xlu0 %2636
        %2638 = vrot.lane.b32.xlu0 %v2566, 64
        %v2639 = vpop.permute.xlu0 %2638
        %2640 = vrot.lane.b32.xlu0 %v2569, 64
        %v2641 = vpop.permute.xlu0 %2640
        %2642 = vrot.lane.b32.xlu0 %v2571, 64
        %v2643 = vpop.permute.xlu0 %2642
        %2644 = vrot.lane.b32.xlu0 %v2574, 64
        %v2645 = vpop.permute.xlu0 %2644
        %2646 = vrot.lane.b32.xlu0 %v2576, 64
        %v2647 = vpop.permute.xlu0 %2646
        %2648 = vrot.lane.b32.xlu0 %v2579, 64
        %v2649 = vpop.permute.xlu0 %2648
        %2650 = vrot.lane.b32.xlu0 %v2581, 64
        %v2651 = vpop.permute.xlu0 %2650
        %2652 = vrot.lane.b32.xlu0 %v2584, 64
        %v2653 = vpop.permute.xlu0 %2652
        %2654 = vrot.lane.b32.xlu0 %v2586, 64
        %v2655 = vpop.permute.xlu0 %2654
        %2656 = vrot.lane.b32.xlu0 %v2589, 64
        %v2657 = vpop.permute.xlu0 %2656
        %2658 = vrot.lane.b32.xlu0 %v2591, 64
        %v2659 = vpop.permute.xlu0 %2658
        %2660 = vrot.lane.b32.xlu0 %v2594, 64
        %v2661 = vpop.permute.xlu0 %2660
        %2662 = vrot.lane.b32.xlu0 %v2596, 64
        %v2663 = vpop.permute.xlu0 %2662
        %2664 = vrot.lane.b32.xlu0 %v2599, 64
        %v2665 = vpop.permute.xlu0 %2664
        %2666 = vrot.lane.b32.xlu0 %v2601, 64
        %v2667 = vpop.permute.xlu0 %2666
        %2668 = vrot.lane.b32.xlu0 %v2604, 64
        %v2669 = vpop.permute.xlu0 %2668
        %2670 = vrot.lane.b32.xlu0 %v2606, 64
        %v2671 = vpop.permute.xlu0 %2670
        %2672 = vrot.lane.b32.xlu0 %v2609, 64
        %v2673 = vpop.permute.xlu0 %2672
        %2674 = vrot.lane.b32.xlu0 %v2611, 64
        %v2675 = vpop.permute.xlu0 %2674
        %v2708 = vsel %vm611, %v2260, %v2437
        %v2709 = vsel %vm611, %v2261, %v2439
        %v2710 = vsel %vm611, %v2263, %v2441
        %v2711 = vsel %vm611, %v2264, %v2443
        %v2712 = vsel %vm611, %v2266, %v2445
        %v2713 = vsel %vm611, %v2267, %v2447
        %v2714 = vsel %vm611, %v2269, %v2449
        %v2715 = vsel %vm611, %v2270, %v2451
        %v2716 = vsel %vm611, %v2272, %v2453
        %v2717 = vsel %vm611, %v2273, %v2455
        %v2718 = vsel %vm611, %v2275, %v2457
        %v2719 = vsel %vm611, %v2276, %v2459
        %v2720 = vsel %vm611, %v2278, %v2461
        %v2721 = vsel %vm611, %v2279, %v2463
        %v2722 = vsel %vm611, %v2281, %v2465
        %v2723 = vsel %vm611, %v2282, %v2467
        %v2724 = vsel %vm611, %v2284, %v2469
        %v2725 = vsel %vm611, %v2285, %v2471
        %v2726 = vsel %vm611, %v2287, %v2473
        %v2727 = vsel %vm611, %v2288, %v2475
        %v2728 = vsel %vm611, %v2290, %v2477
        %v2729 = vsel %vm611, %v2291, %v2479
        %v2730 = vsel %vm611, %v2293, %v2481
        %v2731 = vsel %vm611, %v2294, %v2483
        %v2732 = vsel %vm611, %v2296, %v2485
        %v2733 = vsel %vm611, %v2297, %v2487
        %v2734 = vsel %vm611, %v2299, %v2489
        %v2735 = vsel %vm611, %v2300, %v2491
        %v2736 = vsel %vm611, %v2302, %v2493
        %v2737 = vsel %vm611, %v2303, %v2495
        %v2738 = vsel %vm611, %v2305, %v2497
        %v2739 = vsel %vm611, %v2306, %v2499
        %v2740 = vsel %vm1166, %v2708, %v2613
        %v2741 = vsel %vm1166, %v2709, %v2615
        %v2742 = vsel %vm1166, %v2710, %v2617
        %v2743 = vsel %vm1166, %v2711, %v2619
        %v2744 = vsel %vm1166, %v2712, %v2621
        %v2745 = vsel %vm1166, %v2713, %v2623
        %v2746 = vsel %vm1166, %v2714, %v2625
        %v2747 = vsel %vm1166, %v2715, %v2627
        %v2748 = vsel %vm1166, %v2716, %v2629
        %v2749 = vsel %vm1166, %v2717, %v2631
        %v2750 = vsel %vm1166, %v2718, %v2633
        %v2751 = vsel %vm1166, %v2719, %v2635
        %v2752 = vsel %vm1166, %v2720, %v2637
        %v2753 = vsel %vm1166, %v2721, %v2639
        %v2754 = vsel %vm1166, %v2722, %v2641
        %v2755 = vsel %vm1166, %v2723, %v2643
        %v2756 = vsel %vm1166, %v2724, %v2645
        %v2757 = vsel %vm1166, %v2725, %v2647
        %v2758 = vsel %vm1166, %v2726, %v2649
        %v2759 = vsel %vm1166, %v2727, %v2651
        %v2760 = vsel %vm1166, %v2728, %v2653
        %v2761 = vsel %vm1166, %v2729, %v2655
        %v2762 = vsel %vm1166, %v2730, %v2657
        %v2763 = vsel %vm1166, %v2731, %v2659
        %v2764 = vsel %vm1166, %v2732, %v2661
        %v2765 = vsel %vm1166, %v2733, %v2663
        %v2766 = vsel %vm1166, %v2734, %v2665
        %v2767 = vsel %vm1166, %v2735, %v2667
        %v2768 = vsel %vm1166, %v2736, %v2669
        %v2769 = vsel %vm1166, %v2737, %v2671
        %v2770 = vsel %vm1166, %v2738, %v2673
        %v2771 = vsel %vm1166, %v2739, %v2675
        %v2772 = vpack.c.bf16 %v2741, %v2740
        %v2773 = vpack.c.bf16 %v2743, %v2742
        %v2774 = vpack.c.bf16 %v2745, %v2744
        %v2775 = vpack.c.bf16 %v2747, %v2746
        %v2776 = vpack.c.bf16 %v2749, %v2748
        %v2777 = vpack.c.bf16 %v2751, %v2750
        %v2778 = vpack.c.bf16 %v2753, %v2752
        %v2779 = vpack.c.bf16 %v2755, %v2754
        %v2780 = vpack.c.bf16 %v2757, %v2756
        %v2781 = vpack.c.bf16 %v2759, %v2758
        %v2782 = vpack.c.bf16 %v2761, %v2760
        %v2783 = vpack.c.bf16 %v2763, %v2762
        %v2784 = vpack.c.bf16 %v2765, %v2764
        %v2785 = vpack.c.bf16 %v2767, %v2766
        %v2786 = vpack.c.bf16 %v2769, %v2768
        %v2787 = vpack.c.bf16 %v2771, %v2770
        %s2788 = scalar_lea.vmem %s3, 96
        %v2789 = vld [vmem:[%s2788] sm:$0xf]
        %v2790 = vld [vmem:[%s2788 + $0x4] sm:$0xf]
        %v2791 = vld [vmem:[%s2788 + $0x8] sm:$0xf]
        %v2792 = vld [vmem:[%s2788 + $0xc] sm:$0xf]
        %v2793 = vld [vmem:[%s2788 + $0x10] sm:$0xf]
        %v2794 = vld [vmem:[%s2788 + $0x14] sm:$0xf]
        %v2795 = vld [vmem:[%s2788 + $0x18] sm:$0xf]
        %v2796 = vld [vmem:[%s2788 + $0x1c] sm:$0xf]
        %v2797 = vld [vmem:[%s2788 + $0x20] sm:$0xf]
        %v2798 = vld [vmem:[%s2788 + $0x24] sm:$0xf]
        %v2799 = vld [vmem:[%s2788 + $0x28] sm:$0xf]
        %v2800 = vld [vmem:[%s2788 + $0x2c] sm:$0xf]
        %v2813 = vunpack.c.l.b16 %v2789
        %v2814 = vunpack.c.l.b16 %v2790
        %v2815 = vunpack.c.l.b16 %v2791
        %v2816 = vunpack.c.l.b16 %v2792
        %v2817 = vunpack.c.l.b16 %v2793
        %v2818 = vunpack.c.l.b16 %v2794
        %v2819 = vunpack.c.l.b16 %v2795
        %v2820 = vunpack.c.l.b16 %v2796
        %v2821 = vunpack.c.l.b16 %v2797
        %v2822 = vunpack.c.l.b16 %v2798
        %v2823 = vunpack.c.l.b16 %v2799
        %v2824 = vunpack.c.l.b16 %v2800
        %v2825 = vpack.c.b16 %v2814, %v2813
        %v2826 = vpack.c.b16 %v2816, %v2815
        %v2827 = vpack.c.b16 %v2818, %v2817
        %v2828 = vpack.c.b16 %v2820, %v2819
        %v2829 = vpack.c.b16 %v2822, %v2821
        %v2830 = vpack.c.b16 %v2824, %v2823
        %v2838 = vsel %vm1804, %v2772, 0
        %v2841 = vsel %vm1804, %v2773, 0
        %v2844 = vsel %vm1804, %v2774, 0
        %v2847 = vsel %vm1804, %v2775, 0
        %v2850 = vsel %vm1804, %v2776, 0
        %v2853 = vsel %vm1804, %v2777, 0
        %v2856 = vsel %vm1804, %v2778, 0
        %v2859 = vsel %vm1804, %v2779, 0
        %v2862 = vsel %vm1804, %v2780, 0
        %v2865 = vsel %vm1804, %v2781, 0
        %v2868 = vsel %vm1804, %v2782, 0
        %v2871 = vsel %vm1804, %v2783, 0
        %v2874 = vsel %vm1804, %v2784, 0
        %v2877 = vsel %vm1804, %v2785, 0
        %v2880 = vsel %vm1804, %v2786, 0
        %v2883 = vsel %vm1804, %v2787, 0
        %2885 = vmatprep.subr.bf16.mxu0 0
        %2886 = vmatpush1.bf16.msra.mxu0 %v2825
        %2887 = vmatprep.subr.bf16.mxu0 0
        %2888 = vmatpush1.bf16.msra.mxu0 %v2826
        %2889 = vmatprep.subr.bf16.mxu0 0
        %2890 = vmatpush1.bf16.msra.mxu0 %v2827
        %2891 = vmatprep.subr.bf16.mxu0 0
        %2892 = vmatpush1.bf16.msra.mxu0 %v2828
        %2893 = vmatprep.subr.bf16.mxu0 0
        %2894 = vmatpush1.bf16.msra.mxu0 %v2829
        %2895 = vmatprep.subr.bf16.mxu0 0
        %2896 = vmatpush1.bf16.msra.mxu0 %v2830
        %2897 = vmatprep.subr.bf16.mxu0 0
        %2898 = vmatpush1.bf16.msra.mxu0 0
        %2899 = vmatprep.subr.bf16.mxu0 0
        %2900 = vmatpush1.bf16.msra.mxu0 0
        %2901 = vmatprep.subr.bf16.mxu0 0
        %2902 = vmatpush1.bf16.msra.mxu0 0
        %2903 = vmatprep.subr.bf16.mxu0 0
        %2904 = vmatpush1.bf16.msra.mxu0 0
        %2905 = vmatprep.subr.bf16.mxu0 0
        %2906 = vmatpush1.bf16.msra.mxu0 0
        %2907 = vmatprep.subr.bf16.mxu0 0
        %2908 = vmatpush1.bf16.msra.mxu0 0
        %2909 = vmatprep.subr.bf16.mxu0 0
        %2910 = vmatpush1.bf16.msra.mxu0 0
        %2911 = vmatprep.subr.bf16.mxu0 0
        %2912 = vmatpush1.bf16.msra.mxu0 0
        %2913 = vmatprep.subr.bf16.mxu0 0
        %2914 = vmatpush1.bf16.msra.mxu0 0
        %2915 = vmatprep.subr.bf16.mxu0 0
        %2916 = vmatpush1.bf16.msra.mxu0 0
        %2917 = vmatprep.mubr.bf16.mxu0 0
        %2918 = vmatmul.mubr.bf16.gmra.mrb[0].mxu0 %v2838
        %v2919 = vpop.f32.mrb[0].mxu0
        %v2920 = vadd.f32 0.0, %v2919
        %v2921 = vpop.f32.mrb[0].mxu0
        %v2922 = vpop.f32.mrb[0].mxu0
        %v2923 = vadd.f32 0.0, %v2922
        %v2924 = vpop.f32.mrb[0].mxu0
        %2925 = vmatprep.mubr.bf16.mxu0 0
        %2926 = vmatmul.mubr.bf16.gmra.mrb[0].mxu0 %v2841
        %v2927 = vpop.f32.mrb[0].mxu0
        %v2928 = vadd.f32 0.0, %v2927
        %v2929 = vpop.f32.mrb[0].mxu0
        %v2930 = vpop.f32.mrb[0].mxu0
        %v2931 = vadd.f32 0.0, %v2930
        %v2932 = vpop.f32.mrb[0].mxu0
        %2933 = vmatprep.mubr.bf16.mxu0 0
        %2934 = vmatmul.mubr.bf16.gmra.mrb[0].mxu0 %v2844
        %v2935 = vpop.f32.mrb[0].mxu0
        %v2936 = vadd.f32 0.0, %v2935
        %v2937 = vpop.f32.mrb[0].mxu0
        %v2938 = vpop.f32.mrb[0].mxu0
        %v2939 = vadd.f32 0.0, %v2938
        %v2940 = vpop.f32.mrb[0].mxu0
        %2941 = vmatprep.mubr.bf16.mxu0 0
        %2942 = vmatmul.mubr.bf16.gmra.mrb[0].mxu0 %v2847
        %v2943 = vpop.f32.mrb[0].mxu0
        %v2944 = vadd.f32 0.0, %v2943
        %v2945 = vpop.f32.mrb[0].mxu0
        %v2946 = vpop.f32.mrb[0].mxu0
        %v2947 = vadd.f32 0.0, %v2946
        %v2948 = vpop.f32.mrb[0].mxu0
        %2949 = vmatprep.mubr.bf16.mxu0 0
        %2950 = vmatmul.mubr.bf16.gmra.mrb[0].mxu0 %v2850
        %v2951 = vpop.f32.mrb[0].mxu0
        %v2952 = vadd.f32 0.0, %v2951
        %v2953 = vpop.f32.mrb[0].mxu0
        %v2954 = vpop.f32.mrb[0].mxu0
        %v2955 = vadd.f32 0.0, %v2954
        %v2956 = vpop.f32.mrb[0].mxu0
        %2957 = vmatprep.mubr.bf16.mxu0 0
        %2958 = vmatmul.mubr.bf16.gmra.mrb[0].mxu0 %v2853
        %v2959 = vpop.f32.mrb[0].mxu0
        %v2960 = vadd.f32 0.0, %v2959
        %v2961 = vpop.f32.mrb[0].mxu0
        %v2962 = vpop.f32.mrb[0].mxu0
        %v2963 = vadd.f32 0.0, %v2962
        %v2964 = vpop.f32.mrb[0].mxu0
        %2965 = vmatprep.mubr.bf16.mxu0 0
        %2966 = vmatmul.mubr.bf16.gmra.mrb[0].mxu0 %v2856
        %v2967 = vpop.f32.mrb[0].mxu0
        %v2968 = vadd.f32 0.0, %v2967
        %v2969 = vpop.f32.mrb[0].mxu0
        %v2970 = vpop.f32.mrb[0].mxu0
        %v2971 = vadd.f32 0.0, %v2970
        %v2972 = vpop.f32.mrb[0].mxu0
        %2973 = vmatprep.mubr.bf16.mxu0 0
        %2974 = vmatmul.mubr.bf16.gmra.mrb[0].mxu0 %v2859
        %v2975 = vpop.f32.mrb[0].mxu0
        %v2976 = vadd.f32 0.0, %v2975
        %v2977 = vpop.f32.mrb[0].mxu0
        %v2978 = vpop.f32.mrb[0].mxu0
        %v2979 = vadd.f32 0.0, %v2978
        %v2980 = vpop.f32.mrb[0].mxu0
        %2981 = vmatprep.mubr.bf16.mxu0 0
        %2982 = vmatmul.mubr.bf16.gmra.mrb[0].mxu0 %v2862
        %v2983 = vpop.f32.mrb[0].mxu0
        %v2984 = vadd.f32 0.0, %v2983
        %v2985 = vpop.f32.mrb[0].mxu0
        %v2986 = vpop.f32.mrb[0].mxu0
        %v2987 = vadd.f32 0.0, %v2986
        %v2988 = vpop.f32.mrb[0].mxu0
        %2989 = vmatprep.mubr.bf16.mxu0 0
        %2990 = vmatmul.mubr.bf16.gmra.mrb[0].mxu0 %v2865
        %v2991 = vpop.f32.mrb[0].mxu0
        %v2992 = vadd.f32 0.0, %v2991
        %v2993 = vpop.f32.mrb[0].mxu0
        %v2994 = vpop.f32.mrb[0].mxu0
        %v2995 = vadd.f32 0.0, %v2994
        %v2996 = vpop.f32.mrb[0].mxu0
        %2997 = vmatprep.mubr.bf16.mxu0 0
        %2998 = vmatmul.mubr.bf16.gmra.mrb[0].mxu0 %v2868
        %v2999 = vpop.f32.mrb[0].mxu0
        %v3000 = vadd.f32 0.0, %v2999
        %v3001 = vpop.f32.mrb[0].mxu0
        %v3002 = vpop.f32.mrb[0].mxu0
        %v3003 = vadd.f32 0.0, %v3002
        %v3004 = vpop.f32.mrb[0].mxu0
        %3005 = vmatprep.mubr.bf16.mxu0 0
        %3006 = vmatmul.mubr.bf16.gmra.mrb[0].mxu0 %v2871
        %v3007 = vpop.f32.mrb[0].mxu0
        %v3008 = vadd.f32 0.0, %v3007
        %v3009 = vpop.f32.mrb[0].mxu0
        %v3010 = vpop.f32.mrb[0].mxu0
        %v3011 = vadd.f32 0.0, %v3010
        %v3012 = vpop.f32.mrb[0].mxu0
        %3013 = vmatprep.mubr.bf16.mxu0 0
        %3014 = vmatmul.mubr.bf16.gmra.mrb[0].mxu0 %v2874
        %v3015 = vpop.f32.mrb[0].mxu0
        %v3016 = vadd.f32 0.0, %v3015
        %v3017 = vpop.f32.mrb[0].mxu0
        %v3018 = vpop.f32.mrb[0].mxu0
        %v3019 = vadd.f32 0.0, %v3018
        %v3020 = vpop.f32.mrb[0].mxu0
        %3021 = vmatprep.mubr.bf16.mxu0 0
        %3022 = vmatmul.mubr.bf16.gmra.mrb[0].mxu0 %v2877
        %v3023 = vpop.f32.mrb[0].mxu0
        %v3024 = vadd.f32 0.0, %v3023
        %v3025 = vpop.f32.mrb[0].mxu0
        %v3026 = vpop.f32.mrb[0].mxu0
        %v3027 = vadd.f32 0.0, %v3026
        %v3028 = vpop.f32.mrb[0].mxu0
        %3029 = vmatprep.mubr.bf16.mxu0 0
        %3030 = vmatmul.mubr.bf16.gmra.mrb[0].mxu0 %v2880
        %v3031 = vpop.f32.mrb[0].mxu0
        %v3032 = vadd.f32 0.0, %v3031
        %v3033 = vpop.f32.mrb[0].mxu0
        %v3034 = vpop.f32.mrb[0].mxu0
        %v3035 = vadd.f32 0.0, %v3034
        %v3036 = vpop.f32.mrb[0].mxu0
        %3037 = vmatprep.mubr.bf16.mxu0 0
        %3038 = vmatmul.mubr.bf16.gmra.mrb[0].mxu0 %v2883
        %v3039 = vpop.f32.mrb[0].mxu0
        %v3040 = vadd.f32 0.0, %v3039
        %v3041 = vpop.f32.mrb[0].mxu0
        %v3042 = vpop.f32.mrb[0].mxu0
        %v3043 = vadd.f32 0.0, %v3042
        %v3044 = vpop.f32.mrb[0].mxu0
        %3045 = vdwg.mxu0
        %v3046 = vadd.f32 %v2133, %v2920
        %v3047 = vadd.f32 %v2136, %v2923
        %v3048 = vadd.f32 %v2141, %v2928
        %v3049 = vadd.f32 %v2144, %v2931
        %v3050 = vadd.f32 %v2149, %v2936
        %v3051 = vadd.f32 %v2152, %v2939
        %v3052 = vadd.f32 %v2157, %v2944
        %v3053 = vadd.f32 %v2160, %v2947
        %v3054 = vadd.f32 %v2165, %v2952
        %v3055 = vadd.f32 %v2168, %v2955
        %v3056 = vadd.f32 %v2173, %v2960
        %v3057 = vadd.f32 %v2176, %v2963
        %v3058 = vadd.f32 %v2181, %v2968
        %v3059 = vadd.f32 %v2184, %v2971
        %v3060 = vadd.f32 %v2189, %v2976
        %v3061 = vadd.f32 %v2192, %v2979
        %v3062 = vadd.f32 %v2197, %v2984
        %v3063 = vadd.f32 %v2200, %v2987
        %v3064 = vadd.f32 %v2205, %v2992
        %v3065 = vadd.f32 %v2208, %v2995
        %v3066 = vadd.f32 %v2213, %v3000
        %v3067 = vadd.f32 %v2216, %v3003
        %v3068 = vadd.f32 %v2221, %v3008
        %v3069 = vadd.f32 %v2224, %v3011
        %v3070 = vadd.f32 %v2229, %v3016
        %v3071 = vadd.f32 %v2232, %v3019
        %v3072 = vadd.f32 %v2237, %v3024
        %v3073 = vadd.f32 %v2240, %v3027
        %v3074 = vadd.f32 %v2245, %v3032
        %v3075 = vadd.f32 %v2248, %v3035
        %v3076 = vadd.f32 %v2253, %v3040
        %v3077 = vadd.f32 %v2256, %v3043
        %v3078 = vld [vmem:[%s4] sm:$0x1]
        %v3080 = vlaneseq
        %v3081 = vshrl.u32 %v3080, 7
        %v3082 = vsub.s32 0, %v3081
        %v3083 = vrot.slane %v3078, %v3082
        %v3085 = vadd.f32 %v3046, %v3083
        %v3086 = vadd.f32 %v3047, %v3083
        %v3087 = vadd.f32 %v3048, %v3083
        %v3088 = vadd.f32 %v3049, %v3083
        %v3089 = vadd.f32 %v3050, %v3083
        %v3090 = vadd.f32 %v3051, %v3083
        %v3091 = vadd.f32 %v3052, %v3083
        %v3092 = vadd.f32 %v3053, %v3083
        %v3093 = vadd.f32 %v3054, %v3083
        %v3094 = vadd.f32 %v3055, %v3083
        %v3095 = vadd.f32 %v3056, %v3083
        %v3096 = vadd.f32 %v3057, %v3083
        %v3097 = vadd.f32 %v3058, %v3083
        %v3098 = vadd.f32 %v3059, %v3083
        %v3099 = vadd.f32 %v3060, %v3083
        %v3100 = vadd.f32 %v3061, %v3083
        %v3101 = vadd.f32 %v3062, %v3083
        %v3102 = vadd.f32 %v3063, %v3083
        %v3103 = vadd.f32 %v3064, %v3083
        %v3104 = vadd.f32 %v3065, %v3083
        %v3105 = vadd.f32 %v3066, %v3083
        %v3106 = vadd.f32 %v3067, %v3083
        %v3107 = vadd.f32 %v3068, %v3083
        %v3108 = vadd.f32 %v3069, %v3083
        %v3109 = vadd.f32 %v3070, %v3083
        %v3110 = vadd.f32 %v3071, %v3083
        %v3111 = vadd.f32 %v3072, %v3083
        %v3112 = vadd.f32 %v3073, %v3083
        %v3113 = vadd.f32 %v3074, %v3083
        %v3114 = vadd.f32 %v3075, %v3083
        %v3115 = vadd.f32 %v3076, %v3083
        %v3116 = vadd.f32 %v3077, %v3083
        %v3117 = vmax.f32 %v3085, 0.0
        %v3118 = vmax.f32 %v3086, 0.0
        %v3119 = vmax.f32 %v3087, 0.0
        %v3120 = vmax.f32 %v3088, 0.0
        %v3121 = vmax.f32 %v3089, 0.0
        %v3122 = vmax.f32 %v3090, 0.0
        %v3123 = vmax.f32 %v3091, 0.0
        %v3124 = vmax.f32 %v3092, 0.0
        %v3125 = vmax.f32 %v3093, 0.0
        %v3126 = vmax.f32 %v3094, 0.0
        %v3127 = vmax.f32 %v3095, 0.0
        %v3128 = vmax.f32 %v3096, 0.0
        %v3129 = vmax.f32 %v3097, 0.0
        %v3130 = vmax.f32 %v3098, 0.0
        %v3131 = vmax.f32 %v3099, 0.0
        %v3132 = vmax.f32 %v3100, 0.0
        %v3133 = vmax.f32 %v3101, 0.0
        %v3134 = vmax.f32 %v3102, 0.0
        %v3135 = vmax.f32 %v3103, 0.0
        %v3136 = vmax.f32 %v3104, 0.0
        %v3137 = vmax.f32 %v3105, 0.0
        %v3138 = vmax.f32 %v3106, 0.0
        %v3139 = vmax.f32 %v3107, 0.0
        %v3140 = vmax.f32 %v3108, 0.0
        %v3141 = vmax.f32 %v3109, 0.0
        %v3142 = vmax.f32 %v3110, 0.0
        %v3143 = vmax.f32 %v3111, 0.0
        %v3144 = vmax.f32 %v3112, 0.0
        %v3145 = vmax.f32 %v3113, 0.0
        %v3146 = vmax.f32 %v3114, 0.0
        %v3147 = vmax.f32 %v3115, 0.0
        %v3148 = vmax.f32 %v3116, 0.0
        %v3149 = vpack.c.bf16 %v3118, %v3117
        %v3150 = vpack.c.bf16 %v3120, %v3119
        %v3151 = vpack.c.bf16 %v3122, %v3121
        %v3152 = vpack.c.bf16 %v3124, %v3123
        %v3153 = vpack.c.bf16 %v3126, %v3125
        %v3154 = vpack.c.bf16 %v3128, %v3127
        %v3155 = vpack.c.bf16 %v3130, %v3129
        %v3156 = vpack.c.bf16 %v3132, %v3131
        %v3157 = vpack.c.bf16 %v3134, %v3133
        %v3158 = vpack.c.bf16 %v3136, %v3135
        %v3159 = vpack.c.bf16 %v3138, %v3137
        %v3160 = vpack.c.bf16 %v3140, %v3139
        %v3161 = vpack.c.bf16 %v3142, %v3141
        %v3162 = vpack.c.bf16 %v3144, %v3143
        %v3163 = vpack.c.bf16 %v3146, %v3145
        %v3164 = vpack.c.bf16 %v3148, %v3147
        %v3165 = vld [vmem:[%s5] sm:$0xf]
        %v3166 = vld [vmem:[%s5 + $0x4] sm:$0xf]
        %v3167 = vld [vmem:[%s5 + $0x8] sm:$0xf]
        %v3168 = vld [vmem:[%s5 + $0xc] sm:$0xf]
        %v3169 = vld [vmem:[%s6] sm:$0x1]
        %v3171 = vlaneseq
        %v3172 = vshrl.u32 %v3171, 7
        %v3173 = vsub.s32 0, %v3172
        %v3174 = vrot.slane %v3169, %v3173
        %v3180 = vunpack.c.l.b16 %v3165
        %v3181 = vunpack.c.l.b16 %v3166
        %v3182 = vunpack.c.l.b16 %v3167
        %v3183 = vunpack.c.l.b16 %v3168
        %v3184 = vpack.c.b16 %v3181, %v3180
        %v3185 = vpack.c.b16 %v3183, %v3182
        %v3189 = vsel %vm611, %v3149, 0
        %v3192 = vsel %vm611, %v3150, 0
        %v3195 = vsel %vm611, %v3151, 0
        %v3198 = vsel %vm611, %v3152, 0
        %v3201 = vsel %vm611, %v3153, 0
        %v3204 = vsel %vm611, %v3154, 0
        %v3207 = vsel %vm611, %v3155, 0
        %v3210 = vsel %vm611, %v3156, 0
        %v3213 = vsel %vm611, %v3157, 0
        %v3216 = vsel %vm611, %v3158, 0
        %v3219 = vsel %vm611, %v3159, 0
        %v3222 = vsel %vm611, %v3160, 0
        %v3225 = vsel %vm611, %v3161, 0
        %v3228 = vsel %vm611, %v3162, 0
        %v3231 = vsel %vm611, %v3163, 0
        %v3234 = vsel %vm611, %v3164, 0
        %3236 = vmatprep.subr.bf16.mxu0 0
        %3237 = vmatpush1.bf16.msra.mxu0 %v3184
        %3238 = vmatprep.subr.bf16.mxu0 0
        %3239 = vmatpush1.bf16.msra.mxu0 %v3185
        %3240 = vmatprep.subr.bf16.mxu0 0
        %3241 = vmatpush1.bf16.msra.mxu0 0
        %3242 = vmatprep.subr.bf16.mxu0 0
        %3243 = vmatpush1.bf16.msra.mxu0 0
        %3244 = vmatprep.subr.bf16.mxu0 0
        %3245 = vmatpush1.bf16.msra.mxu0 0
        %3246 = vmatprep.subr.bf16.mxu0 0
        %3247 = vmatpush1.bf16.msra.mxu0 0
        %3248 = vmatprep.subr.bf16.mxu0 0
        %3249 = vmatpush1.bf16.msra.mxu0 0
        %3250 = vmatprep.subr.bf16.mxu0 0
        %3251 = vmatpush1.bf16.msra.mxu0 0
        %3252 = vmatprep.subr.bf16.mxu0 0
        %3253 = vmatpush1.bf16.msra.mxu0 0
        %3254 = vmatprep.subr.bf16.mxu0 0
        %3255 = vmatpush1.bf16.msra.mxu0 0
        %3256 = vmatprep.subr.bf16.mxu0 0
        %3257 = vmatpush1.bf16.msra.mxu0 0
        %3258 = vmatprep.subr.bf16.mxu0 0
        %3259 = vmatpush1.bf16.msra.mxu0 0
        %3260 = vmatprep.subr.bf16.mxu0 0
        %3261 = vmatpush1.bf16.msra.mxu0 0
        %3262 = vmatprep.subr.bf16.mxu0 0
        %3263 = vmatpush1.bf16.msra.mxu0 0
        %3264 = vmatprep.subr.bf16.mxu0 0
        %3265 = vmatpush1.bf16.msra.mxu0 0
        %3266 = vmatprep.subr.bf16.mxu0 0
        %3267 = vmatpush1.bf16.msra.mxu0 0
        %3268 = vmatprep.mubr.bf16.mxu0 0
        %3269 = vmatmul.mubr.bf16.gmra.mrb[0].mxu0 %v3189
        %v3270 = vpop.f32.mrb[0].mxu0
        %v3271 = vadd.f32 %v3174, %v3270
        %v3272 = vpop.f32.mrb[0].mxu0
        %v3273 = vpop.f32.mrb[0].mxu0
        %v3274 = vadd.f32 %v3174, %v3273
        %v3275 = vpop.f32.mrb[0].mxu0
        %3276 = vmatprep.mubr.bf16.mxu0 0
        %3277 = vmatmul.mubr.bf16.gmra.mrb[0].mxu0 %v3192
        %v3278 = vpop.f32.mrb[0].mxu0
        %v3279 = vadd.f32 %v3174, %v3278
        %v3280 = vpop.f32.mrb[0].mxu0
        %v3281 = vpop.f32.mrb[0].mxu0
        %v3282 = vadd.f32 %v3174, %v3281
        %v3283 = vpop.f32.mrb[0].mxu0
        %3284 = vmatprep.mubr.bf16.mxu0 0
        %3285 = vmatmul.mubr.bf16.gmra.mrb[0].mxu0 %v3195
        %v3286 = vpop.f32.mrb[0].mxu0
        %v3287 = vadd.f32 %v3174, %v3286
        %v3288 = vpop.f32.mrb[0].mxu0
        %v3289 = vpop.f32.mrb[0].mxu0
        %v3290 = vadd.f32 %v3174, %v3289
        %v3291 = vpop.f32.mrb[0].mxu0
        %3292 = vmatprep.mubr.bf16.mxu0 0
        %3293 = vmatmul.mubr.bf16.gmra.mrb[0].mxu0 %v3198
        %v3294 = vpop.f32.mrb[0].mxu0
        %v3295 = vadd.f32 %v3174, %v3294
        %v3296 = vpop.f32.mrb[0].mxu0
        %v3297 = vpop.f32.mrb[0].mxu0
        %v3298 = vadd.f32 %v3174, %v3297
        %v3299 = vpop.f32.mrb[0].mxu0
        %3300 = vmatprep.mubr.bf16.mxu0 0
        %3301 = vmatmul.mubr.bf16.gmra.mrb[0].mxu0 %v3201
        %v3302 = vpop.f32.mrb[0].mxu0
        %v3303 = vadd.f32 %v3174, %v3302
        %v3304 = vpop.f32.mrb[0].mxu0
        %v3305 = vpop.f32.mrb[0].mxu0
        %v3306 = vadd.f32 %v3174, %v3305
        %v3307 = vpop.f32.mrb[0].mxu0
        %3308 = vmatprep.mubr.bf16.mxu0 0
        %3309 = vmatmul.mubr.bf16.gmra.mrb[0].mxu0 %v3204
        %v3310 = vpop.f32.mrb[0].mxu0
        %v3311 = vadd.f32 %v3174, %v3310
        %v3312 = vpop.f32.mrb[0].mxu0
        %v3313 = vpop.f32.mrb[0].mxu0
        %v3314 = vadd.f32 %v3174, %v3313
        %v3315 = vpop.f32.mrb[0].mxu0
        %3316 = vmatprep.mubr.bf16.mxu0 0
        %3317 = vmatmul.mubr.bf16.gmra.mrb[0].mxu0 %v3207
        %v3318 = vpop.f32.mrb[0].mxu0
        %v3319 = vadd.f32 %v3174, %v3318
        %v3320 = vpop.f32.mrb[0].mxu0
        %v3321 = vpop.f32.mrb[0].mxu0
        %v3322 = vadd.f32 %v3174, %v3321
        %v3323 = vpop.f32.mrb[0].mxu0
        %3324 = vmatprep.mubr.bf16.mxu0 0
        %3325 = vmatmul.mubr.bf16.gmra.mrb[0].mxu0 %v3210
        %v3326 = vpop.f32.mrb[0].mxu0
        %v3327 = vadd.f32 %v3174, %v3326
        %v3328 = vpop.f32.mrb[0].mxu0
        %v3329 = vpop.f32.mrb[0].mxu0
        %v3330 = vadd.f32 %v3174, %v3329
        %v3331 = vpop.f32.mrb[0].mxu0
        %3332 = vmatprep.mubr.bf16.mxu0 0
        %3333 = vmatmul.mubr.bf16.gmra.mrb[0].mxu0 %v3213
        %v3334 = vpop.f32.mrb[0].mxu0
        %v3335 = vadd.f32 %v3174, %v3334
        %v3336 = vpop.f32.mrb[0].mxu0
        %v3337 = vpop.f32.mrb[0].mxu0
        %v3338 = vadd.f32 %v3174, %v3337
        %v3339 = vpop.f32.mrb[0].mxu0
        %3340 = vmatprep.mubr.bf16.mxu0 0
        %3341 = vmatmul.mubr.bf16.gmra.mrb[0].mxu0 %v3216
        %v3342 = vpop.f32.mrb[0].mxu0
        %v3343 = vadd.f32 %v3174, %v3342
        %v3344 = vpop.f32.mrb[0].mxu0
        %v3345 = vpop.f32.mrb[0].mxu0
        %v3346 = vadd.f32 %v3174, %v3345
        %v3347 = vpop.f32.mrb[0].mxu0
        %3348 = vmatprep.mubr.bf16.mxu0 0
        %3349 = vmatmul.mubr.bf16.gmra.mrb[0].mxu0 %v3219
        %v3350 = vpop.f32.mrb[0].mxu0
        %v3351 = vadd.f32 %v3174, %v3350
        %v3352 = vpop.f32.mrb[0].mxu0
        %v3353 = vpop.f32.mrb[0].mxu0
        %v3354 = vadd.f32 %v3174, %v3353
        %v3355 = vpop.f32.mrb[0].mxu0
        %3356 = vmatprep.mubr.bf16.mxu0 0
        %3357 = vmatmul.mubr.bf16.gmra.mrb[0].mxu0 %v3222
        %v3358 = vpop.f32.mrb[0].mxu0
        %v3359 = vadd.f32 %v3174, %v3358
        %v3360 = vpop.f32.mrb[0].mxu0
        %v3361 = vpop.f32.mrb[0].mxu0
        %v3362 = vadd.f32 %v3174, %v3361
        %v3363 = vpop.f32.mrb[0].mxu0
        %3364 = vmatprep.mubr.bf16.mxu0 0
        %3365 = vmatmul.mubr.bf16.gmra.mrb[0].mxu0 %v3225
        %v3366 = vpop.f32.mrb[0].mxu0
        %v3367 = vadd.f32 %v3174, %v3366
        %v3368 = vpop.f32.mrb[0].mxu0
        %v3369 = vpop.f32.mrb[0].mxu0
        %v3370 = vadd.f32 %v3174, %v3369
        %v3371 = vpop.f32.mrb[0].mxu0
        %3372 = vmatprep.mubr.bf16.mxu0 0
        %3373 = vmatmul.mubr.bf16.gmra.mrb[0].mxu0 %v3228
        %v3374 = vpop.f32.mrb[0].mxu0
        %v3375 = vadd.f32 %v3174, %v3374
        %v3376 = vpop.f32.mrb[0].mxu0
        %v3377 = vpop.f32.mrb[0].mxu0
        %v3378 = vadd.f32 %v3174, %v3377
        %v3379 = vpop.f32.mrb[0].mxu0
        %3380 = vmatprep.mubr.bf16.mxu0 0
        %3381 = vmatmul.mubr.bf16.gmra.mrb[0].mxu0 %v3231
        %v3382 = vpop.f32.mrb[0].mxu0
        %v3383 = vadd.f32 %v3174, %v3382
        %v3384 = vpop.f32.mrb[0].mxu0
        %v3385 = vpop.f32.mrb[0].mxu0
        %v3386 = vadd.f32 %v3174, %v3385
        %v3387 = vpop.f32.mrb[0].mxu0
        %3388 = vmatprep.mubr.bf16.mxu0 0
        %3389 = vmatmul.mubr.bf16.gmra.mrb[0].mxu0 %v3234
        %v3390 = vpop.f32.mrb[0].mxu0
        %v3391 = vadd.f32 %v3174, %v3390
        %v3392 = vpop.f32.mrb[0].mxu0
        %v3393 = vpop.f32.mrb[0].mxu0
        %v3394 = vadd.f32 %v3174, %v3393
        %v3395 = vpop.f32.mrb[0].mxu0
        %3396 = vdwg.mxu0
        %v3397 = vadd.f32 %v3271, %v298
        %v3398 = vadd.f32 %v3274, %v299
        %v3399 = vadd.f32 %v3279, %v300
        %v3400 = vadd.f32 %v3282, %v301
        %v3401 = vadd.f32 %v3287, %v302
        %v3402 = vadd.f32 %v3290, %v303
        %v3403 = vadd.f32 %v3295, %v304
        %v3404 = vadd.f32 %v3298, %v305
        %v3405 = vadd.f32 %v3303, %v306
        %v3406 = vadd.f32 %v3306, %v307
        %v3407 = vadd.f32 %v3311, %v308
        %v3408 = vadd.f32 %v3314, %v309
        %v3409 = vadd.f32 %v3319, %v310
        %v3410 = vadd.f32 %v3322, %v311
        %v3411 = vadd.f32 %v3327, %v312
        %v3412 = vadd.f32 %v3330, %v313
        %v3413 = vadd.f32 %v3335, %v314
        %v3414 = vadd.f32 %v3338, %v315
        %v3415 = vadd.f32 %v3343, %v316
        %v3416 = vadd.f32 %v3346, %v317
        %v3417 = vadd.f32 %v3351, %v318
        %v3418 = vadd.f32 %v3354, %v319
        %v3419 = vadd.f32 %v3359, %v320
        %v3420 = vadd.f32 %v3362, %v321
        %v3421 = vadd.f32 %v3367, %v322
        %v3422 = vadd.f32 %v3370, %v323
        %v3423 = vadd.f32 %v3375, %v324
        %v3424 = vadd.f32 %v3378, %v325
        %v3425 = vadd.f32 %v3383, %v326
        %v3426 = vadd.f32 %v3386, %v327
        %v3427 = vadd.f32 %v3391, %v328
        %v3428 = vadd.f32 %v3394, %v329
        %v3429 = vmax.f32 %v3397, 0.0
        %v3430 = vmax.f32 %v3398, 0.0
        %v3431 = vmax.f32 %v3399, 0.0
        %v3432 = vmax.f32 %v3400, 0.0
        %v3433 = vmax.f32 %v3401, 0.0
        %v3434 = vmax.f32 %v3402, 0.0
        %v3435 = vmax.f32 %v3403, 0.0
        %v3436 = vmax.f32 %v3404, 0.0
        %v3437 = vmax.f32 %v3405, 0.0
        %v3438 = vmax.f32 %v3406, 0.0
        %v3439 = vmax.f32 %v3407, 0.0
        %v3440 = vmax.f32 %v3408, 0.0
        %v3441 = vmax.f32 %v3409, 0.0
        %v3442 = vmax.f32 %v3410, 0.0
        %v3443 = vmax.f32 %v3411, 0.0
        %v3444 = vmax.f32 %v3412, 0.0
        %v3445 = vmax.f32 %v3413, 0.0
        %v3446 = vmax.f32 %v3414, 0.0
        %v3447 = vmax.f32 %v3415, 0.0
        %v3448 = vmax.f32 %v3416, 0.0
        %v3449 = vmax.f32 %v3417, 0.0
        %v3450 = vmax.f32 %v3418, 0.0
        %v3451 = vmax.f32 %v3419, 0.0
        %v3452 = vmax.f32 %v3420, 0.0
        %v3453 = vmax.f32 %v3421, 0.0
        %v3454 = vmax.f32 %v3422, 0.0
        %v3455 = vmax.f32 %v3423, 0.0
        %v3456 = vmax.f32 %v3424, 0.0
        %v3457 = vmax.f32 %v3425, 0.0
        %v3458 = vmax.f32 %v3426, 0.0
        %v3459 = vmax.f32 %v3427, 0.0
        %v3460 = vmax.f32 %v3428, 0.0
        %3461 = vst [vmem:[%s296] sm:$0xff] %v3429
        %3462 = vst [vmem:[%s296 + $0x8] sm:$0xff] %v3430
        %3463 = vst [vmem:[%s296 + $0x10] sm:$0xff] %v3431
        %3464 = vst [vmem:[%s296 + $0x18] sm:$0xff] %v3432
        %3465 = vst [vmem:[%s296 + $0x20] sm:$0xff] %v3433
        %3466 = vst [vmem:[%s296 + $0x28] sm:$0xff] %v3434
        %3467 = vst [vmem:[%s296 + $0x30] sm:$0xff] %v3435
        %3468 = vst [vmem:[%s296 + $0x38] sm:$0xff] %v3436
        %3469 = vst [vmem:[%s296 + $0x40] sm:$0xff] %v3437
        %3470 = vst [vmem:[%s296 + $0x48] sm:$0xff] %v3438
        %3471 = vst [vmem:[%s296 + $0x50] sm:$0xff] %v3439
        %3472 = vst [vmem:[%s296 + $0x58] sm:$0xff] %v3440
        %3473 = vst [vmem:[%s296 + $0x60] sm:$0xff] %v3441
        %3474 = vst [vmem:[%s296 + $0x68] sm:$0xff] %v3442
        %3475 = vst [vmem:[%s296 + $0x70] sm:$0xff] %v3443
        %3476 = vst [vmem:[%s296 + $0x78] sm:$0xff] %v3444
        %3477 = vst [vmem:[%s296 + $0x80] sm:$0xff] %v3445
        %3478 = vst [vmem:[%s296 + $0x88] sm:$0xff] %v3446
        %3479 = vst [vmem:[%s296 + $0x90] sm:$0xff] %v3447
        %3480 = vst [vmem:[%s296 + $0x98] sm:$0xff] %v3448
        %3481 = vst [vmem:[%s296 + $0xa0] sm:$0xff] %v3449
        %3482 = vst [vmem:[%s296 + $0xa8] sm:$0xff] %v3450
        %3483 = vst [vmem:[%s296 + $0xb0] sm:$0xff] %v3451
        %3484 = vst [vmem:[%s296 + $0xb8] sm:$0xff] %v3452
        %3485 = vst [vmem:[%s296 + $0xc0] sm:$0xff] %v3453
        %3486 = vst [vmem:[%s296 + $0xc8] sm:$0xff] %v3454
        %3487 = vst [vmem:[%s296 + $0xd0] sm:$0xff] %v3455
        %3488 = vst [vmem:[%s296 + $0xd8] sm:$0xff] %v3456
        %3489 = vst [vmem:[%s296 + $0xe0] sm:$0xff] %v3457
        %3490 = vst [vmem:[%s296 + $0xe8] sm:$0xff] %v3458
        %3491 = vst [vmem:[%s296 + $0xf0] sm:$0xff] %v3459
        %3492 = vst [vmem:[%s296 + $0xf8] sm:$0xff] %v3460
        %s3493 = sand.u32 %s184, 1
        %s3494 = scalar_lea.sflag [#allocation5], %s3493
        %s3495 = sand.u32 %s184, 1
        %s3496 = smul.addr %s3495, 256
        %s3497 = scalar_lea.vmem [#allocation6], %s3496
        // Predicated region
        $region53: #{tpu_custom_call.1} parent=47 // pred_check
          %p3498 = pneg %p194
        $region54: #{tpu_custom_call.1} parent=47 // pred_check_branch
          %3500 = sbr.rel (%p3498) target = $region56
        $region55: #{tpu_custom_call.1} parent=47 // pred_region
          %s3502 = ssub.s32 4096, 4096
          %3503 = vsyncadd %s3494, %s3502
          %s3504 = smul.addr %s24, 32
          %s3505 = smul.addr %s3504, 128
          %s3506 = scalar_lea.hbm %s7, %s3505
          %s3507 = sshll.u32 %s3497, 4
          %s3508 = int_to_ptr.vmem [resolvable:$true] %s3507
          %3513 = dma.vmem_to_hbm [thread:$0]  %s3508, 4096, %s3506, %s3494, 128, 128, 8
        $region56: #{tpu_custom_call.1} parent=47 // pred_fallthru
          _
      $region48: #{tpu_custom_call.1} parent=5 // pred_fallthru
        _
      %p3514 = scmp.le.s32.totalorder 2, %s19
      // Predicated region
      $region57: #{tpu_custom_call.1} parent=5 // pred_check
        %p3515 = pneg %p3514
      $region58: #{tpu_custom_call.1} parent=5 // pred_check_branch
        %3517 = sbr.rel (%p3515) target = $region60
      $region59: #{tpu_custom_call.1} parent=5 // pred_region
        %s3518 = ssub.s32 %s19, 2
        // Predicated region
        $region61: #{tpu_custom_call.1} parent=59 // pred_check
          %p3519 = pneg %p200
        $region62: #{tpu_custom_call.1} parent=59 // pred_check_branch
          %3521 = sbr.rel (%p3519) target = $region64
        $region63: #{tpu_custom_call.1} parent=59 // pred_region
          %s3522 = sand.u32 %s185, 1
          %s3523 = scalar_lea.sflag [#allocation5], %s3522
          %s3524 = sand.u32 %s185, 1
          %s3525 = smul.addr %s3524, 256
          %s3526 = scalar_lea.vmem [#allocation6], %s3525
          %3527 = dma.done %s3523, 4096
        $region64: #{tpu_custom_call.1} parent=59 // pred_fallthru
          _
      $region60: #{tpu_custom_call.1} parent=5 // pred_fallthru
        _
    $region6: #{tpu_custom_call.1} parent=1 // loop_footer
      %s23 = sadd.s32 1, %s19
    $region7: #{tpu_custom_call.1} parent=1 // loop_footer_branch
      %18 = sbr.rel target = $region3
    $region8: #{tpu_custom_call.1} parent=1 // loop_exit
      _
    %3528 = vsyncpa [#allocation4], 1
    %s3529 = scalar_lea.sflag [#allocation4], 1
    %3530 = vsyncpa %s3529, 1
    %3531 = vsyncpa [#allocation5], 1
    %s3532 = scalar_lea.sflag [#allocation5], 1
    %3533 = vsyncpa %s3532, 1

</llo_original>
